<compile_context>
chip_gen: v5e
topology: v5e:2x2
jax: 0.10.0
libtpu: 0.0.40
codegen_flags: <defaults>
</compile_context>

<pallas_src>
import functools

import jax
import jax.numpy as jnp
from jax import lax
from jax.experimental import pallas as pl
from jax.experimental.pallas import tpu as pltpu


# --------------------------------------------------------------------------- #
# Kernel
# --------------------------------------------------------------------------- #
def _nonlocal_kernel(xq_ref,            # (1, TQ, Cp)   f32  query tile of x
                     xk_ref,            # (1, TK, Cp)   f32  key tile of x
                     wth_ref, bth_ref,  # (Cp, Cip) bf16, (1, Cip) f32
                     wkv_ref, bkv_ref,  # (Cp, 2*Cip) bf16, (1, 2*Cip) f32  [phi|g]
                     wo_ref, bo_ref,    # (Cip, Cp) bf16 (BN folded), (1, Cp) f32
                     o_ref,             # (1, TQ, Cp)   f32
                     theta_sc,          # (TQ, Cip) bf16 scratch
                     m_sc, l_sc,        # (TQ, 1) f32 scratch (running max / denom)
                     acc_sc):           # (TQ, Cip) f32 scratch (output accumulator)
    ki = pl.program_id(2)
    nk = pl.num_programs(2)

    # ---- init per (batch, query-tile): project theta once, reset softmax state.
    @pl.when(ki == 0)
    def _():
        xq = xq_ref[0].astype(jnp.bfloat16)                         # (TQ, Cp)
        theta = jnp.dot(xq, wth_ref[...],
                        preferred_element_type=jnp.float32) + bth_ref[...]
        theta_sc[...] = theta.astype(jnp.bfloat16)
        m_sc[...] = jnp.full_like(m_sc, -jnp.inf)
        l_sc[...] = jnp.zeros_like(l_sc)
        acc_sc[...] = jnp.zeros_like(acc_sc)

    # ---- fused phi/g projection of the current key tile.
    xk = xk_ref[0].astype(jnp.bfloat16)                             # (TK, Cp)
    kv = jnp.dot(xk, wkv_ref[...],
                 preferred_element_type=jnp.float32) + bkv_ref[...]  # (TK, 2*Cip)
    cip = wkv_ref.shape[1] // 2
    phi = kv[:, :cip].astype(jnp.bfloat16)                          # (TK, Cip)
    g = kv[:, cip:].astype(jnp.bfloat16)                            # (TK, Cip)

    # ---- scores: theta @ phi^T, contraction on last dims (no explicit .T).
    s = lax.dot_general(theta_sc[...], phi,
                        (((1,), (1,)), ((), ())),
                        preferred_element_type=jnp.float32)          # (TQ, TK)

    # ---- online softmax update (unnormalized accumulation).
    m_prev = m_sc[...]
    m_new = jnp.maximum(m_prev, jnp.max(s, axis=-1, keepdims=True))
    alpha = jnp.exp(m_prev - m_new)
    p = jnp.exp(s - m_new)
    l_sc[...] = alpha * l_sc[...] + jnp.sum(p, axis=-1, keepdims=True)
    acc_sc[...] = alpha * acc_sc[...] + jnp.dot(
        p.astype(jnp.bfloat16), g, preferred_element_type=jnp.float32)
    m_sc[...] = m_new

    # ---- finalize: normalize, W projection (BN folded), residual.
    @pl.when(ki == nk - 1)
    def _():
        y = acc_sc[...] * pl.reciprocal(l_sc[...], approx=True)      # (TQ, Cip)
        w_y = jnp.dot(y.astype(jnp.bfloat16), wo_ref[...],
                      preferred_element_type=jnp.float32) + bo_ref[...]
        o_ref[0] = (w_y + xq_ref[0]).astype(o_ref.dtype)


# --------------------------------------------------------------------------- #
# Host-side helpers
# --------------------------------------------------------------------------- #
def _device_kind():
    try:
        return jax.devices()[0].device_kind.lower()
    except Exception:
        return ""


def _tile_target():
    # v7x: 64 MiB VMEM per TensorCore -> smaller attention tiles; v5e/v6e: 128 MiB.
    return 256 if "v7" in _device_kind() else 512


def _round_up(x, m):
    return ((x + m - 1) // m) * m


def _pick_tile(n, target):
    """Largest tile <= target that divides n and is a multiple of 8 (else n)."""
    if n <= target:
        return n
    for t in range(min(target, n), 7, -1):
        if n % t == 0 and t % 8 == 0:
            return t
    return n


def prepare_params(params):
    """Fuse/pad/cast parameters for the kernel (done once, outside the hot path).

    - Pads C and Cint to multiples of 128 (zero padding).
    - Fuses [w_phi | w_g] into one (Cp, 2*Cip) weight.
    - Folds the eval-mode BatchNorm affine into the W projection.
    - Casts matmul weights to bf16 (f32 accumulation in-kernel); biases stay f32.
    """
    C, Ci = params["w_theta"].shape
    Cp = max(_round_up(C, 128), 128)
    Cip = max(_round_up(Ci, 128), 128)

    def pad2(w, r, c):
        return jnp.pad(w, ((0, r - w.shape[0]), (0, c - w.shape[1])))

    w_theta = pad2(params["w_theta"], Cp, Cip)
    b_theta = pad2(params["b_theta"], 1, Cip)
    w_phi = pad2(params["w_phi"], Cp, Cip)
    b_phi = pad2(params["b_phi"], 1, Cip)
    w_g = pad2(params["w_g"], Cp, Cip)
    b_g = pad2(params["b_g"], 1, Cip)

    # Fold BatchNorm (eval mode) into the W projection: (y@W + b)*s + t == y@(W*s) + (b*s + t)
    w_out = params["w_W"] * params["bn_scale"]
    b_out = params["b_W"] * params["bn_scale"] + params["bn_shift"]
    w_out = pad2(w_out, Cip, Cp)
    b_out = pad2(b_out, 1, Cp)

    return {
        "w_theta": w_theta.astype(jnp.bfloat16),
        "b_theta": b_theta.astype(jnp.float32),
        "w_kv": jnp.concatenate([w_phi, w_g], axis=1).astype(jnp.bfloat16),
        "b_kv": jnp.concatenate([b_phi, b_g], axis=1).astype(jnp.float32),
        "w_out": w_out.astype(jnp.bfloat16),
        "b_out": b_out.astype(jnp.float32),
    }


@functools.partial(jax.jit, static_argnames=("tile_q", "tile_k"))
def nonlocal_block_forward(x_nchw, prep, tile_q=None, tile_k=None):
    """x_nchw: (B, C_in, H, W) float32. Returns z: (B, C_in, H, W)."""
    B, C, H, W = x_nchw.shape
    N = H * W
    Cp, Cip = prep["w_theta"].shape[0], prep["w_theta"].shape[1]

    # NCHW -> (B, N, Cp), channel-last with zero-padded channels.
    x_flat = jnp.transpose(x_nchw.reshape(B, C, N), (0, 2, 1))
    if Cp > C:
        x_flat = jnp.pad(x_flat, ((0, 0), (0, 0), (0, Cp - C)))

    target = _tile_target()
    tq = tile_q if tile_q is not None else _pick_tile(N, target)
    tk = tile_k if tile_k is not None else _pick_tile(N, target)
    assert N % tq == 0 and (tq % 8 == 0 or tq == N)
    assert N % tk == 0 and (tk % 8 == 0 or tk == N)
    grid = (B, N // tq, N // tk)

    # Rough live-VMEM estimate -> explicit scoped-VMEM limit.
    wt_bytes = (Cp * Cip + Cp * 2 * Cip + Cip * Cp) * 2 + (Cip + 2 * Cip + Cp) * 4
    est = (2 * tq * Cp * 4            # xq (double-buffered)
           + 2 * tk * Cp * 4          # xk (double-buffered)
           + 2 * tq * Cp * 4          # out (double-buffered)
           + 2 * wt_bytes             # weights (double-buffered)
           + tq * Cip * 2 + tq * Cip * 4 + 2 * tq * 4   # scratch
           + 3 * tq * tk * 4          # score/prob temporaries
           + tk * 2 * Cip * 4)        # kv tile
    cap = (48 << 20) if "v7" in _device_kind() else (100 << 20)
    vmem_limit = int(min(max(2 * est, 32 << 20), cap))

    def wspec(shape):
        return pl.BlockSpec(shape, lambda b, qi, ki: (0, 0))

    out_flat = pl.pallas_call(
        _nonlocal_kernel,
        out_shape=jax.ShapeDtypeStruct((B, N, Cp), jnp.float32),
        grid_spec=pltpu.PrefetchScalarGridSpec(
            num_scalar_prefetch=0,
            grid=grid,
            in_specs=[
                pl.BlockSpec((1, tq, Cp), lambda b, qi, ki: (b, qi, 0)),   # x query tile
                pl.BlockSpec((1, tk, Cp), lambda b, qi, ki: (b, ki, 0)),   # x key tile
                wspec((Cp, Cip)),          # w_theta
                wspec((1, Cip)),           # b_theta
                wspec((Cp, 2 * Cip)),      # w_kv = [w_phi | w_g]
                wspec((1, 2 * Cip)),       # b_kv
                wspec((Cip, Cp)),          # w_out (BN folded)
                wspec((1, Cp)),            # b_out
            ],
            out_specs=pl.BlockSpec((1, tq, Cp), lambda b, qi, ki: (b, qi, 0)),
            scratch_shapes=[
                pltpu.VMEM((tq, Cip), jnp.bfloat16),   # theta (query projection)
                pltpu.VMEM((tq, 1), jnp.float32),      # running max
                pltpu.VMEM((tq, 1), jnp.float32),      # running denom
                pltpu.VMEM((tq, Cip), jnp.float32),    # output accumulator
            ],
        ),
        compiler_params=pltpu.CompilerParams(
            dimension_semantics=("parallel", "parallel", "arbitrary"),
            vmem_limit_bytes=vmem_limit),
    )(
        x_flat, x_flat,
        prep["w_theta"], prep["b_theta"],
        prep["w_kv"], prep["b_kv"],
        prep["w_out"], prep["b_out"],
    )

    # (B, N, Cp) -> strip channel padding -> NCHW
    out = out_flat[:, :, :C]
    return jnp.transpose(out, (0, 2, 1)).reshape(B, C, H, W)


# --------------------------------------------------------------------------- #
# Synthetic parameters + pure-JAX reference
# --------------------------------------------------------------------------- #
def make_params(key, in_channels, inter_channels):
    """Synthetic parameters matching the module's shapes.

    Conv weights are stored as (C_in, C_out) matrices (1x1 kernels squeezed).
    BatchNorm is eval-mode, folded to a per-channel affine.
    NOTE: the PyTorch module initializes BN gamma=beta=0 (identity block at
    init); here we use NONZERO gamma/beta/running-stats so the self-test
    actually exercises the attention / projection math instead of collapsing
    to z == x.
    """
    ks = jax.random.split(key, 12)
    eps = 1e-5

    def u(k, shape, fan_in):
        bound = 1.0 / jnp.sqrt(fan_in)
        return jax.random.uniform(k, shape, jnp.float32, -bound, bound)

    C, Ci = in_channels, inter_channels
    params = {
        "w_g":     u(ks[0], (C, Ci), C),
        "b_g":     u(ks[1], (1, Ci), C),
        "w_theta": u(ks[2], (C, Ci), C),
        "b_theta": u(ks[3], (1, Ci), C),
        "w_phi":   u(ks[4], (C, Ci), C),
        "b_phi":   u(ks[5], (1, Ci), C),
        "w_W":     u(ks[6], (Ci, C), Ci),
        "b_W":     u(ks[7], (1, C), Ci),
    }
    gamma = jax.random.uniform(ks[8], (1, C), jnp.float32, 0.5, 1.5)
    beta = jax.random.uniform(ks[9], (1, C), jnp.float32, -0.5, 0.5)
    running_mean = jax.random.uniform(ks[10], (1, C), jnp.float32, -0.2, 0.2)
    running_var = jax.random.uniform(ks[11], (1, C), jnp.float32, 0.5, 1.5)
    scale = gamma / jnp.sqrt(running_var + eps)
    shift = beta - running_mean * scale
    params["bn_scale"] = scale
    params["bn_shift"] = shift
    return params


def reference_forward(x_nchw, params):
    """Pure-JAX f32 reference of the PyTorch forward (for verification)."""
    B, C, H, W = x_nchw.shape
    N = H * W
    x = jnp.transpose(x_nchw.reshape(B, C, N), (0, 2, 1))          # (B, N, C)
    g_x = x @ params["w_g"] + params["b_g"]
    theta_x = x @ params["w_theta"] + params["b_theta"]
    phi_x = x @ params["w_phi"] + params["b_phi"]
    f = jnp.einsum("bnc,bmc->bnm", theta_x, phi_x)
    f = jax.nn.softmax(f, axis=-1)
    y = jnp.einsum("bnm,bmc->bnc", f, g_x)
    w_y = y @ params["w_W"] + params["b_W"]
    w_y = w_y * params["bn_scale"] + params["bn_shift"]
    z = w_y + x
    return jnp.transpose(z, (0, 2, 1)).reshape(B, C, H, W)


# --------------------------------------------------------------------------- #
# Self-test
# --------------------------------------------------------------------------- #
if __name__ == "__main__":
    B, C, H, W = 2, 4, 16, 16
    inter_channels = C // 2  # module default: in_channels // 2

    key = jax.random.PRNGKey(0)
    kx, kp = jax.random.split(key)
    x = jax.random.normal(kx, (B, C, H, W), jnp.float32)
    params = make_params(kp, C, inter_channels)
    prep = prepare_params(params)

    z_ref = reference_forward(x, params)

    # Default (device-dependent) tiling: N=256 -> single key tile.
    z = jax.block_until_ready(nonlocal_block_forward(x, prep))
    assert z.shape == (B, C, H, W)
    assert jnp.allclose(z, z_ref, atol=3e-2, rtol=3e-2), "mismatch vs reference"

    # Small explicit tiles to exercise the multi-key-tile online-softmax path.
    z2 = jax.block_until_ready(nonlocal_block_forward(x, prep, tile_q=64, tile_k=64))
    assert jnp.allclose(z2, z_ref, atol=3e-2, rtol=3e-2), "mismatch (tiled path)"

    # Guard against a vacuous test (output must actually differ from the input).
    assert float(jnp.max(jnp.abs(z - x))) > 1e-3, "test is vacuous (z == x)"

    print("KERNEL_OK")
</pallas_src>

<mosaic_0001>
module attributes {stable_mosaic.version = 11 : i64} {
  func.func @_nonlocal_kernel(%arg0: i32, %arg1: i32, %arg2: i32, %arg3: memref<1x256x128xf32, #tpu.memory_space<vmem>>, %arg4: memref<1x256x128xf32, #tpu.memory_space<vmem>>, %arg5: memref<128x128xbf16, #tpu.memory_space<vmem>>, %arg6: memref<1x128xf32, #tpu.memory_space<vmem>>, %arg7: memref<128x256xbf16, #tpu.memory_space<vmem>>, %arg8: memref<1x256xf32, #tpu.memory_space<vmem>>, %arg9: memref<128x128xbf16, #tpu.memory_space<vmem>>, %arg10: memref<1x128xf32, #tpu.memory_space<vmem>>, %arg11: memref<1x256x128xf32, #tpu.memory_space<vmem>>, %arg12: memref<256x128xbf16, #tpu.memory_space<vmem>>, %arg13: memref<256x1xf32, #tpu.memory_space<vmem>>, %arg14: memref<256x1xf32, #tpu.memory_space<vmem>>, %arg15: memref<256x128xf32, #tpu.memory_space<vmem>>) attributes {dimension_semantics = [#tpu.dimension_semantics<parallel>, #tpu.dimension_semantics<parallel>, #tpu.dimension_semantics<arbitrary>], iteration_bounds = array<i64: 2, 1, 1>, scalar_prefetch = 0 : i64, scratch_operands = 4 : i64, tpu.core_type = #tpu.core_type<tc>, window_params = [{transform_indices = @transform_0, window_bounds = array<i64: 1, 256, 128>}, {transform_indices = @transform_1, window_bounds = array<i64: 1, 256, 128>}, {pipeline_mode = #tpu.pipeline_mode<synchronous>, transform_indices = @transform_2, window_bounds = array<i64: 128, 128>}, {pipeline_mode = #tpu.pipeline_mode<synchronous>, transform_indices = @transform_3, window_bounds = array<i64: 1, 128>}, {pipeline_mode = #tpu.pipeline_mode<synchronous>, transform_indices = @transform_4, window_bounds = array<i64: 128, 256>}, {pipeline_mode = #tpu.pipeline_mode<synchronous>, transform_indices = @transform_5, window_bounds = array<i64: 1, 256>}, {pipeline_mode = #tpu.pipeline_mode<synchronous>, transform_indices = @transform_6, window_bounds = array<i64: 128, 128>}, {pipeline_mode = #tpu.pipeline_mode<synchronous>, transform_indices = @transform_7, window_bounds = array<i64: 1, 128>}, {transform_indices = @transform_8, window_bounds = array<i64: 1, 256, 128>}]} {
    %c0_i32 = arith.constant 0 : i32
    %0 = arith.cmpi eq, %arg2, %c0_i32 : i32
    %1 = arith.extui %0 : i1 to i32
    %c0_i32_0 = arith.constant 0 : i32
    %2 = arith.cmpi ne, %1, %c0_i32_0 : i32
    scf.if %2 {
      %c0_27 = arith.constant 0 : index
      %c0_28 = arith.constant 0 : index
      %c0_29 = arith.constant 0 : index
      %43 = vector.load %arg3[%c0_27, %c0_28, %c0_29] : memref<1x256x128xf32, #tpu.memory_space<vmem>>, vector<1x256x128xf32>
      %44 = vector.shape_cast %43 : vector<1x256x128xf32> to vector<256x128xf32>
      %45 = arith.truncf %44 : vector<256x128xf32> to vector<256x128xbf16>
      %c0_30 = arith.constant 0 : index
      %c0_31 = arith.constant 0 : index
      %46 = vector.load %arg5[%c0_30, %c0_31] : memref<128x128xbf16, #tpu.memory_space<vmem>>, vector<128x128xbf16>
      %cst_32 = arith.constant dense<0.000000e+00> : vector<256x128xf32>
      %47 = tpu.matmul %45, %46, %cst_32 {dimension_numbers = #tpu.dot_dimension_numbers<[1], [0], [0], [1], [0, 0, 1, 1], [], []>} : vector<256x128xbf16>, vector<128x128xbf16>, vector<256x128xf32> -> vector<256x128xf32>
      %c0_33 = arith.constant 0 : index
      %c0_34 = arith.constant 0 : index
      %48 = vector.load %arg6[%c0_33, %c0_34] : memref<1x128xf32, #tpu.memory_space<vmem>>, vector<1x128xf32>
      %49 = vector.broadcast %48 : vector<1x128xf32> to vector<256x128xf32>
      %50 = arith.addf %47, %49 : vector<256x128xf32>
      %51 = arith.truncf %50 : vector<256x128xf32> to vector<256x128xbf16>
      %c0_35 = arith.constant 0 : index
      %c0_36 = arith.constant 0 : index
      %52 = vector.load %arg12[%c0_35, %c0_36] : memref<256x128xbf16, #tpu.memory_space<vmem>>, vector<256x128xbf16>
      tpu.vector_store %arg12[%c0_35, %c0_36], %51 {strides = array<i32>} : memref<256x128xbf16, #tpu.memory_space<vmem>>, vector<256x128xbf16>,
      %cst_37 = arith.constant 0xFF800000 : f32
      %53 = vector.broadcast %cst_37 : f32 to vector<256x1xf32>
      %c0_38 = arith.constant 0 : index
      %c0_39 = arith.constant 0 : index
      %54 = vector.load %arg13[%c0_38, %c0_39] : memref<256x1xf32, #tpu.memory_space<vmem>>, vector<256x1xf32>
      tpu.vector_store %arg13[%c0_38, %c0_39], %53 {strides = array<i32>} : memref<256x1xf32, #tpu.memory_space<vmem>>, vector<256x1xf32>,
      %cst_40 = arith.constant 0.000000e+00 : f32
      %55 = vector.broadcast %cst_40 : f32 to vector<256x1xf32>
      %c0_41 = arith.constant 0 : index
      %c0_42 = arith.constant 0 : index
      %56 = vector.load %arg14[%c0_41, %c0_42] : memref<256x1xf32, #tpu.memory_space<vmem>>, vector<256x1xf32>
      tpu.vector_store %arg14[%c0_41, %c0_42], %55 {strides = array<i32>} : memref<256x1xf32, #tpu.memory_space<vmem>>, vector<256x1xf32>,
      %cst_43 = arith.constant 0.000000e+00 : f32
      %57 = vector.broadcast %cst_43 : f32 to vector<256x128xf32>
      %c0_44 = arith.constant 0 : index
      %c0_45 = arith.constant 0 : index
      %58 = vector.load %arg15[%c0_44, %c0_45] : memref<256x128xf32, #tpu.memory_space<vmem>>, vector<256x128xf32>
      tpu.vector_store %arg15[%c0_44, %c0_45], %57 {strides = array<i32>} : memref<256x128xf32, #tpu.memory_space<vmem>>, vector<256x128xf32>,
    } else {
    }
    %c0 = arith.constant 0 : index
    %c0_1 = arith.constant 0 : index
    %c0_2 = arith.constant 0 : index
    %3 = vector.load %arg4[%c0, %c0_1, %c0_2] : memref<1x256x128xf32, #tpu.memory_space<vmem>>, vector<1x256x128xf32>
    %4 = vector.shape_cast %3 : vector<1x256x128xf32> to vector<256x128xf32>
    %5 = arith.truncf %4 : vector<256x128xf32> to vector<256x128xbf16>
    %c0_3 = arith.constant 0 : index
    %c0_4 = arith.constant 0 : index
    %6 = vector.load %arg7[%c0_3, %c0_4] : memref<128x256xbf16, #tpu.memory_space<vmem>>, vector<128x256xbf16>
    %cst = arith.constant dense<0.000000e+00> : vector<256x256xf32>
    %7 = tpu.matmul %5, %6, %cst {dimension_numbers = #tpu.dot_dimension_numbers<[1], [0], [0], [1], [0, 0, 1, 1], [], []>} : vector<256x128xbf16>, vector<128x256xbf16>, vector<256x256xf32> -> vector<256x256xf32>
    %c0_5 = arith.constant 0 : index
    %c0_6 = arith.constant 0 : index
    %8 = vector.load %arg8[%c0_5, %c0_6] : memref<1x256xf32, #tpu.memory_space<vmem>>, vector<1x256xf32>
    %9 = vector.broadcast %8 : vector<1x256xf32> to vector<256x256xf32>
    %10 = arith.addf %7, %9 : vector<256x256xf32>
    %11 = vector.extract_strided_slice %10 {offsets = [0, 0], sizes = [256, 128], strides = [1, 1]} : vector<256x256xf32> to vector<256x128xf32>
    %12 = arith.truncf %11 : vector<256x128xf32> to vector<256x128xbf16>
    %13 = vector.extract_strided_slice %10 {offsets = [0, 128], sizes = [256, 128], strides = [1, 1]} : vector<256x256xf32> to vector<256x128xf32>
    %14 = arith.truncf %13 : vector<256x128xf32> to vector<256x128xbf16>
    %c0_7 = arith.constant 0 : index
    %c0_8 = arith.constant 0 : index
    %15 = vector.load %arg12[%c0_7, %c0_8] : memref<256x128xbf16, #tpu.memory_space<vmem>>, vector<256x128xbf16>
    %cst_9 = arith.constant dense<0.000000e+00> : vector<256x256xf32>
    %16 = tpu.matmul %15, %12, %cst_9 {dimension_numbers = #tpu.dot_dimension_numbers<[1], [1], [0], [0], [0, 0, 1, 0], [], []>} : vector<256x128xbf16>, vector<256x128xbf16>, vector<256x256xf32> -> vector<256x256xf32>
    %c0_10 = arith.constant 0 : index
    %c0_11 = arith.constant 0 : index
    %17 = vector.load %arg13[%c0_10, %c0_11] : memref<256x1xf32, #tpu.memory_space<vmem>>, vector<256x1xf32>
    %cst_12 = arith.constant dense<0xFF800000> : vector<256xf32>
    %18 = vector.multi_reduction <maximumf>, %16, %cst_12 [1] : vector<256x256xf32> to vector<256xf32>
    %19 = vector.shape_cast %18 : vector<256xf32> to vector<256x1xf32>
    %20 = arith.maximumf %17, %19 : vector<256x1xf32>
    %21 = arith.subf %17, %20 : vector<256x1xf32>
    %22 = math.exp %21 : vector<256x1xf32>
    %23 = vector.broadcast %20 : vector<256x1xf32> to vector<256x256xf32>
    %24 = arith.subf %16, %23 : vector<256x256xf32>
    %25 = math.exp %24 : vector<256x256xf32>
    %c0_13 = arith.constant 0 : index
    %c0_14 = arith.constant 0 : index
    %26 = vector.load %arg14[%c0_13, %c0_14] : memref<256x1xf32, #tpu.memory_space<vmem>>, vector<256x1xf32>
    %27 = arith.mulf %22, %26 : vector<256x1xf32>
    %cst_15 = arith.constant dense<0.000000e+00> : vector<256xf32>
    %28 = vector.multi_reduction <add>, %25, %cst_15 [1] : vector<256x256xf32> to vector<256xf32>
    %29 = vector.shape_cast %28 : vector<256xf32> to vector<256x1xf32>
    %30 = arith.addf %27, %29 : vector<256x1xf32>
    %c0_16 = arith.constant 0 : index
    %c0_17 = arith.constant 0 : index
    %31 = vector.load %arg14[%c0_16, %c0_17] : memref<256x1xf32, #tpu.memory_space<vmem>>, vector<256x1xf32>
    tpu.vector_store %arg14[%c0_16, %c0_17], %30 {strides = array<i32>} : memref<256x1xf32, #tpu.memory_space<vmem>>, vector<256x1xf32>,
    %c0_18 = arith.constant 0 : index
    %c0_19 = arith.constant 0 : index
    %32 = vector.load %arg15[%c0_18, %c0_19] : memref<256x128xf32, #tpu.memory_space<vmem>>, vector<256x128xf32>
    %33 = vector.broadcast %22 : vector<256x1xf32> to vector<256x128xf32>
    %34 = arith.mulf %33, %32 : vector<256x128xf32>
    %35 = arith.truncf %25 : vector<256x256xf32> to vector<256x256xbf16>
    %cst_20 = arith.constant dense<0.000000e+00> : vector<256x128xf32>
    %36 = tpu.matmul %35, %14, %cst_20 {dimension_numbers = #tpu.dot_dimension_numbers<[1], [0], [0], [1], [0, 0, 1, 1], [], []>} : vector<256x256xbf16>, vector<256x128xbf16>, vector<256x128xf32> -> vector<256x128xf32>
    %37 = arith.addf %34, %36 : vector<256x128xf32>
    %c0_21 = arith.constant 0 : index
    %c0_22 = arith.constant 0 : index
    %38 = vector.load %arg15[%c0_21, %c0_22] : memref<256x128xf32, #tpu.memory_space<vmem>>, vector<256x128xf32>
    tpu.vector_store %arg15[%c0_21, %c0_22], %37 {strides = array<i32>} : memref<256x128xf32, #tpu.memory_space<vmem>>, vector<256x128xf32>,
    %c0_23 = arith.constant 0 : index
    %c0_24 = arith.constant 0 : index
    %39 = vector.load %arg13[%c0_23, %c0_24] : memref<256x1xf32, #tpu.memory_space<vmem>>, vector<256x1xf32>
    tpu.vector_store %arg13[%c0_23, %c0_24], %20 {strides = array<i32>} : memref<256x1xf32, #tpu.memory_space<vmem>>, vector<256x1xf32>,
    %c0_i32_25 = arith.constant 0 : i32
    %40 = arith.cmpi eq, %arg2, %c0_i32_25 : i32
    %41 = arith.extui %40 : i1 to i32
    %c0_i32_26 = arith.constant 0 : i32
    %42 = arith.cmpi ne, %41, %c0_i32_26 : i32
    scf.if %42 {
      %c0_27 = arith.constant 0 : index
      %c0_28 = arith.constant 0 : index
      %43 = vector.load %arg15[%c0_27, %c0_28] : memref<256x128xf32, #tpu.memory_space<vmem>>, vector<256x128xf32>
      %c0_29 = arith.constant 0 : index
      %c0_30 = arith.constant 0 : index
      %44 = vector.load %arg14[%c0_29, %c0_30] : memref<256x1xf32, #tpu.memory_space<vmem>>, vector<256x1xf32>
      %45 = tpu.reciprocal %44 {approx = true} : vector<256x1xf32> -> vector<256x1xf32>
      %46 = vector.broadcast %45 : vector<256x1xf32> to vector<256x128xf32>
      %47 = arith.mulf %43, %46 : vector<256x128xf32>
      %48 = arith.truncf %47 : vector<256x128xf32> to vector<256x128xbf16>
      %c0_31 = arith.constant 0 : index
      %c0_32 = arith.constant 0 : index
      %49 = vector.load %arg9[%c0_31, %c0_32] : memref<128x128xbf16, #tpu.memory_space<vmem>>, vector<128x128xbf16>
      %cst_33 = arith.constant dense<0.000000e+00> : vector<256x128xf32>
      %50 = tpu.matmul %48, %49, %cst_33 {dimension_numbers = #tpu.dot_dimension_numbers<[1], [0], [0], [1], [0, 0, 1, 1], [], []>} : vector<256x128xbf16>, vector<128x128xbf16>, vector<256x128xf32> -> vector<256x128xf32>
      %c0_34 = arith.constant 0 : index
      %c0_35 = arith.constant 0 : index
      %51 = vector.load %arg10[%c0_34, %c0_35] : memref<1x128xf32, #tpu.memory_space<vmem>>, vector<1x128xf32>
      %52 = vector.broadcast %51 : vector<1x128xf32> to vector<256x128xf32>
      %53 = arith.addf %50, %52 : vector<256x128xf32>
      %c0_36 = arith.constant 0 : index
      %c0_37 = arith.constant 0 : index
      %c0_38 = arith.constant 0 : index
      %54 = vector.load %arg3[%c0_36, %c0_37, %c0_38] : memref<1x256x128xf32, #tpu.memory_space<vmem>>, vector<1x256x128xf32>
      %55 = vector.shape_cast %54 : vector<1x256x128xf32> to vector<256x128xf32>
      %56 = arith.addf %53, %55 : vector<256x128xf32>
      %c0_39 = arith.constant 0 : index
      %c0_40 = arith.constant 0 : index
      %c0_41 = arith.constant 0 : index
      %57 = vector.load %arg11[%c0_39, %c0_40, %c0_41] : memref<1x256x128xf32, #tpu.memory_space<vmem>>, vector<1x256x128xf32>
      %58 = vector.shape_cast %57 : vector<1x256x128xf32> to vector<256x128xf32>
      %59 = vector.shape_cast %56 : vector<256x128xf32> to vector<1x256x128xf32>
      tpu.vector_store %arg11[%c0_39, %c0_40, %c0_41], %59 {strides = array<i32>} : memref<1x256x128xf32, #tpu.memory_space<vmem>>, vector<1x256x128xf32>,
    } else {
    }
    return
  }
  func.func @transform_0(%arg0: i32, %arg1: i32, %arg2: i32) -> (i32, i32, i32) {
    %c0_i32 = arith.constant 0 : i32
    %c0_i32_0 = arith.constant 0 : i32
    return %arg0, %arg1, %c0_i32 : i32, i32, i32
  }
  func.func @transform_1(%arg0: i32, %arg1: i32, %arg2: i32) -> (i32, i32, i32) {
    %c0_i32 = arith.constant 0 : i32
    %c0_i32_0 = arith.constant 0 : i32
    return %arg0, %arg2, %c0_i32 : i32, i32, i32
  }
  func.func @transform_2(%arg0: i32, %arg1: i32, %arg2: i32) -> (i32, i32) {
    %c0_i32 = arith.constant 0 : i32
    %c0_i32_0 = arith.constant 0 : i32
    %c0_i32_1 = arith.constant 0 : i32
    return %c0_i32, %c0_i32_0 : i32, i32
  }
  func.func @transform_3(%arg0: i32, %arg1: i32, %arg2: i32) -> (i32, i32) {
    %c0_i32 = arith.constant 0 : i32
    %c0_i32_0 = arith.constant 0 : i32
    %c0_i32_1 = arith.constant 0 : i32
    return %c0_i32, %c0_i32_0 : i32, i32
  }
  func.func @transform_4(%arg0: i32, %arg1: i32, %arg2: i32) -> (i32, i32) {
    %c0_i32 = arith.constant 0 : i32
    %c0_i32_0 = arith.constant 0 : i32
    %c0_i32_1 = arith.constant 0 : i32
    return %c0_i32, %c0_i32_0 : i32, i32
  }
  func.func @transform_5(%arg0: i32, %arg1: i32, %arg2: i32) -> (i32, i32) {
    %c0_i32 = arith.constant 0 : i32
    %c0_i32_0 = arith.constant 0 : i32
    %c0_i32_1 = arith.constant 0 : i32
    return %c0_i32, %c0_i32_0 : i32, i32
  }
  func.func @transform_6(%arg0: i32, %arg1: i32, %arg2: i32) -> (i32, i32) {
    %c0_i32 = arith.constant 0 : i32
    %c0_i32_0 = arith.constant 0 : i32
    %c0_i32_1 = arith.constant 0 : i32
    return %c0_i32, %c0_i32_0 : i32, i32
  }
  func.func @transform_7(%arg0: i32, %arg1: i32, %arg2: i32) -> (i32, i32) {
    %c0_i32 = arith.constant 0 : i32
    %c0_i32_0 = arith.constant 0 : i32
    %c0_i32_1 = arith.constant 0 : i32
    return %c0_i32, %c0_i32_0 : i32, i32
  }
  func.func @transform_8(%arg0: i32, %arg1: i32, %arg2: i32) -> (i32, i32, i32) {
    %c0_i32 = arith.constant 0 : i32
    %c0_i32_0 = arith.constant 0 : i32
    return %arg0, %arg1, %c0_i32 : i32, i32, i32
  }
}

</mosaic_0001>

<llo_original>
// kernel: nonlocal_block_forward.1
$region0: #{nonlocal_block_forward.1}
  #allocation0 [shape = 'u32[]', space=smem, size = 0x4, offset = 0x4, fixed_abs, tag = 'smem constant byte address 0x4 - core index']
  #allocation1 [shape = 'u32[72,128]{1,0:T(1,128)}', space=vmem, size = 0x9000, scoped, tag = 'internal scratch']
  #allocation2 [shape = 'bf16[256,128]{1,0:T(8,128)(2,1)}', space=vmem, size = 0x10000, scoped, tag = 'scratch operand']
  #allocation3 [shape = 'f32[256,1]{1,0:T(8,128)}', space=vmem, size = 0x20000, scoped, tag = 'scratch operand']
  #allocation4 [shape = 'f32[256,1]{1,0:T(8,128)}', space=vmem, size = 0x20000, scoped, tag = 'scratch operand']
  #allocation5 [shape = 'f32[256,128]{1,0:T(8,128)}', space=vmem, size = 0x20000, scoped, tag = 'scratch operand']
  %s0 = inlined_call_operand.vmem [shape: f32[2,256,128], index: 0, kind: input, shape index: {}, may-alias: {0,1}]
  %s1 = inlined_call_operand.vmem [shape: f32[2,256,128], index: 1, kind: input, shape index: {}, may-alias: {0,1}]
  %s2 = inlined_call_operand.vmem [shape: bf16[128,128], index: 2, kind: input, shape index: {}]
  %s3 = inlined_call_operand.vmem [shape: f32[1,128], index: 3, kind: input, shape index: {}]
  %s4 = inlined_call_operand.vmem [shape: bf16[128,256], index: 4, kind: input, shape index: {}]
  %s5 = inlined_call_operand.vmem [shape: f32[1,256], index: 5, kind: input, shape index: {}]
  %s6 = inlined_call_operand.vmem [shape: bf16[128,128], index: 6, kind: input, shape index: {}]
  %s7 = inlined_call_operand.vmem [shape: f32[1,128], index: 7, kind: input, shape index: {}]
  %s8 = inlined_call_operand.vmem [shape: f32[2,256,128], index: 8, kind: output, shape index: {}]
  %s9 = sld [smem:[#allocation0]]
  $region73: #{nonlocal_block_forward.1} parent=0
    _
  %s11 = ssub.s32 1, %s9
  %s12 = scalar_select 0, %s11, %s9
  loop: start=0, step=1, limit=4
  $region2: #{nonlocal_block_forward.1} parent=0 // loop_pre_header
    _
  $region3: #{nonlocal_block_forward.1} parent=0 // loop_header
    %s14 = sphi 0, %s18
    %p15 = scmp.ge.s32.totalorder %s14, 4
    %s21 = sphi 0, %s40
    %s22 = sphi 0, %s36
    %s23 = sphi 0, %s32
    %s24 = sphi 0, %s21
    %s25 = sphi 0, %s22
    %s26 = sphi 0, %s23
    %s27 = sphi 0, %s24
    %s28 = sphi 0, %s25
    %s29 = sphi 0, %s26
    %s45 = sphi 0, %s47
    %s48 = sphi 0, %s45
    %s49 = sphi 0, %s48
    %s65 = sphi 0, %s49
    %s73 = sphi 0, %s75
    %s76 = sphi 0, %s73
    %s77 = sphi 0, %s76
    %s93 = sphi 0, %s77
    %s97 = sphi 0, %s97
    %s99 = sphi 0, %s97
    %s100 = sphi 0, %s99
    %s114 = sphi 0, %s100
    %s118 = sphi 0, %s118
    %s120 = sphi 0, %s118
    %s121 = sphi 0, %s120
    %s135 = sphi 0, %s121
    %s139 = sphi 0, %s139
    %s141 = sphi 0, %s139
    %s142 = sphi 0, %s141
    %s156 = sphi 0, %s142
    %s160 = sphi 0, %s160
    %s162 = sphi 0, %s160
    %s163 = sphi 0, %s162
    %s177 = sphi 0, %s163
    %s181 = sphi 0, %s181
    %s183 = sphi 0, %s181
    %s184 = sphi 0, %s183
    %s198 = sphi 0, %s184
    %s202 = sphi 0, %s202
    %s204 = sphi 0, %s202
    %s205 = sphi 0, %s204
    %s219 = sphi 0, %s205
    %s227 = sphi 0, %s229
    %s230 = sphi 0, %s227
    %s231 = sphi 0, %s230
    %s247 = sphi 0, %s231
  $region4: #{nonlocal_block_forward.1} parent=0 // loop_header_branch
    %17 = sbr.rel (%p15) target = $region8
  $region5: #{nonlocal_block_forward.1} parent=0 // loop_body
    %s19 = ssub.s32 %s14, 1
    %s20 = ssub.s32 %s14, 2
    %s30 = sadd.s32 1, %s23
    %p31 = scmp.ge.s32.totalorder %s30, 1
    %s32 = scalar_select %p31, 0, %s30
    %s33 = sadd.s32 1, %s22
    %s34 = scalar_select %p31, %s33, %s22
    %p35 = scmp.ge.s32.totalorder %s34, 1
    %s36 = scalar_select %p35, 0, %s34
    %s37 = sadd.s32 1, %s21
    %s38 = scalar_select %p35, %s37, %s21
    %p39 = scmp.ge.s32.totalorder %s38, 2
    %s40 = scalar_select %p39, 0, %s38
    %s41 = ssub.s32 %s21, %s40
    %s42 = ssub.s32 %s22, %s36
    %s43 = sor.u32 %s41, %s42
    %p44 = scmp.eq.s32.totalorder %s43, 0
    %s46 = sadd.s32 %s45, 1
    %s47 = scalar_select %p44, %s45, %s46
    %p50 = pneg %p44
    %p51 = scmp.eq.s32.totalorder %s14, 1
    %p52 = por %p50, %p51
    %p53 = scmp.ne.s32.totalorder %s45, %s48
    %p54 = scmp.eq.s32.totalorder %s14, 0
    %p55 = por %p53, %p54
    %p56 = scmp.ne.s32.totalorder %s45, %s48
    %p57 = scmp.eq.s32.totalorder %s19, 1
    %p58 = por %p56, %p57
    %p59 = scmp.ne.s32.totalorder %s48, %s49
    %p60 = scmp.eq.s32.totalorder %s19, 0
    %p61 = por %p59, %p60
    %p62 = scmp.ne.s32.totalorder %s48, %s49
    %p63 = scmp.eq.s32.totalorder %s20, 1
    %p64 = por %p62, %p63
    %p66 = scmp.ne.s32.totalorder %s49, %s65
    %p67 = scmp.eq.s32.totalorder %s20, 0
    %p68 = por %p66, %p67
    %s69 = ssub.s32 %s21, %s40
    %s70 = ssub.s32 %s23, %s32
    %s71 = sor.u32 %s69, %s70
    %p72 = scmp.eq.s32.totalorder %s71, 0
    %s74 = sadd.s32 %s73, 1
    %s75 = scalar_select %p72, %s73, %s74
    %p78 = pneg %p72
    %p79 = scmp.eq.s32.totalorder %s14, 1
    %p80 = por %p78, %p79
    %p81 = scmp.ne.s32.totalorder %s73, %s76
    %p82 = scmp.eq.s32.totalorder %s14, 0
    %p83 = por %p81, %p82
    %p84 = scmp.ne.s32.totalorder %s73, %s76
    %p85 = scmp.eq.s32.totalorder %s19, 1
    %p86 = por %p84, %p85
    %p87 = scmp.ne.s32.totalorder %s76, %s77
    %p88 = scmp.eq.s32.totalorder %s19, 0
    %p89 = por %p87, %p88
    %p90 = scmp.ne.s32.totalorder %s76, %s77
    %p91 = scmp.eq.s32.totalorder %s20, 1
    %p92 = por %p90, %p91
    %p94 = scmp.ne.s32.totalorder %s77, %s93
    %p95 = scmp.eq.s32.totalorder %s20, 0
    %p96 = por %p94, %p95
    %s98 = sadd.s32 %s97, 1
    %p101 = scmp.eq.s32.totalorder %s14, 1
    %p102 = scmp.ne.s32.totalorder %s97, %s99
    %p103 = scmp.eq.s32.totalorder %s14, 0
    %p104 = por %p102, %p103
    %p105 = scmp.ne.s32.totalorder %s97, %s99
    %p106 = scmp.eq.s32.totalorder %s19, 1
    %p107 = por %p105, %p106
    %p108 = scmp.ne.s32.totalorder %s99, %s100
    %p109 = scmp.eq.s32.totalorder %s19, 0
    %p110 = por %p108, %p109
    %p111 = scmp.ne.s32.totalorder %s99, %s100
    %p112 = scmp.eq.s32.totalorder %s20, 1
    %p113 = por %p111, %p112
    %p115 = scmp.ne.s32.totalorder %s100, %s114
    %p116 = scmp.eq.s32.totalorder %s20, 0
    %p117 = por %p115, %p116
    %s119 = sadd.s32 %s118, 1
    %p122 = scmp.eq.s32.totalorder %s14, 1
    %p123 = scmp.ne.s32.totalorder %s118, %s120
    %p124 = scmp.eq.s32.totalorder %s14, 0
    %p125 = por %p123, %p124
    %p126 = scmp.ne.s32.totalorder %s118, %s120
    %p127 = scmp.eq.s32.totalorder %s19, 1
    %p128 = por %p126, %p127
    %p129 = scmp.ne.s32.totalorder %s120, %s121
    %p130 = scmp.eq.s32.totalorder %s19, 0
    %p131 = por %p129, %p130
    %p132 = scmp.ne.s32.totalorder %s120, %s121
    %p133 = scmp.eq.s32.totalorder %s20, 1
    %p134 = por %p132, %p133
    %p136 = scmp.ne.s32.totalorder %s121, %s135
    %p137 = scmp.eq.s32.totalorder %s20, 0
    %p138 = por %p136, %p137
    %s140 = sadd.s32 %s139, 1
    %p143 = scmp.eq.s32.totalorder %s14, 1
    %p144 = scmp.ne.s32.totalorder %s139, %s141
    %p145 = scmp.eq.s32.totalorder %s14, 0
    %p146 = por %p144, %p145
    %p147 = scmp.ne.s32.totalorder %s139, %s141
    %p148 = scmp.eq.s32.totalorder %s19, 1
    %p149 = por %p147, %p148
    %p150 = scmp.ne.s32.totalorder %s141, %s142
    %p151 = scmp.eq.s32.totalorder %s19, 0
    %p152 = por %p150, %p151
    %p153 = scmp.ne.s32.totalorder %s141, %s142
    %p154 = scmp.eq.s32.totalorder %s20, 1
    %p155 = por %p153, %p154
    %p157 = scmp.ne.s32.totalorder %s142, %s156
    %p158 = scmp.eq.s32.totalorder %s20, 0
    %p159 = por %p157, %p158
    %s161 = sadd.s32 %s160, 1
    %p164 = scmp.eq.s32.totalorder %s14, 1
    %p165 = scmp.ne.s32.totalorder %s160, %s162
    %p166 = scmp.eq.s32.totalorder %s14, 0
    %p167 = por %p165, %p166
    %p168 = scmp.ne.s32.totalorder %s160, %s162
    %p169 = scmp.eq.s32.totalorder %s19, 1
    %p170 = por %p168, %p169
    %p171 = scmp.ne.s32.totalorder %s162, %s163
    %p172 = scmp.eq.s32.totalorder %s19, 0
    %p173 = por %p171, %p172
    %p174 = scmp.ne.s32.totalorder %s162, %s163
    %p175 = scmp.eq.s32.totalorder %s20, 1
    %p176 = por %p174, %p175
    %p178 = scmp.ne.s32.totalorder %s163, %s177
    %p179 = scmp.eq.s32.totalorder %s20, 0
    %p180 = por %p178, %p179
    %s182 = sadd.s32 %s181, 1
    %p185 = scmp.eq.s32.totalorder %s14, 1
    %p186 = scmp.ne.s32.totalorder %s181, %s183
    %p187 = scmp.eq.s32.totalorder %s14, 0
    %p188 = por %p186, %p187
    %p189 = scmp.ne.s32.totalorder %s181, %s183
    %p190 = scmp.eq.s32.totalorder %s19, 1
    %p191 = por %p189, %p190
    %p192 = scmp.ne.s32.totalorder %s183, %s184
    %p193 = scmp.eq.s32.totalorder %s19, 0
    %p194 = por %p192, %p193
    %p195 = scmp.ne.s32.totalorder %s183, %s184
    %p196 = scmp.eq.s32.totalorder %s20, 1
    %p197 = por %p195, %p196
    %p199 = scmp.ne.s32.totalorder %s184, %s198
    %p200 = scmp.eq.s32.totalorder %s20, 0
    %p201 = por %p199, %p200
    %s203 = sadd.s32 %s202, 1
    %p206 = scmp.eq.s32.totalorder %s14, 1
    %p207 = scmp.ne.s32.totalorder %s202, %s204
    %p208 = scmp.eq.s32.totalorder %s14, 0
    %p209 = por %p207, %p208
    %p210 = scmp.ne.s32.totalorder %s202, %s204
    %p211 = scmp.eq.s32.totalorder %s19, 1
    %p212 = por %p210, %p211
    %p213 = scmp.ne.s32.totalorder %s204, %s205
    %p214 = scmp.eq.s32.totalorder %s19, 0
    %p215 = por %p213, %p214
    %p216 = scmp.ne.s32.totalorder %s204, %s205
    %p217 = scmp.eq.s32.totalorder %s20, 1
    %p218 = por %p216, %p217
    %p220 = scmp.ne.s32.totalorder %s205, %s219
    %p221 = scmp.eq.s32.totalorder %s20, 0
    %p222 = por %p220, %p221
    %s223 = ssub.s32 %s21, %s40
    %s224 = ssub.s32 %s22, %s36
    %s225 = sor.u32 %s223, %s224
    %p226 = scmp.eq.s32.totalorder %s225, 0
    %s228 = sadd.s32 %s227, 1
    %s229 = scalar_select %p226, %s227, %s228
    %p232 = pneg %p226
    %p233 = scmp.eq.s32.totalorder %s14, 1
    %p234 = por %p232, %p233
    %p235 = scmp.ne.s32.totalorder %s227, %s230
    %p236 = scmp.eq.s32.totalorder %s14, 0
    %p237 = por %p235, %p236
    %p238 = scmp.ne.s32.totalorder %s227, %s230
    %p239 = scmp.eq.s32.totalorder %s19, 1
    %p240 = por %p238, %p239
    %p241 = scmp.ne.s32.totalorder %s230, %s231
    %p242 = scmp.eq.s32.totalorder %s19, 0
    %p243 = por %p241, %p242
    %p244 = scmp.ne.s32.totalorder %s230, %s231
    %p245 = scmp.eq.s32.totalorder %s20, 1
    %p246 = por %p244, %p245
    %p248 = scmp.ne.s32.totalorder %s231, %s247
    %p249 = scmp.eq.s32.totalorder %s20, 0
    %p250 = por %p248, %p249
    %p251 = scmp.le.s32.totalorder 1, %s14
    %p252 = scmp.lt.s32.totalorder %s14, 3
    %p253 = pnand %p251, %p252
    %p254 = pneg %p253
    // Predicated region
    $region9: #{nonlocal_block_forward.1} parent=5 // pred_check
      _
    $region10: #{nonlocal_block_forward.1} parent=5 // pred_check_branch
      %256 = sbr.rel (%p253) target = $region12
    $region11: #{nonlocal_block_forward.1} parent=5 // pred_region
      %s257 = ssub.s32 %s14, 1
      // Predicated region
      $region13: #{nonlocal_block_forward.1} parent=11 // pred_check
        %p258 = pneg %p110
      $region14: #{nonlocal_block_forward.1} parent=11 // pred_check_branch
        %260 = sbr.rel (%p258) target = $region16
      $region15: #{nonlocal_block_forward.1} parent=11 // pred_region
        _
      $region16: #{nonlocal_block_forward.1} parent=11 // pred_fallthru
        _
      // Predicated region
      $region17: #{nonlocal_block_forward.1} parent=11 // pred_check
        %p261 = pneg %p131
      $region18: #{nonlocal_block_forward.1} parent=11 // pred_check_branch
        %263 = sbr.rel (%p261) target = $region20
      $region19: #{nonlocal_block_forward.1} parent=11 // pred_region
        _
      $region20: #{nonlocal_block_forward.1} parent=11 // pred_fallthru
        _
      // Predicated region
      $region21: #{nonlocal_block_forward.1} parent=11 // pred_check
        %p264 = pneg %p152
      $region22: #{nonlocal_block_forward.1} parent=11 // pred_check_branch
        %266 = sbr.rel (%p264) target = $region24
      $region23: #{nonlocal_block_forward.1} parent=11 // pred_region
        _
      $region24: #{nonlocal_block_forward.1} parent=11 // pred_fallthru
        _
      // Predicated region
      $region25: #{nonlocal_block_forward.1} parent=11 // pred_check
        %p267 = pneg %p173
      $region26: #{nonlocal_block_forward.1} parent=11 // pred_check_branch
        %269 = sbr.rel (%p267) target = $region28
      $region27: #{nonlocal_block_forward.1} parent=11 // pred_region
        _
      $region28: #{nonlocal_block_forward.1} parent=11 // pred_fallthru
        _
      // Predicated region
      $region29: #{nonlocal_block_forward.1} parent=11 // pred_check
        %p270 = pneg %p194
      $region30: #{nonlocal_block_forward.1} parent=11 // pred_check_branch
        %272 = sbr.rel (%p270) target = $region32
      $region31: #{nonlocal_block_forward.1} parent=11 // pred_region
        _
      $region32: #{nonlocal_block_forward.1} parent=11 // pred_fallthru
        _
      // Predicated region
      $region33: #{nonlocal_block_forward.1} parent=11 // pred_check
        %p273 = pneg %p215
      $region34: #{nonlocal_block_forward.1} parent=11 // pred_check_branch
        %275 = sbr.rel (%p273) target = $region36
      $region35: #{nonlocal_block_forward.1} parent=11 // pred_region
        _
      $region36: #{nonlocal_block_forward.1} parent=11 // pred_fallthru
        _
    $region12: #{nonlocal_block_forward.1} parent=5 // pred_fallthru
      _
    %p276 = scmp.lt.s32.totalorder %s14, 2
    // Predicated region
    $region37: #{nonlocal_block_forward.1} parent=5 // pred_check
      %p277 = pneg %p276
    $region38: #{nonlocal_block_forward.1} parent=5 // pred_check_branch
      %279 = sbr.rel (%p277) target = $region40
    $region39: #{nonlocal_block_forward.1} parent=5 // pred_region
      // Predicated region
      $region41: #{nonlocal_block_forward.1} parent=39 // pred_check
        %p280 = pneg %p55
      $region42: #{nonlocal_block_forward.1} parent=39 // pred_check_branch
        %282 = sbr.rel (%p280) target = $region44
      $region43: #{nonlocal_block_forward.1} parent=39 // pred_region
        %s283 = smul.u32 32, %s22
        %p284 = scmp.lt.s32.totalorder %s21, 1
        %s285 = scalar_select %p284, %s21, 1
        %p286 = scmp.lt.s32.totalorder %s283, 31
        %s287 = scalar_select %p286, %s283, 31
        %s288 = smul.addr %s285, 32
        %s289 = sadd.s32 %s287, %s288
        %s290 = smul.addr %s289, 8
        %s291 = scalar_lea.vmem %s0, %s290
        %s292 = smul.u32 32, %s22
      $region44: #{nonlocal_block_forward.1} parent=39 // pred_fallthru
        _
      // Predicated region
      $region45: #{nonlocal_block_forward.1} parent=39 // pred_check
        %p293 = pneg %p83
      $region46: #{nonlocal_block_forward.1} parent=39 // pred_check_branch
        %295 = sbr.rel (%p293) target = $region48
      $region47: #{nonlocal_block_forward.1} parent=39 // pred_region
        %s296 = smul.u32 32, %s23
        %p297 = scmp.lt.s32.totalorder %s21, 1
        %s298 = scalar_select %p297, %s21, 1
        %p299 = scmp.lt.s32.totalorder %s296, 31
        %s300 = scalar_select %p299, %s296, 31
        %s301 = smul.addr %s298, 32
        %s302 = sadd.s32 %s300, %s301
        %s303 = smul.addr %s302, 8
        %s304 = scalar_lea.vmem %s1, %s303
        %s305 = smul.u32 32, %s23
      $region48: #{nonlocal_block_forward.1} parent=39 // pred_fallthru
        _
    $region40: #{nonlocal_block_forward.1} parent=5 // pred_fallthru
      _
    %p306 = scmp.le.s32.totalorder 1, %s14
    %p307 = scmp.lt.s32.totalorder %s14, 3
    %p308 = pnand %p306, %p307
    %p309 = pneg %p308
    // Predicated region
    $region49: #{nonlocal_block_forward.1} parent=5 // pred_check
      _
    $region50: #{nonlocal_block_forward.1} parent=5 // pred_check_branch
      %311 = sbr.rel (%p308) target = $region52
    $region51: #{nonlocal_block_forward.1} parent=5 // pred_region
      %s312 = ssub.s32 %s14, 1
      %s313 = smul.u32 32, %s25
      %p314 = scmp.lt.s32.totalorder %s24, 1
      %s315 = scalar_select %p314, %s24, 1
      %p316 = scmp.lt.s32.totalorder %s313, 31
      %s317 = scalar_select %p316, %s313, 31
      %s318 = smul.addr %s315, 32
      %s319 = sadd.s32 %s317, %s318
      %s320 = smul.addr %s319, 8
      %s321 = scalar_lea.vmem %s0, %s320
      %p322 = pneg %p61
      %p323 = pneg %p58
      %s324 = smul.u32 32, %s26
      %p325 = scmp.lt.s32.totalorder %s24, 1
      %s326 = scalar_select %p325, %s24, 1
      %p327 = scmp.lt.s32.totalorder %s324, 31
      %s328 = scalar_select %p327, %s324, 31
      %s329 = smul.addr %s326, 32
      %s330 = sadd.s32 %s328, %s329
      %s331 = smul.addr %s330, 8
      %s332 = scalar_lea.vmem %s1, %s331
      %p333 = pneg %p89
      %p334 = pneg %p86
      %p335 = pneg %p110
      %p336 = pneg %p107
      %p337 = pneg %p131
      %p338 = pneg %p128
      %p339 = pneg %p152
      %p340 = pneg %p149
      %p341 = pneg %p173
      %p342 = pneg %p170
      %p343 = pneg %p194
      %p344 = pneg %p191
      %p345 = pneg %p215
      %p346 = pneg %p212
      %p347 = pneg %p243
      %p348 = pneg %p240
      %s349 = smul.u32 32, %s25
      %p350 = scmp.lt.s32.totalorder %s24, 1
      %s351 = scalar_select %p350, %s24, 1
      %p352 = scmp.lt.s32.totalorder %s349, 31
      %s353 = scalar_select %p352, %s349, 31
      %s354 = smul.addr %s351, 32
      %s355 = sadd.s32 %s353, %s354
      %s356 = smul.addr %s355, 8
      %s357 = scalar_lea.vmem %s8, %s356
      %s358 = smul.u32 32, %s25
      %p359 = scmp.lt.s32.totalorder %s24, 1
      %s360 = scalar_select %p359, %s24, 1
      %p361 = scmp.lt.s32.totalorder %s358, 31
      %s362 = scalar_select %p361, %s358, 31
      %s363 = smul.addr %s360, 32
      %s364 = sadd.s32 %s362, %s363
      %s365 = smul.addr %s364, 8
      %s366 = scalar_lea.vmem %s0, %s365
      %s367 = smul.u32 32, %s25
      %s368 = smul.u32 32, %s26
      %p369 = scmp.lt.s32.totalorder %s24, 1
      %s370 = scalar_select %p369, %s24, 1
      %p371 = scmp.lt.s32.totalorder %s368, 31
      %s372 = scalar_select %p371, %s368, 31
      %s373 = smul.addr %s370, 32
      %s374 = sadd.s32 %s372, %s373
      %s375 = smul.addr %s374, 8
      %s376 = scalar_lea.vmem %s1, %s375
      %s377 = smul.u32 32, %s26
      %s378 = smul.u32 32, %s25
      %p379 = scmp.lt.s32.totalorder %s24, 1
      %s380 = scalar_select %p379, %s24, 1
      %p381 = scmp.lt.s32.totalorder %s378, 31
      %s382 = scalar_select %p381, %s378, 31
      %s383 = smul.addr %s380, 32
      %s384 = sadd.s32 %s382, %s383
      %s385 = smul.addr %s384, 8
      %s386 = scalar_lea.vmem %s8, %s385
      %s387 = smul.u32 32, %s25
      %p388 = scmp.eq.s32.totalorder %s26, 0
      // Predicated region
      $region53: #{nonlocal_block_forward.1} parent=51 // pred_check
        %p389 = pneg %p388
      $region54: #{nonlocal_block_forward.1} parent=51 // pred_check_branch
        %391 = sbr.rel (%p389) target = $region56
      $region55: #{nonlocal_block_forward.1} parent=51 // pred_region
        %v392 = vld [vmem:[%s366] sm:$0xff]
        %v393 = vld [vmem:[%s366 + $0x8] sm:$0xff]
        %v394 = vld [vmem:[%s366 + $0x10] sm:$0xff]
        %v395 = vld [vmem:[%s366 + $0x18] sm:$0xff]
        %v396 = vld [vmem:[%s366 + $0x20] sm:$0xff]
        %v397 = vld [vmem:[%s366 + $0x28] sm:$0xff]
        %v398 = vld [vmem:[%s366 + $0x30] sm:$0xff]
        %v399 = vld [vmem:[%s366 + $0x38] sm:$0xff]
        %v400 = vld [vmem:[%s366 + $0x40] sm:$0xff]
        %v401 = vld [vmem:[%s366 + $0x48] sm:$0xff]
        %v402 = vld [vmem:[%s366 + $0x50] sm:$0xff]
        %v403 = vld [vmem:[%s366 + $0x58] sm:$0xff]
        %v404 = vld [vmem:[%s366 + $0x60] sm:$0xff]
        %v405 = vld [vmem:[%s366 + $0x68] sm:$0xff]
        %v406 = vld [vmem:[%s366 + $0x70] sm:$0xff]
        %v407 = vld [vmem:[%s366 + $0x78] sm:$0xff]
        %v408 = vld [vmem:[%s366 + $0x80] sm:$0xff]
        %v409 = vld [vmem:[%s366 + $0x88] sm:$0xff]
        %v410 = vld [vmem:[%s366 + $0x90] sm:$0xff]
        %v411 = vld [vmem:[%s366 + $0x98] sm:$0xff]
        %v412 = vld [vmem:[%s366 + $0xa0] sm:$0xff]
        %v413 = vld [vmem:[%s366 + $0xa8] sm:$0xff]
        %v414 = vld [vmem:[%s366 + $0xb0] sm:$0xff]
        %v415 = vld [vmem:[%s366 + $0xb8] sm:$0xff]
        %v416 = vld [vmem:[%s366 + $0xc0] sm:$0xff]
        %v417 = vld [vmem:[%s366 + $0xc8] sm:$0xff]
        %v418 = vld [vmem:[%s366 + $0xd0] sm:$0xff]
        %v419 = vld [vmem:[%s366 + $0xd8] sm:$0xff]
        %v420 = vld [vmem:[%s366 + $0xe0] sm:$0xff]
        %v421 = vld [vmem:[%s366 + $0xe8] sm:$0xff]
        %v422 = vld [vmem:[%s366 + $0xf0] sm:$0xff]
        %v423 = vld [vmem:[%s366 + $0xf8] sm:$0xff]
        %v424 = vpack.c.bf16 %v393, %v392
        %v425 = vpack.c.bf16 %v395, %v394
        %v426 = vpack.c.bf16 %v397, %v396
        %v427 = vpack.c.bf16 %v399, %v398
        %v428 = vpack.c.bf16 %v401, %v400
        %v429 = vpack.c.bf16 %v403, %v402
        %v430 = vpack.c.bf16 %v405, %v404
        %v431 = vpack.c.bf16 %v407, %v406
        %v432 = vpack.c.bf16 %v409, %v408
        %v433 = vpack.c.bf16 %v411, %v410
        %v434 = vpack.c.bf16 %v413, %v412
        %v435 = vpack.c.bf16 %v415, %v414
        %v436 = vpack.c.bf16 %v417, %v416
        %v437 = vpack.c.bf16 %v419, %v418
        %v438 = vpack.c.bf16 %v421, %v420
        %v439 = vpack.c.bf16 %v423, %v422
        %v440 = vld [vmem:[%s2] sm:$0xf]
        %v441 = vld [vmem:[%s2 + $0x4] sm:$0xf]
        %v442 = vld [vmem:[%s2 + $0x8] sm:$0xf]
        %v443 = vld [vmem:[%s2 + $0xc] sm:$0xf]
        %v444 = vld [vmem:[%s2 + $0x10] sm:$0xf]
        %v445 = vld [vmem:[%s2 + $0x14] sm:$0xf]
        %v446 = vld [vmem:[%s2 + $0x18] sm:$0xf]
        %v447 = vld [vmem:[%s2 + $0x1c] sm:$0xf]
        %v448 = vld [vmem:[%s2 + $0x20] sm:$0xf]
        %v449 = vld [vmem:[%s2 + $0x24] sm:$0xf]
        %v450 = vld [vmem:[%s2 + $0x28] sm:$0xf]
        %v451 = vld [vmem:[%s2 + $0x2c] sm:$0xf]
        %v452 = vld [vmem:[%s2 + $0x30] sm:$0xf]
        %v453 = vld [vmem:[%s2 + $0x34] sm:$0xf]
        %v454 = vld [vmem:[%s2 + $0x38] sm:$0xf]
        %v455 = vld [vmem:[%s2 + $0x3c] sm:$0xf]
        %v456 = vld [vmem:[%s3] sm:$0x1]
        %v458 = vperm.slane %v456, 0
        %v476 = vunpack.c.l.b16 %v440
        %v477 = vunpack.c.l.b16 %v441
        %v478 = vunpack.c.l.b16 %v442
        %v479 = vunpack.c.l.b16 %v443
        %v480 = vunpack.c.l.b16 %v444
        %v481 = vunpack.c.l.b16 %v445
        %v482 = vunpack.c.l.b16 %v446
        %v483 = vunpack.c.l.b16 %v447
        %v484 = vunpack.c.l.b16 %v448
        %v485 = vunpack.c.l.b16 %v449
        %v486 = vunpack.c.l.b16 %v450
        %v487 = vunpack.c.l.b16 %v451
        %v488 = vunpack.c.l.b16 %v452
        %v489 = vunpack.c.l.b16 %v453
        %v490 = vunpack.c.l.b16 %v454
        %v491 = vunpack.c.l.b16 %v455
        %v492 = vpack.c.b16 %v477, %v476
        %v493 = vpack.c.b16 %v479, %v478
        %v494 = vpack.c.b16 %v481, %v480
        %v495 = vpack.c.b16 %v483, %v482
        %v496 = vpack.c.b16 %v485, %v484
        %v497 = vpack.c.b16 %v487, %v486
        %v498 = vpack.c.b16 %v489, %v488
        %v499 = vpack.c.b16 %v491, %v490
        %508 = vmatpush.bf16.msra.mxu0 %v499
        %509 = vmatpush.bf16.msra.mxu0 %v498
        %510 = vmatpush.bf16.msra.mxu0 %v497
        %511 = vmatpush.bf16.msra.mxu0 %v496
        %512 = vmatpush.bf16.msra.mxu0 %v495
        %513 = vmatpush.bf16.msra.mxu0 %v494
        %514 = vmatpush.bf16.msra.mxu0 %v493
        %515 = vmatpush.bf16.msra.mxu0 %v492
        %516 = vmatmul.bf16.gmra.mxu0 %v424
        %v517 = vpop.f32.mrf.mxu0
        %v518 = vadd.f32 %v458, %v517
        %v519 = vpop.f32.mrf.mxu0
        %v520 = vadd.f32 %v458, %v519
        %521 = vmatmul.bf16.gmra.mxu0 %v425
        %v522 = vpop.f32.mrf.mxu0
        %v523 = vadd.f32 %v458, %v522
        %v524 = vpop.f32.mrf.mxu0
        %v525 = vadd.f32 %v458, %v524
        %526 = vmatmul.bf16.gmra.mxu0 %v426
        %v527 = vpop.f32.mrf.mxu0
        %v528 = vadd.f32 %v458, %v527
        %v529 = vpop.f32.mrf.mxu0
        %v530 = vadd.f32 %v458, %v529
        %531 = vmatmul.bf16.gmra.mxu0 %v427
        %v532 = vpop.f32.mrf.mxu0
        %v533 = vadd.f32 %v458, %v532
        %v534 = vpop.f32.mrf.mxu0
        %v535 = vadd.f32 %v458, %v534
        %536 = vmatmul.bf16.gmra.mxu0 %v428
        %v537 = vpop.f32.mrf.mxu0
        %v538 = vadd.f32 %v458, %v537
        %v539 = vpop.f32.mrf.mxu0
        %v540 = vadd.f32 %v458, %v539
        %541 = vmatmul.bf16.gmra.mxu0 %v429
        %v542 = vpop.f32.mrf.mxu0
        %v543 = vadd.f32 %v458, %v542
        %v544 = vpop.f32.mrf.mxu0
        %v545 = vadd.f32 %v458, %v544
        %546 = vmatmul.bf16.gmra.mxu0 %v430
        %v547 = vpop.f32.mrf.mxu0
        %v548 = vadd.f32 %v458, %v547
        %v549 = vpop.f32.mrf.mxu0
        %v550 = vadd.f32 %v458, %v549
        %551 = vmatmul.bf16.gmra.mxu0 %v431
        %v552 = vpop.f32.mrf.mxu0
        %v553 = vadd.f32 %v458, %v552
        %v554 = vpop.f32.mrf.mxu0
        %v555 = vadd.f32 %v458, %v554
        %556 = vmatmul.bf16.gmra.mxu0 %v432
        %v557 = vpop.f32.mrf.mxu0
        %v558 = vadd.f32 %v458, %v557
        %v559 = vpop.f32.mrf.mxu0
        %v560 = vadd.f32 %v458, %v559
        %561 = vmatmul.bf16.gmra.mxu0 %v433
        %v562 = vpop.f32.mrf.mxu0
        %v563 = vadd.f32 %v458, %v562
        %v564 = vpop.f32.mrf.mxu0
        %v565 = vadd.f32 %v458, %v564
        %566 = vmatmul.bf16.gmra.mxu0 %v434
        %v567 = vpop.f32.mrf.mxu0
        %v568 = vadd.f32 %v458, %v567
        %v569 = vpop.f32.mrf.mxu0
        %v570 = vadd.f32 %v458, %v569
        %571 = vmatmul.bf16.gmra.mxu0 %v435
        %v572 = vpop.f32.mrf.mxu0
        %v573 = vadd.f32 %v458, %v572
        %v574 = vpop.f32.mrf.mxu0
        %v575 = vadd.f32 %v458, %v574
        %576 = vmatmul.bf16.gmra.mxu0 %v436
        %v577 = vpop.f32.mrf.mxu0
        %v578 = vadd.f32 %v458, %v577
        %v579 = vpop.f32.mrf.mxu0
        %v580 = vadd.f32 %v458, %v579
        %581 = vmatmul.bf16.gmra.mxu0 %v437
        %v582 = vpop.f32.mrf.mxu0
        %v583 = vadd.f32 %v458, %v582
        %v584 = vpop.f32.mrf.mxu0
        %v585 = vadd.f32 %v458, %v584
        %586 = vmatmul.bf16.gmra.mxu0 %v438
        %v587 = vpop.f32.mrf.mxu0
        %v588 = vadd.f32 %v458, %v587
        %v589 = vpop.f32.mrf.mxu0
        %v590 = vadd.f32 %v458, %v589
        %591 = vmatmul.bf16.gmra.mxu0 %v439
        %v592 = vpop.f32.mrf.mxu0
        %v593 = vadd.f32 %v458, %v592
        %v594 = vpop.f32.mrf.mxu0
        %v595 = vadd.f32 %v458, %v594
        %596 = vdwg.mxu0
        %v597 = vpack.c.bf16 %v518, %v518
        %v598 = vpack.c.bf16 %v520, %v520
        %v599 = vpack.c.bf16 %v523, %v523
        %v600 = vpack.c.bf16 %v525, %v525
        %v601 = vpack.c.bf16 %v528, %v528
        %v602 = vpack.c.bf16 %v530, %v530
        %v603 = vpack.c.bf16 %v533, %v533
        %v604 = vpack.c.bf16 %v535, %v535
        %v605 = vpack.c.bf16 %v538, %v538
        %v606 = vpack.c.bf16 %v540, %v540
        %v607 = vpack.c.bf16 %v543, %v543
        %v608 = vpack.c.bf16 %v545, %v545
        %v609 = vpack.c.bf16 %v548, %v548
        %v610 = vpack.c.bf16 %v550, %v550
        %v611 = vpack.c.bf16 %v553, %v553
        %v612 = vpack.c.bf16 %v555, %v555
        %v613 = vpack.c.bf16 %v558, %v558
        %v614 = vpack.c.bf16 %v560, %v560
        %v615 = vpack.c.bf16 %v563, %v563
        %v616 = vpack.c.bf16 %v565, %v565
        %v617 = vpack.c.bf16 %v568, %v568
        %v618 = vpack.c.bf16 %v570, %v570
        %v619 = vpack.c.bf16 %v573, %v573
        %v620 = vpack.c.bf16 %v575, %v575
        %v621 = vpack.c.bf16 %v578, %v578
        %v622 = vpack.c.bf16 %v580, %v580
        %v623 = vpack.c.bf16 %v583, %v583
        %v624 = vpack.c.bf16 %v585, %v585
        %v625 = vpack.c.bf16 %v588, %v588
        %v626 = vpack.c.bf16 %v590, %v590
        %v627 = vpack.c.bf16 %v593, %v593
        %v628 = vpack.c.bf16 %v595, %v595
        %629 = vst [vmem:[#allocation2] sm:$0xf] %v597
        %630 = vst [vmem:[#allocation2 + $0x4] sm:$0xf] %v598
        %631 = vst [vmem:[#allocation2 + $0x8] sm:$0xf] %v599
        %632 = vst [vmem:[#allocation2 + $0xc] sm:$0xf] %v600
        %633 = vst [vmem:[#allocation2 + $0x10] sm:$0xf] %v601
        %634 = vst [vmem:[#allocation2 + $0x14] sm:$0xf] %v602
        %635 = vst [vmem:[#allocation2 + $0x18] sm:$0xf] %v603
        %636 = vst [vmem:[#allocation2 + $0x1c] sm:$0xf] %v604
        %637 = vst [vmem:[#allocation2 + $0x20] sm:$0xf] %v605
        %638 = vst [vmem:[#allocation2 + $0x24] sm:$0xf] %v606
        %639 = vst [vmem:[#allocation2 + $0x28] sm:$0xf] %v607
        %640 = vst [vmem:[#allocation2 + $0x2c] sm:$0xf] %v608
        %641 = vst [vmem:[#allocation2 + $0x30] sm:$0xf] %v609
        %642 = vst [vmem:[#allocation2 + $0x34] sm:$0xf] %v610
        %643 = vst [vmem:[#allocation2 + $0x38] sm:$0xf] %v611
        %644 = vst [vmem:[#allocation2 + $0x3c] sm:$0xf] %v612
        %645 = vst [vmem:[#allocation2 + $0x40] sm:$0xf] %v613
        %646 = vst [vmem:[#allocation2 + $0x44] sm:$0xf] %v614
        %647 = vst [vmem:[#allocation2 + $0x48] sm:$0xf] %v615
        %648 = vst [vmem:[#allocation2 + $0x4c] sm:$0xf] %v616
        %649 = vst [vmem:[#allocation2 + $0x50] sm:$0xf] %v617
        %650 = vst [vmem:[#allocation2 + $0x54] sm:$0xf] %v618
        %651 = vst [vmem:[#allocation2 + $0x58] sm:$0xf] %v619
        %652 = vst [vmem:[#allocation2 + $0x5c] sm:$0xf] %v620
        %653 = vst [vmem:[#allocation2 + $0x60] sm:$0xf] %v621
        %654 = vst [vmem:[#allocation2 + $0x64] sm:$0xf] %v622
        %655 = vst [vmem:[#allocation2 + $0x68] sm:$0xf] %v623
        %656 = vst [vmem:[#allocation2 + $0x6c] sm:$0xf] %v624
        %657 = vst [vmem:[#allocation2 + $0x70] sm:$0xf] %v625
        %658 = vst [vmem:[#allocation2 + $0x74] sm:$0xf] %v626
        %659 = vst [vmem:[#allocation2 + $0x78] sm:$0xf] %v627
        %660 = vst [vmem:[#allocation2 + $0x7c] sm:$0xf] %v628
        %vm661 = vcmask 7168
        %662 = vst.msk [vmem:[#allocation3] sm:$0xff] %vm661, -inf
        %663 = vst.msk [vmem:[#allocation3 + $0x8] sm:$0xff] %vm661, -inf
        %664 = vst.msk [vmem:[#allocation3 + $0x10] sm:$0xff] %vm661, -inf
        %665 = vst.msk [vmem:[#allocation3 + $0x18] sm:$0xff] %vm661, -inf
        %666 = vst.msk [vmem:[#allocation3 + $0x20] sm:$0xff] %vm661, -inf
        %667 = vst.msk [vmem:[#allocation3 + $0x28] sm:$0xff] %vm661, -inf
        %668 = vst.msk [vmem:[#allocation3 + $0x30] sm:$0xff] %vm661, -inf
        %669 = vst.msk [vmem:[#allocation3 + $0x38] sm:$0xff] %vm661, -inf
        %670 = vst.msk [vmem:[#allocation3 + $0x40] sm:$0xff] %vm661, -inf
        %671 = vst.msk [vmem:[#allocation3 + $0x48] sm:$0xff] %vm661, -inf
        %672 = vst.msk [vmem:[#allocation3 + $0x50] sm:$0xff] %vm661, -inf
        %673 = vst.msk [vmem:[#allocation3 + $0x58] sm:$0xff] %vm661, -inf
        %674 = vst.msk [vmem:[#allocation3 + $0x60] sm:$0xff] %vm661, -inf
        %675 = vst.msk [vmem:[#allocation3 + $0x68] sm:$0xff] %vm661, -inf
        %676 = vst.msk [vmem:[#allocation3 + $0x70] sm:$0xff] %vm661, -inf
        %677 = vst.msk [vmem:[#allocation3 + $0x78] sm:$0xff] %vm661, -inf
        %678 = vst.msk [vmem:[#allocation3 + $0x80] sm:$0xff] %vm661, -inf
        %679 = vst.msk [vmem:[#allocation3 + $0x88] sm:$0xff] %vm661, -inf
        %680 = vst.msk [vmem:[#allocation3 + $0x90] sm:$0xff] %vm661, -inf
        %681 = vst.msk [vmem:[#allocation3 + $0x98] sm:$0xff] %vm661, -inf
        %682 = vst.msk [vmem:[#allocation3 + $0xa0] sm:$0xff] %vm661, -inf
        %683 = vst.msk [vmem:[#allocation3 + $0xa8] sm:$0xff] %vm661, -inf
        %684 = vst.msk [vmem:[#allocation3 + $0xb0] sm:$0xff] %vm661, -inf
        %685 = vst.msk [vmem:[#allocation3 + $0xb8] sm:$0xff] %vm661, -inf
        %686 = vst.msk [vmem:[#allocation3 + $0xc0] sm:$0xff] %vm661, -inf
        %687 = vst.msk [vmem:[#allocation3 + $0xc8] sm:$0xff] %vm661, -inf
        %688 = vst.msk [vmem:[#allocation3 + $0xd0] sm:$0xff] %vm661, -inf
        %689 = vst.msk [vmem:[#allocation3 + $0xd8] sm:$0xff] %vm661, -inf
        %690 = vst.msk [vmem:[#allocation3 + $0xe0] sm:$0xff] %vm661, -inf
        %691 = vst.msk [vmem:[#allocation3 + $0xe8] sm:$0xff] %vm661, -inf
        %692 = vst.msk [vmem:[#allocation3 + $0xf0] sm:$0xff] %vm661, -inf
        %693 = vst.msk [vmem:[#allocation3 + $0xf8] sm:$0xff] %vm661, -inf
        %694 = vst.msk [vmem:[#allocation4] sm:$0xff] %vm661, 0.0
        %695 = vst.msk [vmem:[#allocation4 + $0x8] sm:$0xff] %vm661, 0.0
        %696 = vst.msk [vmem:[#allocation4 + $0x10] sm:$0xff] %vm661, 0.0
        %697 = vst.msk [vmem:[#allocation4 + $0x18] sm:$0xff] %vm661, 0.0
        %698 = vst.msk [vmem:[#allocation4 + $0x20] sm:$0xff] %vm661, 0.0
        %699 = vst.msk [vmem:[#allocation4 + $0x28] sm:$0xff] %vm661, 0.0
        %700 = vst.msk [vmem:[#allocation4 + $0x30] sm:$0xff] %vm661, 0.0
        %701 = vst.msk [vmem:[#allocation4 + $0x38] sm:$0xff] %vm661, 0.0
        %702 = vst.msk [vmem:[#allocation4 + $0x40] sm:$0xff] %vm661, 0.0
        %703 = vst.msk [vmem:[#allocation4 + $0x48] sm:$0xff] %vm661, 0.0
        %704 = vst.msk [vmem:[#allocation4 + $0x50] sm:$0xff] %vm661, 0.0
        %705 = vst.msk [vmem:[#allocation4 + $0x58] sm:$0xff] %vm661, 0.0
        %706 = vst.msk [vmem:[#allocation4 + $0x60] sm:$0xff] %vm661, 0.0
        %707 = vst.msk [vmem:[#allocation4 + $0x68] sm:$0xff] %vm661, 0.0
        %708 = vst.msk [vmem:[#allocation4 + $0x70] sm:$0xff] %vm661, 0.0
        %709 = vst.msk [vmem:[#allocation4 + $0x78] sm:$0xff] %vm661, 0.0
        %710 = vst.msk [vmem:[#allocation4 + $0x80] sm:$0xff] %vm661, 0.0
        %711 = vst.msk [vmem:[#allocation4 + $0x88] sm:$0xff] %vm661, 0.0
        %712 = vst.msk [vmem:[#allocation4 + $0x90] sm:$0xff] %vm661, 0.0
        %713 = vst.msk [vmem:[#allocation4 + $0x98] sm:$0xff] %vm661, 0.0
        %714 = vst.msk [vmem:[#allocation4 + $0xa0] sm:$0xff] %vm661, 0.0
        %715 = vst.msk [vmem:[#allocation4 + $0xa8] sm:$0xff] %vm661, 0.0
        %716 = vst.msk [vmem:[#allocation4 + $0xb0] sm:$0xff] %vm661, 0.0
        %717 = vst.msk [vmem:[#allocation4 + $0xb8] sm:$0xff] %vm661, 0.0
        %718 = vst.msk [vmem:[#allocation4 + $0xc0] sm:$0xff] %vm661, 0.0
        %719 = vst.msk [vmem:[#allocation4 + $0xc8] sm:$0xff] %vm661, 0.0
        %720 = vst.msk [vmem:[#allocation4 + $0xd0] sm:$0xff] %vm661, 0.0
        %721 = vst.msk [vmem:[#allocation4 + $0xd8] sm:$0xff] %vm661, 0.0
        %722 = vst.msk [vmem:[#allocation4 + $0xe0] sm:$0xff] %vm661, 0.0
        %723 = vst.msk [vmem:[#allocation4 + $0xe8] sm:$0xff] %vm661, 0.0
        %724 = vst.msk [vmem:[#allocation4 + $0xf0] sm:$0xff] %vm661, 0.0
        %725 = vst.msk [vmem:[#allocation4 + $0xf8] sm:$0xff] %vm661, 0.0
        %726 = vst [vmem:[#allocation5] sm:$0xff] 0.0
        %727 = vst [vmem:[#allocation5 + $0x8] sm:$0xff] 0.0
        %728 = vst [vmem:[#allocation5 + $0x10] sm:$0xff] 0.0
        %729 = vst [vmem:[#allocation5 + $0x18] sm:$0xff] 0.0
        %730 = vst [vmem:[#allocation5 + $0x20] sm:$0xff] 0.0
        %731 = vst [vmem:[#allocation5 + $0x28] sm:$0xff] 0.0
        %732 = vst [vmem:[#allocation5 + $0x30] sm:$0xff] 0.0
        %733 = vst [vmem:[#allocation5 + $0x38] sm:$0xff] 0.0
        %734 = vst [vmem:[#allocation5 + $0x40] sm:$0xff] 0.0
        %735 = vst [vmem:[#allocation5 + $0x48] sm:$0xff] 0.0
        %736 = vst [vmem:[#allocation5 + $0x50] sm:$0xff] 0.0
        %737 = vst [vmem:[#allocation5 + $0x58] sm:$0xff] 0.0
        %738 = vst [vmem:[#allocation5 + $0x60] sm:$0xff] 0.0
        %739 = vst [vmem:[#allocation5 + $0x68] sm:$0xff] 0.0
        %740 = vst [vmem:[#allocation5 + $0x70] sm:$0xff] 0.0
        %741 = vst [vmem:[#allocation5 + $0x78] sm:$0xff] 0.0
        %742 = vst [vmem:[#allocation5 + $0x80] sm:$0xff] 0.0
        %743 = vst [vmem:[#allocation5 + $0x88] sm:$0xff] 0.0
        %744 = vst [vmem:[#allocation5 + $0x90] sm:$0xff] 0.0
        %745 = vst [vmem:[#allocation5 + $0x98] sm:$0xff] 0.0
        %746 = vst [vmem:[#allocation5 + $0xa0] sm:$0xff] 0.0
        %747 = vst [vmem:[#allocation5 + $0xa8] sm:$0xff] 0.0
        %748 = vst [vmem:[#allocation5 + $0xb0] sm:$0xff] 0.0
        %749 = vst [vmem:[#allocation5 + $0xb8] sm:$0xff] 0.0
        %750 = vst [vmem:[#allocation5 + $0xc0] sm:$0xff] 0.0
        %751 = vst [vmem:[#allocation5 + $0xc8] sm:$0xff] 0.0
        %752 = vst [vmem:[#allocation5 + $0xd0] sm:$0xff] 0.0
        %753 = vst [vmem:[#allocation5 + $0xd8] sm:$0xff] 0.0
        %754 = vst [vmem:[#allocation5 + $0xe0] sm:$0xff] 0.0
        %755 = vst [vmem:[#allocation5 + $0xe8] sm:$0xff] 0.0
        %756 = vst [vmem:[#allocation5 + $0xf0] sm:$0xff] 0.0
        %757 = vst [vmem:[#allocation5 + $0xf8] sm:$0xff] 0.0
      $region56: #{nonlocal_block_forward.1} parent=51 // pred_fallthru
        _
      %v758 = vld [vmem:[%s376] sm:$0xff]
      %v759 = vld [vmem:[%s376 + $0x8] sm:$0xff]
      %v760 = vld [vmem:[%s376 + $0x10] sm:$0xff]
      %v761 = vld [vmem:[%s376 + $0x18] sm:$0xff]
      %v762 = vld [vmem:[%s376 + $0x20] sm:$0xff]
      %v763 = vld [vmem:[%s376 + $0x28] sm:$0xff]
      %v764 = vld [vmem:[%s376 + $0x30] sm:$0xff]
      %v765 = vld [vmem:[%s376 + $0x38] sm:$0xff]
      %v766 = vld [vmem:[%s376 + $0x40] sm:$0xff]
      %v767 = vld [vmem:[%s376 + $0x48] sm:$0xff]
      %v768 = vld [vmem:[%s376 + $0x50] sm:$0xff]
      %v769 = vld [vmem:[%s376 + $0x58] sm:$0xff]
      %v770 = vld [vmem:[%s376 + $0x60] sm:$0xff]
      %v771 = vld [vmem:[%s376 + $0x68] sm:$0xff]
      %v772 = vld [vmem:[%s376 + $0x70] sm:$0xff]
      %v773 = vld [vmem:[%s376 + $0x78] sm:$0xff]
      %v774 = vld [vmem:[%s376 + $0x80] sm:$0xff]
      %v775 = vld [vmem:[%s376 + $0x88] sm:$0xff]
      %v776 = vld [vmem:[%s376 + $0x90] sm:$0xff]
      %v777 = vld [vmem:[%s376 + $0x98] sm:$0xff]
      %v778 = vld [vmem:[%s376 + $0xa0] sm:$0xff]
      %v779 = vld [vmem:[%s376 + $0xa8] sm:$0xff]
      %v780 = vld [vmem:[%s376 + $0xb0] sm:$0xff]
      %v781 = vld [vmem:[%s376 + $0xb8] sm:$0xff]
      %v782 = vld [vmem:[%s376 + $0xc0] sm:$0xff]
      %v783 = vld [vmem:[%s376 + $0xc8] sm:$0xff]
      %v784 = vld [vmem:[%s376 + $0xd0] sm:$0xff]
      %v785 = vld [vmem:[%s376 + $0xd8] sm:$0xff]
      %v786 = vld [vmem:[%s376 + $0xe0] sm:$0xff]
      %v787 = vld [vmem:[%s376 + $0xe8] sm:$0xff]
      %v788 = vld [vmem:[%s376 + $0xf0] sm:$0xff]
      %v789 = vld [vmem:[%s376 + $0xf8] sm:$0xff]
      %v790 = vpack.c.bf16 %v759, %v758
      %v791 = vpack.c.bf16 %v761, %v760
      %v792 = vpack.c.bf16 %v763, %v762
      %v793 = vpack.c.bf16 %v765, %v764
      %v794 = vpack.c.bf16 %v767, %v766
      %v795 = vpack.c.bf16 %v769, %v768
      %v796 = vpack.c.bf16 %v771, %v770
      %v797 = vpack.c.bf16 %v773, %v772
      %v798 = vpack.c.bf16 %v775, %v774
      %v799 = vpack.c.bf16 %v777, %v776
      %v800 = vpack.c.bf16 %v779, %v778
      %v801 = vpack.c.bf16 %v781, %v780
      %v802 = vpack.c.bf16 %v783, %v782
      %v803 = vpack.c.bf16 %v785, %v784
      %v804 = vpack.c.bf16 %v787, %v786
      %v805 = vpack.c.bf16 %v789, %v788
      %v806 = vld [vmem:[%s4] sm:$0xff]
      %v807 = vld [vmem:[%s4 + $0x8] sm:$0xff]
      %v808 = vld [vmem:[%s4 + $0x10] sm:$0xff]
      %v809 = vld [vmem:[%s4 + $0x18] sm:$0xff]
      %v810 = vld [vmem:[%s4 + $0x20] sm:$0xff]
      %v811 = vld [vmem:[%s4 + $0x28] sm:$0xff]
      %v812 = vld [vmem:[%s4 + $0x30] sm:$0xff]
      %v813 = vld [vmem:[%s4 + $0x38] sm:$0xff]
      %v814 = vld [vmem:[%s4 + $0x40] sm:$0xff]
      %v815 = vld [vmem:[%s4 + $0x48] sm:$0xff]
      %v816 = vld [vmem:[%s4 + $0x50] sm:$0xff]
      %v817 = vld [vmem:[%s4 + $0x58] sm:$0xff]
      %v818 = vld [vmem:[%s4 + $0x60] sm:$0xff]
      %v819 = vld [vmem:[%s4 + $0x68] sm:$0xff]
      %v820 = vld [vmem:[%s4 + $0x70] sm:$0xff]
      %v821 = vld [vmem:[%s4 + $0x78] sm:$0xff]
      %v822 = vld [vmem:[%s5] sm:$0x3]
      %v824 = vperm.slane %v822, 0
      %v825 = vperm.slane %v822, 1
      %v844 = vunpack.c.l.b16 %v806
      %v845 = vunpack.c.h.b16 %v806
      %v846 = vunpack.c.l.b16 %v807
      %v847 = vunpack.c.h.b16 %v807
      %v848 = vunpack.c.l.b16 %v808
      %v849 = vunpack.c.h.b16 %v808
      %v850 = vunpack.c.l.b16 %v809
      %v851 = vunpack.c.h.b16 %v809
      %v852 = vunpack.c.l.b16 %v810
      %v853 = vunpack.c.h.b16 %v810
      %v854 = vunpack.c.l.b16 %v811
      %v855 = vunpack.c.h.b16 %v811
      %v856 = vunpack.c.l.b16 %v812
      %v857 = vunpack.c.h.b16 %v812
      %v858 = vunpack.c.l.b16 %v813
      %v859 = vunpack.c.h.b16 %v813
      %v860 = vunpack.c.l.b16 %v814
      %v861 = vunpack.c.h.b16 %v814
      %v862 = vunpack.c.l.b16 %v815
      %v863 = vunpack.c.h.b16 %v815
      %v864 = vunpack.c.l.b16 %v816
      %v865 = vunpack.c.h.b16 %v816
      %v866 = vunpack.c.l.b16 %v817
      %v867 = vunpack.c.h.b16 %v817
      %v868 = vunpack.c.l.b16 %v818
      %v869 = vunpack.c.h.b16 %v818
      %v870 = vunpack.c.l.b16 %v819
      %v871 = vunpack.c.h.b16 %v819
      %v872 = vunpack.c.l.b16 %v820
      %v873 = vunpack.c.h.b16 %v820
      %v874 = vunpack.c.l.b16 %v821
      %v875 = vunpack.c.h.b16 %v821
      %v876 = vpack.c.b16 %v846, %v844
      %v877 = vpack.c.b16 %v847, %v845
      %v878 = vpack.c.b16 %v850, %v848
      %v879 = vpack.c.b16 %v851, %v849
      %v880 = vpack.c.b16 %v854, %v852
      %v881 = vpack.c.b16 %v855, %v853
      %v882 = vpack.c.b16 %v858, %v856
      %v883 = vpack.c.b16 %v859, %v857
      %v884 = vpack.c.b16 %v862, %v860
      %v885 = vpack.c.b16 %v863, %v861
      %v886 = vpack.c.b16 %v866, %v864
      %v887 = vpack.c.b16 %v867, %v865
      %v888 = vpack.c.b16 %v870, %v868
      %v889 = vpack.c.b16 %v871, %v869
      %v890 = vpack.c.b16 %v874, %v872
      %v891 = vpack.c.b16 %v875, %v873
      %908 = vmatpush.bf16.msra.mxu0 %v890
      %909 = vmatpush.bf16.msra.mxu0 %v888
      %910 = vmatpush.bf16.msra.mxu0 %v886
      %911 = vmatpush.bf16.msra.mxu0 %v884
      %912 = vmatpush.bf16.msra.mxu0 %v882
      %913 = vmatpush.bf16.msra.mxu0 %v880
      %914 = vmatpush.bf16.msra.mxu0 %v878
      %915 = vmatpush.bf16.msra.mxu0 %v876
      %916 = vmatmul.bf16.gmra.mxu0 %v790
      %v917 = vpop.f32.mrf.mxu0
      %v918 = vadd.f32 %v824, %v917
      %v919 = vpop.f32.mrf.mxu0
      %v920 = vadd.f32 %v824, %v919
      %921 = vmatmul.bf16.gmra.mxu0 %v791
      %v922 = vpop.f32.mrf.mxu0
      %v923 = vadd.f32 %v824, %v922
      %v924 = vpop.f32.mrf.mxu0
      %v925 = vadd.f32 %v824, %v924
      %926 = vmatmul.bf16.gmra.mxu0 %v792
      %v927 = vpop.f32.mrf.mxu0
      %v928 = vadd.f32 %v824, %v927
      %v929 = vpop.f32.mrf.mxu0
      %v930 = vadd.f32 %v824, %v929
      %931 = vmatmul.bf16.gmra.mxu0 %v793
      %v932 = vpop.f32.mrf.mxu0
      %v933 = vadd.f32 %v824, %v932
      %v934 = vpop.f32.mrf.mxu0
      %v935 = vadd.f32 %v824, %v934
      %936 = vmatmul.bf16.gmra.mxu0 %v794
      %v937 = vpop.f32.mrf.mxu0
      %v938 = vadd.f32 %v824, %v937
      %v939 = vpop.f32.mrf.mxu0
      %v940 = vadd.f32 %v824, %v939
      %941 = vmatmul.bf16.gmra.mxu0 %v795
      %v942 = vpop.f32.mrf.mxu0
      %v943 = vadd.f32 %v824, %v942
      %v944 = vpop.f32.mrf.mxu0
      %v945 = vadd.f32 %v824, %v944
      %946 = vmatmul.bf16.gmra.mxu0 %v796
      %v947 = vpop.f32.mrf.mxu0
      %v948 = vadd.f32 %v824, %v947
      %v949 = vpop.f32.mrf.mxu0
      %v950 = vadd.f32 %v824, %v949
      %951 = vmatmul.bf16.gmra.mxu0 %v797
      %v952 = vpop.f32.mrf.mxu0
      %v953 = vadd.f32 %v824, %v952
      %v954 = vpop.f32.mrf.mxu0
      %v955 = vadd.f32 %v824, %v954
      %956 = vmatmul.bf16.gmra.mxu0 %v798
      %v957 = vpop.f32.mrf.mxu0
      %v958 = vadd.f32 %v824, %v957
      %v959 = vpop.f32.mrf.mxu0
      %v960 = vadd.f32 %v824, %v959
      %961 = vmatmul.bf16.gmra.mxu0 %v799
      %v962 = vpop.f32.mrf.mxu0
      %v963 = vadd.f32 %v824, %v962
      %v964 = vpop.f32.mrf.mxu0
      %v965 = vadd.f32 %v824, %v964
      %966 = vmatmul.bf16.gmra.mxu0 %v800
      %v967 = vpop.f32.mrf.mxu0
      %v968 = vadd.f32 %v824, %v967
      %v969 = vpop.f32.mrf.mxu0
      %v970 = vadd.f32 %v824, %v969
      %971 = vmatmul.bf16.gmra.mxu0 %v801
      %v972 = vpop.f32.mrf.mxu0
      %v973 = vadd.f32 %v824, %v972
      %v974 = vpop.f32.mrf.mxu0
      %v975 = vadd.f32 %v824, %v974
      %976 = vmatmul.bf16.gmra.mxu0 %v802
      %v977 = vpop.f32.mrf.mxu0
      %v978 = vadd.f32 %v824, %v977
      %v979 = vpop.f32.mrf.mxu0
      %v980 = vadd.f32 %v824, %v979
      %981 = vmatmul.bf16.gmra.mxu0 %v803
      %v982 = vpop.f32.mrf.mxu0
      %v983 = vadd.f32 %v824, %v982
      %v984 = vpop.f32.mrf.mxu0
      %v985 = vadd.f32 %v824, %v984
      %986 = vmatmul.bf16.gmra.mxu0 %v804
      %v987 = vpop.f32.mrf.mxu0
      %v988 = vadd.f32 %v824, %v987
      %v989 = vpop.f32.mrf.mxu0
      %v990 = vadd.f32 %v824, %v989
      %991 = vmatmul.bf16.gmra.mxu0 %v805
      %v992 = vpop.f32.mrf.mxu0
      %v993 = vadd.f32 %v824, %v992
      %v994 = vpop.f32.mrf.mxu0
      %v995 = vadd.f32 %v824, %v994
      %996 = vdwg.mxu0
      %997 = vmatpush.bf16.msra.mxu0 %v891
      %998 = vmatpush.bf16.msra.mxu0 %v889
      %999 = vmatpush.bf16.msra.mxu0 %v887
      %1000 = vmatpush.bf16.msra.mxu0 %v885
      %1001 = vmatpush.bf16.msra.mxu0 %v883
      %1002 = vmatpush.bf16.msra.mxu0 %v881
      %1003 = vmatpush.bf16.msra.mxu0 %v879
      %1004 = vmatpush.bf16.msra.mxu0 %v877
      %1005 = vmatmul.bf16.gmra.mxu0 %v790
      %v1006 = vpop.f32.mrf.mxu0
      %v1007 = vadd.f32 %v825, %v1006
      %v1008 = vpop.f32.mrf.mxu0
      %v1009 = vadd.f32 %v825, %v1008
      %1010 = vmatmul.bf16.gmra.mxu0 %v791
      %v1011 = vpop.f32.mrf.mxu0
      %v1012 = vadd.f32 %v825, %v1011
      %v1013 = vpop.f32.mrf.mxu0
      %v1014 = vadd.f32 %v825, %v1013
      %1015 = vmatmul.bf16.gmra.mxu0 %v792
      %v1016 = vpop.f32.mrf.mxu0
      %v1017 = vadd.f32 %v825, %v1016
      %v1018 = vpop.f32.mrf.mxu0
      %v1019 = vadd.f32 %v825, %v1018
      %1020 = vmatmul.bf16.gmra.mxu0 %v793
      %v1021 = vpop.f32.mrf.mxu0
      %v1022 = vadd.f32 %v825, %v1021
      %v1023 = vpop.f32.mrf.mxu0
      %v1024 = vadd.f32 %v825, %v1023
      %1025 = vmatmul.bf16.gmra.mxu0 %v794
      %v1026 = vpop.f32.mrf.mxu0
      %v1027 = vadd.f32 %v825, %v1026
      %v1028 = vpop.f32.mrf.mxu0
      %v1029 = vadd.f32 %v825, %v1028
      %1030 = vmatmul.bf16.gmra.mxu0 %v795
      %v1031 = vpop.f32.mrf.mxu0
      %v1032 = vadd.f32 %v825, %v1031
      %v1033 = vpop.f32.mrf.mxu0
      %v1034 = vadd.f32 %v825, %v1033
      %1035 = vmatmul.bf16.gmra.mxu0 %v796
      %v1036 = vpop.f32.mrf.mxu0
      %v1037 = vadd.f32 %v825, %v1036
      %v1038 = vpop.f32.mrf.mxu0
      %v1039 = vadd.f32 %v825, %v1038
      %1040 = vmatmul.bf16.gmra.mxu0 %v797
      %v1041 = vpop.f32.mrf.mxu0
      %v1042 = vadd.f32 %v825, %v1041
      %v1043 = vpop.f32.mrf.mxu0
      %v1044 = vadd.f32 %v825, %v1043
      %1045 = vmatmul.bf16.gmra.mxu0 %v798
      %v1046 = vpop.f32.mrf.mxu0
      %v1047 = vadd.f32 %v825, %v1046
      %v1048 = vpop.f32.mrf.mxu0
      %v1049 = vadd.f32 %v825, %v1048
      %1050 = vmatmul.bf16.gmra.mxu0 %v799
      %v1051 = vpop.f32.mrf.mxu0
      %v1052 = vadd.f32 %v825, %v1051
      %v1053 = vpop.f32.mrf.mxu0
      %v1054 = vadd.f32 %v825, %v1053
      %1055 = vmatmul.bf16.gmra.mxu0 %v800
      %v1056 = vpop.f32.mrf.mxu0
      %v1057 = vadd.f32 %v825, %v1056
      %v1058 = vpop.f32.mrf.mxu0
      %v1059 = vadd.f32 %v825, %v1058
      %1060 = vmatmul.bf16.gmra.mxu0 %v801
      %v1061 = vpop.f32.mrf.mxu0
      %v1062 = vadd.f32 %v825, %v1061
      %v1063 = vpop.f32.mrf.mxu0
      %v1064 = vadd.f32 %v825, %v1063
      %1065 = vmatmul.bf16.gmra.mxu0 %v802
      %v1066 = vpop.f32.mrf.mxu0
      %v1067 = vadd.f32 %v825, %v1066
      %v1068 = vpop.f32.mrf.mxu0
      %v1069 = vadd.f32 %v825, %v1068
      %1070 = vmatmul.bf16.gmra.mxu0 %v803
      %v1071 = vpop.f32.mrf.mxu0
      %v1072 = vadd.f32 %v825, %v1071
      %v1073 = vpop.f32.mrf.mxu0
      %v1074 = vadd.f32 %v825, %v1073
      %1075 = vmatmul.bf16.gmra.mxu0 %v804
      %v1076 = vpop.f32.mrf.mxu0
      %v1077 = vadd.f32 %v825, %v1076
      %v1078 = vpop.f32.mrf.mxu0
      %v1079 = vadd.f32 %v825, %v1078
      %1080 = vmatmul.bf16.gmra.mxu0 %v805
      %v1081 = vpop.f32.mrf.mxu0
      %v1082 = vadd.f32 %v825, %v1081
      %v1083 = vpop.f32.mrf.mxu0
      %v1084 = vadd.f32 %v825, %v1083
      %1085 = vdwg.mxu0
      %v1086 = vpack.c.bf16 %v920, %v918
      %v1087 = vpack.c.bf16 %v925, %v923
      %v1088 = vpack.c.bf16 %v930, %v928
      %v1089 = vpack.c.bf16 %v935, %v933
      %v1090 = vpack.c.bf16 %v940, %v938
      %v1091 = vpack.c.bf16 %v945, %v943
      %v1092 = vpack.c.bf16 %v950, %v948
      %v1093 = vpack.c.bf16 %v955, %v953
      %v1094 = vpack.c.bf16 %v960, %v958
      %v1095 = vpack.c.bf16 %v965, %v963
      %v1096 = vpack.c.bf16 %v970, %v968
      %v1097 = vpack.c.bf16 %v975, %v973
      %v1098 = vpack.c.bf16 %v980, %v978
      %v1099 = vpack.c.bf16 %v985, %v983
      %v1100 = vpack.c.bf16 %v990, %v988
      %v1101 = vpack.c.bf16 %v995, %v993
      %v1102 = vpack.c.bf16 %v1009, %v1007
      %v1103 = vpack.c.bf16 %v1014, %v1012
      %v1104 = vpack.c.bf16 %v1019, %v1017
      %v1105 = vpack.c.bf16 %v1024, %v1022
      %v1106 = vpack.c.bf16 %v1029, %v1027
      %v1107 = vpack.c.bf16 %v1034, %v1032
      %v1108 = vpack.c.bf16 %v1039, %v1037
      %v1109 = vpack.c.bf16 %v1044, %v1042
      %v1110 = vpack.c.bf16 %v1049, %v1047
      %v1111 = vpack.c.bf16 %v1054, %v1052
      %v1112 = vpack.c.bf16 %v1059, %v1057
      %v1113 = vpack.c.bf16 %v1064, %v1062
      %v1114 = vpack.c.bf16 %v1069, %v1067
      %v1115 = vpack.c.bf16 %v1074, %v1072
      %v1116 = vpack.c.bf16 %v1079, %v1077
      %v1117 = vpack.c.bf16 %v1084, %v1082
      %v1118 = vld [vmem:[#allocation2] sm:$0xf]
      %v1119 = vld [vmem:[#allocation2 + $0x4] sm:$0xf]
      %v1120 = vld [vmem:[#allocation2 + $0x8] sm:$0xf]
      %v1121 = vld [vmem:[#allocation2 + $0xc] sm:$0xf]
      %v1122 = vld [vmem:[#allocation2 + $0x10] sm:$0xf]
      %v1123 = vld [vmem:[#allocation2 + $0x14] sm:$0xf]
      %v1124 = vld [vmem:[#allocation2 + $0x18] sm:$0xf]
      %v1125 = vld [vmem:[#allocation2 + $0x1c] sm:$0xf]
      %v1126 = vld [vmem:[#allocation2 + $0x20] sm:$0xf]
      %v1127 = vld [vmem:[#allocation2 + $0x24] sm:$0xf]
      %v1128 = vld [vmem:[#allocation2 + $0x28] sm:$0xf]
      %v1129 = vld [vmem:[#allocation2 + $0x2c] sm:$0xf]
      %v1130 = vld [vmem:[#allocation2 + $0x30] sm:$0xf]
      %v1131 = vld [vmem:[#allocation2 + $0x34] sm:$0xf]
      %v1132 = vld [vmem:[#allocation2 + $0x38] sm:$0xf]
      %v1133 = vld [vmem:[#allocation2 + $0x3c] sm:$0xf]
      %v1134 = vld [vmem:[#allocation2 + $0x40] sm:$0xf]
      %v1135 = vld [vmem:[#allocation2 + $0x44] sm:$0xf]
      %v1136 = vld [vmem:[#allocation2 + $0x48] sm:$0xf]
      %v1137 = vld [vmem:[#allocation2 + $0x4c] sm:$0xf]
      %v1138 = vld [vmem:[#allocation2 + $0x50] sm:$0xf]
      %v1139 = vld [vmem:[#allocation2 + $0x54] sm:$0xf]
      %v1140 = vld [vmem:[#allocation2 + $0x58] sm:$0xf]
      %v1141 = vld [vmem:[#allocation2 + $0x5c] sm:$0xf]
      %v1142 = vld [vmem:[#allocation2 + $0x60] sm:$0xf]
      %v1143 = vld [vmem:[#allocation2 + $0x64] sm:$0xf]
      %v1144 = vld [vmem:[#allocation2 + $0x68] sm:$0xf]
      %v1145 = vld [vmem:[#allocation2 + $0x6c] sm:$0xf]
      %v1146 = vld [vmem:[#allocation2 + $0x70] sm:$0xf]
      %v1147 = vld [vmem:[#allocation2 + $0x74] sm:$0xf]
      %v1148 = vld [vmem:[#allocation2 + $0x78] sm:$0xf]
      %v1149 = vld [vmem:[#allocation2 + $0x7c] sm:$0xf]
      %v1182 = vunpack.c.l.b16 %v1118
      %v1183 = vunpack.c.l.b16 %v1119
      %v1184 = vunpack.c.l.b16 %v1120
      %v1185 = vunpack.c.l.b16 %v1121
      %v1186 = vunpack.c.l.b16 %v1122
      %v1187 = vunpack.c.l.b16 %v1123
      %v1188 = vunpack.c.l.b16 %v1124
      %v1189 = vunpack.c.l.b16 %v1125
      %v1190 = vunpack.c.l.b16 %v1126
      %v1191 = vunpack.c.l.b16 %v1127
      %v1192 = vunpack.c.l.b16 %v1128
      %v1193 = vunpack.c.l.b16 %v1129
      %v1194 = vunpack.c.l.b16 %v1130
      %v1195 = vunpack.c.l.b16 %v1131
      %v1196 = vunpack.c.l.b16 %v1132
      %v1197 = vunpack.c.l.b16 %v1133
      %v1198 = vunpack.c.l.b16 %v1134
      %v1199 = vunpack.c.l.b16 %v1135
      %v1200 = vunpack.c.l.b16 %v1136
      %v1201 = vunpack.c.l.b16 %v1137
      %v1202 = vunpack.c.l.b16 %v1138
      %v1203 = vunpack.c.l.b16 %v1139
      %v1204 = vunpack.c.l.b16 %v1140
      %v1205 = vunpack.c.l.b16 %v1141
      %v1206 = vunpack.c.l.b16 %v1142
      %v1207 = vunpack.c.l.b16 %v1143
      %v1208 = vunpack.c.l.b16 %v1144
      %v1209 = vunpack.c.l.b16 %v1145
      %v1210 = vunpack.c.l.b16 %v1146
      %v1211 = vunpack.c.l.b16 %v1147
      %v1212 = vunpack.c.l.b16 %v1148
      %v1213 = vunpack.c.l.b16 %v1149
      %v1214 = vpack.c.b16 %v1183, %v1182
      %v1215 = vpack.c.b16 %v1185, %v1184
      %v1216 = vpack.c.b16 %v1187, %v1186
      %v1217 = vpack.c.b16 %v1189, %v1188
      %v1218 = vpack.c.b16 %v1191, %v1190
      %v1219 = vpack.c.b16 %v1193, %v1192
      %v1220 = vpack.c.b16 %v1195, %v1194
      %v1221 = vpack.c.b16 %v1197, %v1196
      %v1222 = vpack.c.b16 %v1199, %v1198
      %v1223 = vpack.c.b16 %v1201, %v1200
      %v1224 = vpack.c.b16 %v1203, %v1202
      %v1225 = vpack.c.b16 %v1205, %v1204
      %v1226 = vpack.c.b16 %v1207, %v1206
      %v1227 = vpack.c.b16 %v1209, %v1208
      %v1228 = vpack.c.b16 %v1211, %v1210
      %v1229 = vpack.c.b16 %v1213, %v1212
      %1246 = vmatpush.bf16.xpose.msra.mxu0 %v1093
      %1247 = vmatpush.bf16.xpose.msra.mxu0 %v1092
      %1248 = vmatpush.bf16.xpose.msra.mxu0 %v1091
      %1249 = vmatpush.bf16.xpose.msra.mxu0 %v1090
      %1250 = vmatpush.bf16.xpose.msra.mxu0 %v1089
      %1251 = vmatpush.bf16.xpose.msra.mxu0 %v1088
      %1252 = vmatpush.bf16.xpose.msra.mxu0 %v1087
      %1253 = vmatpush.bf16.xpose.msra.mxu0 %v1086
      %1254 = vmatmul.bf16.gmra.mxu0 %v1214
      %v1255 = vpop.f32.mrf.mxu0
      %v1256 = vadd.f32 0.0, %v1255
      %v1257 = vpop.f32.mrf.mxu0
      %v1258 = vadd.f32 0.0, %v1257
      %1259 = vmatmul.bf16.gmra.mxu0 %v1215
      %v1260 = vpop.f32.mrf.mxu0
      %v1261 = vadd.f32 0.0, %v1260
      %v1262 = vpop.f32.mrf.mxu0
      %v1263 = vadd.f32 0.0, %v1262
      %1264 = vmatmul.bf16.gmra.mxu0 %v1216
      %v1265 = vpop.f32.mrf.mxu0
      %v1266 = vadd.f32 0.0, %v1265
      %v1267 = vpop.f32.mrf.mxu0
      %v1268 = vadd.f32 0.0, %v1267
      %1269 = vmatmul.bf16.gmra.mxu0 %v1217
      %v1270 = vpop.f32.mrf.mxu0
      %v1271 = vadd.f32 0.0, %v1270
      %v1272 = vpop.f32.mrf.mxu0
      %v1273 = vadd.f32 0.0, %v1272
      %1274 = vmatmul.bf16.gmra.mxu0 %v1218
      %v1275 = vpop.f32.mrf.mxu0
      %v1276 = vadd.f32 0.0, %v1275
      %v1277 = vpop.f32.mrf.mxu0
      %v1278 = vadd.f32 0.0, %v1277
      %1279 = vmatmul.bf16.gmra.mxu0 %v1219
      %v1280 = vpop.f32.mrf.mxu0
      %v1281 = vadd.f32 0.0, %v1280
      %v1282 = vpop.f32.mrf.mxu0
      %v1283 = vadd.f32 0.0, %v1282
      %1284 = vmatmul.bf16.gmra.mxu0 %v1220
      %v1285 = vpop.f32.mrf.mxu0
      %v1286 = vadd.f32 0.0, %v1285
      %v1287 = vpop.f32.mrf.mxu0
      %v1288 = vadd.f32 0.0, %v1287
      %1289 = vmatmul.bf16.gmra.mxu0 %v1221
      %v1290 = vpop.f32.mrf.mxu0
      %v1291 = vadd.f32 0.0, %v1290
      %v1292 = vpop.f32.mrf.mxu0
      %v1293 = vadd.f32 0.0, %v1292
      %1294 = vmatmul.bf16.gmra.mxu0 %v1222
      %v1295 = vpop.f32.mrf.mxu0
      %v1296 = vadd.f32 0.0, %v1295
      %v1297 = vpop.f32.mrf.mxu0
      %v1298 = vadd.f32 0.0, %v1297
      %1299 = vmatmul.bf16.gmra.mxu0 %v1223
      %v1300 = vpop.f32.mrf.mxu0
      %v1301 = vadd.f32 0.0, %v1300
      %v1302 = vpop.f32.mrf.mxu0
      %v1303 = vadd.f32 0.0, %v1302
      %1304 = vmatmul.bf16.gmra.mxu0 %v1224
      %v1305 = vpop.f32.mrf.mxu0
      %v1306 = vadd.f32 0.0, %v1305
      %v1307 = vpop.f32.mrf.mxu0
      %v1308 = vadd.f32 0.0, %v1307
      %1309 = vmatmul.bf16.gmra.mxu0 %v1225
      %v1310 = vpop.f32.mrf.mxu0
      %v1311 = vadd.f32 0.0, %v1310
      %v1312 = vpop.f32.mrf.mxu0
      %v1313 = vadd.f32 0.0, %v1312
      %1314 = vmatmul.bf16.gmra.mxu0 %v1226
      %v1315 = vpop.f32.mrf.mxu0
      %v1316 = vadd.f32 0.0, %v1315
      %v1317 = vpop.f32.mrf.mxu0
      %v1318 = vadd.f32 0.0, %v1317
      %1319 = vmatmul.bf16.gmra.mxu0 %v1227
      %v1320 = vpop.f32.mrf.mxu0
      %v1321 = vadd.f32 0.0, %v1320
      %v1322 = vpop.f32.mrf.mxu0
      %v1323 = vadd.f32 0.0, %v1322
      %1324 = vmatmul.bf16.gmra.mxu0 %v1228
      %v1325 = vpop.f32.mrf.mxu0
      %v1326 = vadd.f32 0.0, %v1325
      %v1327 = vpop.f32.mrf.mxu0
      %v1328 = vadd.f32 0.0, %v1327
      %1329 = vmatmul.bf16.gmra.mxu0 %v1229
      %v1330 = vpop.f32.mrf.mxu0
      %v1331 = vadd.f32 0.0, %v1330
      %v1332 = vpop.f32.mrf.mxu0
      %v1333 = vadd.f32 0.0, %v1332
      %1334 = vdwg.mxu0
      %1335 = vmatpush.bf16.xpose.msra.mxu0 %v1101
      %1336 = vmatpush.bf16.xpose.msra.mxu0 %v1100
      %1337 = vmatpush.bf16.xpose.msra.mxu0 %v1099
      %1338 = vmatpush.bf16.xpose.msra.mxu0 %v1098
      %1339 = vmatpush.bf16.xpose.msra.mxu0 %v1097
      %1340 = vmatpush.bf16.xpose.msra.mxu0 %v1096
      %1341 = vmatpush.bf16.xpose.msra.mxu0 %v1095
      %1342 = vmatpush.bf16.xpose.msra.mxu0 %v1094
      %1343 = vmatmul.bf16.gmra.mxu0 %v1214
      %v1344 = vpop.f32.mrf.mxu0
      %v1345 = vadd.f32 0.0, %v1344
      %v1346 = vpop.f32.mrf.mxu0
      %v1347 = vadd.f32 0.0, %v1346
      %1348 = vmatmul.bf16.gmra.mxu0 %v1215
      %v1349 = vpop.f32.mrf.mxu0
      %v1350 = vadd.f32 0.0, %v1349
      %v1351 = vpop.f32.mrf.mxu0
      %v1352 = vadd.f32 0.0, %v1351
      %1353 = vmatmul.bf16.gmra.mxu0 %v1216
      %v1354 = vpop.f32.mrf.mxu0
      %v1355 = vadd.f32 0.0, %v1354
      %v1356 = vpop.f32.mrf.mxu0
      %v1357 = vadd.f32 0.0, %v1356
      %1358 = vmatmul.bf16.gmra.mxu0 %v1217
      %v1359 = vpop.f32.mrf.mxu0
      %v1360 = vadd.f32 0.0, %v1359
      %v1361 = vpop.f32.mrf.mxu0
      %v1362 = vadd.f32 0.0, %v1361
      %1363 = vmatmul.bf16.gmra.mxu0 %v1218
      %v1364 = vpop.f32.mrf.mxu0
      %v1365 = vadd.f32 0.0, %v1364
      %v1366 = vpop.f32.mrf.mxu0
      %v1367 = vadd.f32 0.0, %v1366
      %1368 = vmatmul.bf16.gmra.mxu0 %v1219
      %v1369 = vpop.f32.mrf.mxu0
      %v1370 = vadd.f32 0.0, %v1369
      %v1371 = vpop.f32.mrf.mxu0
      %v1372 = vadd.f32 0.0, %v1371
      %1373 = vmatmul.bf16.gmra.mxu0 %v1220
      %v1374 = vpop.f32.mrf.mxu0
      %v1375 = vadd.f32 0.0, %v1374
      %v1376 = vpop.f32.mrf.mxu0
      %v1377 = vadd.f32 0.0, %v1376
      %1378 = vmatmul.bf16.gmra.mxu0 %v1221
      %v1379 = vpop.f32.mrf.mxu0
      %v1380 = vadd.f32 0.0, %v1379
      %v1381 = vpop.f32.mrf.mxu0
      %v1382 = vadd.f32 0.0, %v1381
      %1383 = vmatmul.bf16.gmra.mxu0 %v1222
      %v1384 = vpop.f32.mrf.mxu0
      %v1385 = vadd.f32 0.0, %v1384
      %v1386 = vpop.f32.mrf.mxu0
      %v1387 = vadd.f32 0.0, %v1386
      %1388 = vmatmul.bf16.gmra.mxu0 %v1223
      %v1389 = vpop.f32.mrf.mxu0
      %v1390 = vadd.f32 0.0, %v1389
      %v1391 = vpop.f32.mrf.mxu0
      %v1392 = vadd.f32 0.0, %v1391
      %1393 = vmatmul.bf16.gmra.mxu0 %v1224
      %v1394 = vpop.f32.mrf.mxu0
      %v1395 = vadd.f32 0.0, %v1394
      %v1396 = vpop.f32.mrf.mxu0
      %v1397 = vadd.f32 0.0, %v1396
      %1398 = vmatmul.bf16.gmra.mxu0 %v1225
      %v1399 = vpop.f32.mrf.mxu0
      %v1400 = vadd.f32 0.0, %v1399
      %v1401 = vpop.f32.mrf.mxu0
      %v1402 = vadd.f32 0.0, %v1401
      %1403 = vmatmul.bf16.gmra.mxu0 %v1226
      %v1404 = vpop.f32.mrf.mxu0
      %v1405 = vadd.f32 0.0, %v1404
      %v1406 = vpop.f32.mrf.mxu0
      %v1407 = vadd.f32 0.0, %v1406
      %1408 = vmatmul.bf16.gmra.mxu0 %v1227
      %v1409 = vpop.f32.mrf.mxu0
      %v1410 = vadd.f32 0.0, %v1409
      %v1411 = vpop.f32.mrf.mxu0
      %v1412 = vadd.f32 0.0, %v1411
      %1413 = vmatmul.bf16.gmra.mxu0 %v1228
      %v1414 = vpop.f32.mrf.mxu0
      %v1415 = vadd.f32 0.0, %v1414
      %v1416 = vpop.f32.mrf.mxu0
      %v1417 = vadd.f32 0.0, %v1416
      %1418 = vmatmul.bf16.gmra.mxu0 %v1229
      %v1419 = vpop.f32.mrf.mxu0
      %v1420 = vadd.f32 0.0, %v1419
      %v1421 = vpop.f32.mrf.mxu0
      %v1422 = vadd.f32 0.0, %v1421
      %1423 = vdwg.mxu0
      %v1424 = vld [vmem:[#allocation3] sm:$0xff]
      %v1425 = vld [vmem:[#allocation3 + $0x8] sm:$0xff]
      %v1426 = vld [vmem:[#allocation3 + $0x10] sm:$0xff]
      %v1427 = vld [vmem:[#allocation3 + $0x18] sm:$0xff]
      %v1428 = vld [vmem:[#allocation3 + $0x20] sm:$0xff]
      %v1429 = vld [vmem:[#allocation3 + $0x28] sm:$0xff]
      %v1430 = vld [vmem:[#allocation3 + $0x30] sm:$0xff]
      %v1431 = vld [vmem:[#allocation3 + $0x38] sm:$0xff]
      %v1432 = vld [vmem:[#allocation3 + $0x40] sm:$0xff]
      %v1433 = vld [vmem:[#allocation3 + $0x48] sm:$0xff]
      %v1434 = vld [vmem:[#allocation3 + $0x50] sm:$0xff]
      %v1435 = vld [vmem:[#allocation3 + $0x58] sm:$0xff]
      %v1436 = vld [vmem:[#allocation3 + $0x60] sm:$0xff]
      %v1437 = vld [vmem:[#allocation3 + $0x68] sm:$0xff]
      %v1438 = vld [vmem:[#allocation3 + $0x70] sm:$0xff]
      %v1439 = vld [vmem:[#allocation3 + $0x78] sm:$0xff]
      %v1440 = vld [vmem:[#allocation3 + $0x80] sm:$0xff]
      %v1441 = vld [vmem:[#allocation3 + $0x88] sm:$0xff]
      %v1442 = vld [vmem:[#allocation3 + $0x90] sm:$0xff]
      %v1443 = vld [vmem:[#allocation3 + $0x98] sm:$0xff]
      %v1444 = vld [vmem:[#allocation3 + $0xa0] sm:$0xff]
      %v1445 = vld [vmem:[#allocation3 + $0xa8] sm:$0xff]
      %v1446 = vld [vmem:[#allocation3 + $0xb0] sm:$0xff]
      %v1447 = vld [vmem:[#allocation3 + $0xb8] sm:$0xff]
      %v1448 = vld [vmem:[#allocation3 + $0xc0] sm:$0xff]
      %v1449 = vld [vmem:[#allocation3 + $0xc8] sm:$0xff]
      %v1450 = vld [vmem:[#allocation3 + $0xd0] sm:$0xff]
      %v1451 = vld [vmem:[#allocation3 + $0xd8] sm:$0xff]
      %v1452 = vld [vmem:[#allocation3 + $0xe0] sm:$0xff]
      %v1453 = vld [vmem:[#allocation3 + $0xe8] sm:$0xff]
      %v1454 = vld [vmem:[#allocation3 + $0xf0] sm:$0xff]
      %v1455 = vld [vmem:[#allocation3 + $0xf8] sm:$0xff]
      %v1456 = vmax.f32 %v1256, %v1345
      %1457 = vmax.xlane.f32.xlu0 %v1456
      %v1458 = vpop.xlane.xlu0 %1457
      %v1459 = vmax.f32 %v1258, %v1347
      %1460 = vmax.xlane.f32.xlu0 %v1459
      %v1461 = vpop.xlane.xlu0 %1460
      %v1462 = vmax.f32 %v1261, %v1350
      %1463 = vmax.xlane.f32.xlu0 %v1462
      %v1464 = vpop.xlane.xlu0 %1463
      %v1465 = vmax.f32 %v1263, %v1352
      %1466 = vmax.xlane.f32.xlu0 %v1465
      %v1467 = vpop.xlane.xlu0 %1466
      %v1468 = vmax.f32 %v1266, %v1355
      %1469 = vmax.xlane.f32.xlu0 %v1468
      %v1470 = vpop.xlane.xlu0 %1469
      %v1471 = vmax.f32 %v1268, %v1357
      %1472 = vmax.xlane.f32.xlu0 %v1471
      %v1473 = vpop.xlane.xlu0 %1472
      %v1474 = vmax.f32 %v1271, %v1360
      %1475 = vmax.xlane.f32.xlu0 %v1474
      %v1476 = vpop.xlane.xlu0 %1475
      %v1477 = vmax.f32 %v1273, %v1362
      %1478 = vmax.xlane.f32.xlu0 %v1477
      %v1479 = vpop.xlane.xlu0 %1478
      %v1480 = vmax.f32 %v1276, %v1365
      %1481 = vmax.xlane.f32.xlu0 %v1480
      %v1482 = vpop.xlane.xlu0 %1481
      %v1483 = vmax.f32 %v1278, %v1367
      %1484 = vmax.xlane.f32.xlu0 %v1483
      %v1485 = vpop.xlane.xlu0 %1484
      %v1486 = vmax.f32 %v1281, %v1370
      %1487 = vmax.xlane.f32.xlu0 %v1486
      %v1488 = vpop.xlane.xlu0 %1487
      %v1489 = vmax.f32 %v1283, %v1372
      %1490 = vmax.xlane.f32.xlu0 %v1489
      %v1491 = vpop.xlane.xlu0 %1490
      %v1492 = vmax.f32 %v1286, %v1375
      %1493 = vmax.xlane.f32.xlu0 %v1492
      %v1494 = vpop.xlane.xlu0 %1493
      %v1495 = vmax.f32 %v1288, %v1377
      %1496 = vmax.xlane.f32.xlu0 %v1495
      %v1497 = vpop.xlane.xlu0 %1496
      %v1498 = vmax.f32 %v1291, %v1380
      %1499 = vmax.xlane.f32.xlu0 %v1498
      %v1500 = vpop.xlane.xlu0 %1499
      %v1501 = vmax.f32 %v1293, %v1382
      %1502 = vmax.xlane.f32.xlu0 %v1501
      %v1503 = vpop.xlane.xlu0 %1502
      %v1504 = vmax.f32 %v1296, %v1385
      %1505 = vmax.xlane.f32.xlu0 %v1504
      %v1506 = vpop.xlane.xlu0 %1505
      %v1507 = vmax.f32 %v1298, %v1387
      %1508 = vmax.xlane.f32.xlu0 %v1507
      %v1509 = vpop.xlane.xlu0 %1508
      %v1510 = vmax.f32 %v1301, %v1390
      %1511 = vmax.xlane.f32.xlu0 %v1510
      %v1512 = vpop.xlane.xlu0 %1511
      %v1513 = vmax.f32 %v1303, %v1392
      %1514 = vmax.xlane.f32.xlu0 %v1513
      %v1515 = vpop.xlane.xlu0 %1514
      %v1516 = vmax.f32 %v1306, %v1395
      %1517 = vmax.xlane.f32.xlu0 %v1516
      %v1518 = vpop.xlane.xlu0 %1517
      %v1519 = vmax.f32 %v1308, %v1397
      %1520 = vmax.xlane.f32.xlu0 %v1519
      %v1521 = vpop.xlane.xlu0 %1520
      %v1522 = vmax.f32 %v1311, %v1400
      %1523 = vmax.xlane.f32.xlu0 %v1522
      %v1524 = vpop.xlane.xlu0 %1523
      %v1525 = vmax.f32 %v1313, %v1402
      %1526 = vmax.xlane.f32.xlu0 %v1525
      %v1527 = vpop.xlane.xlu0 %1526
      %v1528 = vmax.f32 %v1316, %v1405
      %1529 = vmax.xlane.f32.xlu0 %v1528
      %v1530 = vpop.xlane.xlu0 %1529
      %v1531 = vmax.f32 %v1318, %v1407
      %1532 = vmax.xlane.f32.xlu0 %v1531
      %v1533 = vpop.xlane.xlu0 %1532
      %v1534 = vmax.f32 %v1321, %v1410
      %1535 = vmax.xlane.f32.xlu0 %v1534
      %v1536 = vpop.xlane.xlu0 %1535
      %v1537 = vmax.f32 %v1323, %v1412
      %1538 = vmax.xlane.f32.xlu0 %v1537
      %v1539 = vpop.xlane.xlu0 %1538
      %v1540 = vmax.f32 %v1326, %v1415
      %1541 = vmax.xlane.f32.xlu0 %v1540
      %v1542 = vpop.xlane.xlu0 %1541
      %v1543 = vmax.f32 %v1328, %v1417
      %1544 = vmax.xlane.f32.xlu0 %v1543
      %v1545 = vpop.xlane.xlu0 %1544
      %v1546 = vmax.f32 %v1331, %v1420
      %1547 = vmax.xlane.f32.xlu0 %v1546
      %v1548 = vpop.xlane.xlu0 %1547
      %v1549 = vmax.f32 %v1333, %v1422
      %1550 = vmax.xlane.f32.xlu0 %v1549
      %v1551 = vpop.xlane.xlu0 %1550
      %v1552 = vmax.f32 %v1424, %v1458
      %v1553 = vmax.f32 %v1425, %v1461
      %v1554 = vmax.f32 %v1426, %v1464
      %v1555 = vmax.f32 %v1427, %v1467
      %v1556 = vmax.f32 %v1428, %v1470
      %v1557 = vmax.f32 %v1429, %v1473
      %v1558 = vmax.f32 %v1430, %v1476
      %v1559 = vmax.f32 %v1431, %v1479
      %v1560 = vmax.f32 %v1432, %v1482
      %v1561 = vmax.f32 %v1433, %v1485
      %v1562 = vmax.f32 %v1434, %v1488
      %v1563 = vmax.f32 %v1435, %v1491
      %v1564 = vmax.f32 %v1436, %v1494
      %v1565 = vmax.f32 %v1437, %v1497
      %v1566 = vmax.f32 %v1438, %v1500
      %v1567 = vmax.f32 %v1439, %v1503
      %v1568 = vmax.f32 %v1440, %v1506
      %v1569 = vmax.f32 %v1441, %v1509
      %v1570 = vmax.f32 %v1442, %v1512
      %v1571 = vmax.f32 %v1443, %v1515
      %v1572 = vmax.f32 %v1444, %v1518
      %v1573 = vmax.f32 %v1445, %v1521
      %v1574 = vmax.f32 %v1446, %v1524
      %v1575 = vmax.f32 %v1447, %v1527
      %v1576 = vmax.f32 %v1448, %v1530
      %v1577 = vmax.f32 %v1449, %v1533
      %v1578 = vmax.f32 %v1450, %v1536
      %v1579 = vmax.f32 %v1451, %v1539
      %v1580 = vmax.f32 %v1452, %v1542
      %v1581 = vmax.f32 %v1453, %v1545
      %v1582 = vmax.f32 %v1454, %v1548
      %v1583 = vmax.f32 %v1455, %v1551
      %v1584 = vsub.f32 %v1424, %v1552
      %v1585 = vsub.f32 %v1425, %v1553
      %v1586 = vsub.f32 %v1426, %v1554
      %v1587 = vsub.f32 %v1427, %v1555
      %v1588 = vsub.f32 %v1428, %v1556
      %v1589 = vsub.f32 %v1429, %v1557
      %v1590 = vsub.f32 %v1430, %v1558
      %v1591 = vsub.f32 %v1431, %v1559
      %v1592 = vsub.f32 %v1432, %v1560
      %v1593 = vsub.f32 %v1433, %v1561
      %v1594 = vsub.f32 %v1434, %v1562
      %v1595 = vsub.f32 %v1435, %v1563
      %v1596 = vsub.f32 %v1436, %v1564
      %v1597 = vsub.f32 %v1437, %v1565
      %v1598 = vsub.f32 %v1438, %v1566
      %v1599 = vsub.f32 %v1439, %v1567
      %v1600 = vsub.f32 %v1440, %v1568
      %v1601 = vsub.f32 %v1441, %v1569
      %v1602 = vsub.f32 %v1442, %v1570
      %v1603 = vsub.f32 %v1443, %v1571
      %v1604 = vsub.f32 %v1444, %v1572
      %v1605 = vsub.f32 %v1445, %v1573
      %v1606 = vsub.f32 %v1446, %v1574
      %v1607 = vsub.f32 %v1447, %v1575
      %v1608 = vsub.f32 %v1448, %v1576
      %v1609 = vsub.f32 %v1449, %v1577
      %v1610 = vsub.f32 %v1450, %v1578
      %v1611 = vsub.f32 %v1451, %v1579
      %v1612 = vsub.f32 %v1452, %v1580
      %v1613 = vsub.f32 %v1453, %v1581
      %v1614 = vsub.f32 %v1454, %v1582
      %v1615 = vsub.f32 %v1455, %v1583
      %v1616 = vmul.f32 %v1584, 1.442695
      %v1617 = vpow.pop %v1616
      %v1618 = vmul.f32 %v1585, 1.442695
      %v1619 = vpow.pop %v1618
      %v1620 = vmul.f32 %v1586, 1.442695
      %v1621 = vpow.pop %v1620
      %v1622 = vmul.f32 %v1587, 1.442695
      %v1623 = vpow.pop %v1622
      %v1624 = vmul.f32 %v1588, 1.442695
      %v1625 = vpow.pop %v1624
      %v1626 = vmul.f32 %v1589, 1.442695
      %v1627 = vpow.pop %v1626
      %v1628 = vmul.f32 %v1590, 1.442695
      %v1629 = vpow.pop %v1628
      %v1630 = vmul.f32 %v1591, 1.442695
      %v1631 = vpow.pop %v1630
      %v1632 = vmul.f32 %v1592, 1.442695
      %v1633 = vpow.pop %v1632
      %v1634 = vmul.f32 %v1593, 1.442695
      %v1635 = vpow.pop %v1634
      %v1636 = vmul.f32 %v1594, 1.442695
      %v1637 = vpow.pop %v1636
      %v1638 = vmul.f32 %v1595, 1.442695
      %v1639 = vpow.pop %v1638
      %v1640 = vmul.f32 %v1596, 1.442695
      %v1641 = vpow.pop %v1640
      %v1642 = vmul.f32 %v1597, 1.442695
      %v1643 = vpow.pop %v1642
      %v1644 = vmul.f32 %v1598, 1.442695
      %v1645 = vpow.pop %v1644
      %v1646 = vmul.f32 %v1599, 1.442695
      %v1647 = vpow.pop %v1646
      %v1648 = vmul.f32 %v1600, 1.442695
      %v1649 = vpow.pop %v1648
      %v1650 = vmul.f32 %v1601, 1.442695
      %v1651 = vpow.pop %v1650
      %v1652 = vmul.f32 %v1602, 1.442695
      %v1653 = vpow.pop %v1652
      %v1654 = vmul.f32 %v1603, 1.442695
      %v1655 = vpow.pop %v1654
      %v1656 = vmul.f32 %v1604, 1.442695
      %v1657 = vpow.pop %v1656
      %v1658 = vmul.f32 %v1605, 1.442695
      %v1659 = vpow.pop %v1658
      %v1660 = vmul.f32 %v1606, 1.442695
      %v1661 = vpow.pop %v1660
      %v1662 = vmul.f32 %v1607, 1.442695
      %v1663 = vpow.pop %v1662
      %v1664 = vmul.f32 %v1608, 1.442695
      %v1665 = vpow.pop %v1664
      %v1666 = vmul.f32 %v1609, 1.442695
      %v1667 = vpow.pop %v1666
      %v1668 = vmul.f32 %v1610, 1.442695
      %v1669 = vpow.pop %v1668
      %v1670 = vmul.f32 %v1611, 1.442695
      %v1671 = vpow.pop %v1670
      %v1672 = vmul.f32 %v1612, 1.442695
      %v1673 = vpow.pop %v1672
      %v1674 = vmul.f32 %v1613, 1.442695
      %v1675 = vpow.pop %v1674
      %v1676 = vmul.f32 %v1614, 1.442695
      %v1677 = vpow.pop %v1676
      %v1678 = vmul.f32 %v1615, 1.442695
      %v1679 = vpow.pop %v1678
      %1681 = vset.pattern.permute.xlu0 0
      %1682 = vperm.xlu0 %1681, %v1552
      %v1683 = vpop.permute.xlu0 %1682
      %1686 = vset.pattern.permute.xlu0 0
      %1687 = vperm.xlu0 %1686, %v1553
      %v1688 = vpop.permute.xlu0 %1687
      %1691 = vset.pattern.permute.xlu0 0
      %1692 = vperm.xlu0 %1691, %v1554
      %v1693 = vpop.permute.xlu0 %1692
      %1696 = vset.pattern.permute.xlu0 0
      %1697 = vperm.xlu0 %1696, %v1555
      %v1698 = vpop.permute.xlu0 %1697
      %1701 = vset.pattern.permute.xlu0 0
      %1702 = vperm.xlu0 %1701, %v1556
      %v1703 = vpop.permute.xlu0 %1702
      %1706 = vset.pattern.permute.xlu0 0
      %1707 = vperm.xlu0 %1706, %v1557
      %v1708 = vpop.permute.xlu0 %1707
      %1711 = vset.pattern.permute.xlu0 0
      %1712 = vperm.xlu0 %1711, %v1558
      %v1713 = vpop.permute.xlu0 %1712
      %1716 = vset.pattern.permute.xlu0 0
      %1717 = vperm.xlu0 %1716, %v1559
      %v1718 = vpop.permute.xlu0 %1717
      %1721 = vset.pattern.permute.xlu0 0
      %1722 = vperm.xlu0 %1721, %v1560
      %v1723 = vpop.permute.xlu0 %1722
      %1726 = vset.pattern.permute.xlu0 0
      %1727 = vperm.xlu0 %1726, %v1561
      %v1728 = vpop.permute.xlu0 %1727
      %1731 = vset.pattern.permute.xlu0 0
      %1732 = vperm.xlu0 %1731, %v1562
      %v1733 = vpop.permute.xlu0 %1732
      %1736 = vset.pattern.permute.xlu0 0
      %1737 = vperm.xlu0 %1736, %v1563
      %v1738 = vpop.permute.xlu0 %1737
      %1741 = vset.pattern.permute.xlu0 0
      %1742 = vperm.xlu0 %1741, %v1564
      %v1743 = vpop.permute.xlu0 %1742
      %1746 = vset.pattern.permute.xlu0 0
      %1747 = vperm.xlu0 %1746, %v1565
      %v1748 = vpop.permute.xlu0 %1747
      %1751 = vset.pattern.permute.xlu0 0
      %1752 = vperm.xlu0 %1751, %v1566
      %v1753 = vpop.permute.xlu0 %1752
      %1756 = vset.pattern.permute.xlu0 0
      %1757 = vperm.xlu0 %1756, %v1567
      %v1758 = vpop.permute.xlu0 %1757
      %1761 = vset.pattern.permute.xlu0 0
      %1762 = vperm.xlu0 %1761, %v1568
      %v1763 = vpop.permute.xlu0 %1762
      %1766 = vset.pattern.permute.xlu0 0
      %1767 = vperm.xlu0 %1766, %v1569
      %v1768 = vpop.permute.xlu0 %1767
      %1771 = vset.pattern.permute.xlu0 0
      %1772 = vperm.xlu0 %1771, %v1570
      %v1773 = vpop.permute.xlu0 %1772
      %1776 = vset.pattern.permute.xlu0 0
      %1777 = vperm.xlu0 %1776, %v1571
      %v1778 = vpop.permute.xlu0 %1777
      %1781 = vset.pattern.permute.xlu0 0
      %1782 = vperm.xlu0 %1781, %v1572
      %v1783 = vpop.permute.xlu0 %1782
      %1786 = vset.pattern.permute.xlu0 0
      %1787 = vperm.xlu0 %1786, %v1573
      %v1788 = vpop.permute.xlu0 %1787
      %1791 = vset.pattern.permute.xlu0 0
      %1792 = vperm.xlu0 %1791, %v1574
      %v1793 = vpop.permute.xlu0 %1792
      %1796 = vset.pattern.permute.xlu0 0
      %1797 = vperm.xlu0 %1796, %v1575
      %v1798 = vpop.permute.xlu0 %1797
      %1801 = vset.pattern.permute.xlu0 0
      %1802 = vperm.xlu0 %1801, %v1576
      %v1803 = vpop.permute.xlu0 %1802
      %1806 = vset.pattern.permute.xlu0 0
      %1807 = vperm.xlu0 %1806, %v1577
      %v1808 = vpop.permute.xlu0 %1807
      %1811 = vset.pattern.permute.xlu0 0
      %1812 = vperm.xlu0 %1811, %v1578
      %v1813 = vpop.permute.xlu0 %1812
      %1816 = vset.pattern.permute.xlu0 0
      %1817 = vperm.xlu0 %1816, %v1579
      %v1818 = vpop.permute.xlu0 %1817
      %1821 = vset.pattern.permute.xlu0 0
      %1822 = vperm.xlu0 %1821, %v1580
      %v1823 = vpop.permute.xlu0 %1822
      %1826 = vset.pattern.permute.xlu0 0
      %1827 = vperm.xlu0 %1826, %v1581
      %v1828 = vpop.permute.xlu0 %1827
      %1831 = vset.pattern.permute.xlu0 0
      %1832 = vperm.xlu0 %1831, %v1582
      %v1833 = vpop.permute.xlu0 %1832
      %1836 = vset.pattern.permute.xlu0 0
      %1837 = vperm.xlu0 %1836, %v1583
      %v1838 = vpop.permute.xlu0 %1837
      %v1840 = vsub.f32 %v1256, %v1683
      %v1841 = vsub.f32 %v1345, %v1683
      %v1842 = vsub.f32 %v1258, %v1688
      %v1843 = vsub.f32 %v1347, %v1688
      %v1844 = vsub.f32 %v1261, %v1693
      %v1845 = vsub.f32 %v1350, %v1693
      %v1846 = vsub.f32 %v1263, %v1698
      %v1847 = vsub.f32 %v1352, %v1698
      %v1848 = vsub.f32 %v1266, %v1703
      %v1849 = vsub.f32 %v1355, %v1703
      %v1850 = vsub.f32 %v1268, %v1708
      %v1851 = vsub.f32 %v1357, %v1708
      %v1852 = vsub.f32 %v1271, %v1713
      %v1853 = vsub.f32 %v1360, %v1713
      %v1854 = vsub.f32 %v1273, %v1718
      %v1855 = vsub.f32 %v1362, %v1718
      %v1856 = vsub.f32 %v1276, %v1723
      %v1857 = vsub.f32 %v1365, %v1723
      %v1858 = vsub.f32 %v1278, %v1728
      %v1859 = vsub.f32 %v1367, %v1728
      %v1860 = vsub.f32 %v1281, %v1733
      %v1861 = vsub.f32 %v1370, %v1733
      %v1862 = vsub.f32 %v1283, %v1738
      %v1863 = vsub.f32 %v1372, %v1738
      %v1864 = vsub.f32 %v1286, %v1743
      %v1865 = vsub.f32 %v1375, %v1743
      %v1866 = vsub.f32 %v1288, %v1748
      %v1867 = vsub.f32 %v1377, %v1748
      %v1868 = vsub.f32 %v1291, %v1753
      %v1869 = vsub.f32 %v1380, %v1753
      %v1870 = vsub.f32 %v1293, %v1758
      %v1871 = vsub.f32 %v1382, %v1758
      %v1872 = vsub.f32 %v1296, %v1763
      %v1873 = vsub.f32 %v1385, %v1763
      %v1874 = vsub.f32 %v1298, %v1768
      %v1875 = vsub.f32 %v1387, %v1768
      %v1876 = vsub.f32 %v1301, %v1773
      %v1877 = vsub.f32 %v1390, %v1773
      %v1878 = vsub.f32 %v1303, %v1778
      %v1879 = vsub.f32 %v1392, %v1778
      %v1880 = vsub.f32 %v1306, %v1783
      %v1881 = vsub.f32 %v1395, %v1783
      %v1882 = vsub.f32 %v1308, %v1788
      %v1883 = vsub.f32 %v1397, %v1788
      %v1884 = vsub.f32 %v1311, %v1793
      %v1885 = vsub.f32 %v1400, %v1793
      %v1886 = vsub.f32 %v1313, %v1798
      %v1887 = vsub.f32 %v1402, %v1798
      %v1888 = vsub.f32 %v1316, %v1803
      %v1889 = vsub.f32 %v1405, %v1803
      %v1890 = vsub.f32 %v1318, %v1808
      %v1891 = vsub.f32 %v1407, %v1808
      %v1892 = vsub.f32 %v1321, %v1813
      %v1893 = vsub.f32 %v1410, %v1813
      %v1894 = vsub.f32 %v1323, %v1818
      %v1895 = vsub.f32 %v1412, %v1818
      %v1896 = vsub.f32 %v1326, %v1823
      %v1897 = vsub.f32 %v1415, %v1823
      %v1898 = vsub.f32 %v1328, %v1828
      %v1899 = vsub.f32 %v1417, %v1828
      %v1900 = vsub.f32 %v1331, %v1833
      %v1901 = vsub.f32 %v1420, %v1833
      %v1902 = vsub.f32 %v1333, %v1838
      %v1903 = vsub.f32 %v1422, %v1838
      %v1904 = vmul.f32 %v1840, 1.442695
      %v1905 = vpow.pop %v1904
      %v1906 = vmul.f32 %v1841, 1.442695
      %v1907 = vpow.pop %v1906
      %v1908 = vmul.f32 %v1842, 1.442695
      %v1909 = vpow.pop %v1908
      %v1910 = vmul.f32 %v1843, 1.442695
      %v1911 = vpow.pop %v1910
      %v1912 = vmul.f32 %v1844, 1.442695
      %v1913 = vpow.pop %v1912
      %v1914 = vmul.f32 %v1845, 1.442695
      %v1915 = vpow.pop %v1914
      %v1916 = vmul.f32 %v1846, 1.442695
      %v1917 = vpow.pop %v1916
      %v1918 = vmul.f32 %v1847, 1.442695
      %v1919 = vpow.pop %v1918
      %v1920 = vmul.f32 %v1848, 1.442695
      %v1921 = vpow.pop %v1920
      %v1922 = vmul.f32 %v1849, 1.442695
      %v1923 = vpow.pop %v1922
      %v1924 = vmul.f32 %v1850, 1.442695
      %v1925 = vpow.pop %v1924
      %v1926 = vmul.f32 %v1851, 1.442695
      %v1927 = vpow.pop %v1926
      %v1928 = vmul.f32 %v1852, 1.442695
      %v1929 = vpow.pop %v1928
      %v1930 = vmul.f32 %v1853, 1.442695
      %v1931 = vpow.pop %v1930
      %v1932 = vmul.f32 %v1854, 1.442695
      %v1933 = vpow.pop %v1932
      %v1934 = vmul.f32 %v1855, 1.442695
      %v1935 = vpow.pop %v1934
      %v1936 = vmul.f32 %v1856, 1.442695
      %v1937 = vpow.pop %v1936
      %v1938 = vmul.f32 %v1857, 1.442695
      %v1939 = vpow.pop %v1938
      %v1940 = vmul.f32 %v1858, 1.442695
      %v1941 = vpow.pop %v1940
      %v1942 = vmul.f32 %v1859, 1.442695
      %v1943 = vpow.pop %v1942
      %v1944 = vmul.f32 %v1860, 1.442695
      %v1945 = vpow.pop %v1944
      %v1946 = vmul.f32 %v1861, 1.442695
      %v1947 = vpow.pop %v1946
      %v1948 = vmul.f32 %v1862, 1.442695
      %v1949 = vpow.pop %v1948
      %v1950 = vmul.f32 %v1863, 1.442695
      %v1951 = vpow.pop %v1950
      %v1952 = vmul.f32 %v1864, 1.442695
      %v1953 = vpow.pop %v1952
      %v1954 = vmul.f32 %v1865, 1.442695
      %v1955 = vpow.pop %v1954
      %v1956 = vmul.f32 %v1866, 1.442695
      %v1957 = vpow.pop %v1956
      %v1958 = vmul.f32 %v1867, 1.442695
      %v1959 = vpow.pop %v1958
      %v1960 = vmul.f32 %v1868, 1.442695
      %v1961 = vpow.pop %v1960
      %v1962 = vmul.f32 %v1869, 1.442695
      %v1963 = vpow.pop %v1962
      %v1964 = vmul.f32 %v1870, 1.442695
      %v1965 = vpow.pop %v1964
      %v1966 = vmul.f32 %v1871, 1.442695
      %v1967 = vpow.pop %v1966
      %v1968 = vmul.f32 %v1872, 1.442695
      %v1969 = vpow.pop %v1968
      %v1970 = vmul.f32 %v1873, 1.442695
      %v1971 = vpow.pop %v1970
      %v1972 = vmul.f32 %v1874, 1.442695
      %v1973 = vpow.pop %v1972
      %v1974 = vmul.f32 %v1875, 1.442695
      %v1975 = vpow.pop %v1974
      %v1976 = vmul.f32 %v1876, 1.442695
      %v1977 = vpow.pop %v1976
      %v1978 = vmul.f32 %v1877, 1.442695
      %v1979 = vpow.pop %v1978
      %v1980 = vmul.f32 %v1878, 1.442695
      %v1981 = vpow.pop %v1980
      %v1982 = vmul.f32 %v1879, 1.442695
      %v1983 = vpow.pop %v1982
      %v1984 = vmul.f32 %v1880, 1.442695
      %v1985 = vpow.pop %v1984
      %v1986 = vmul.f32 %v1881, 1.442695
      %v1987 = vpow.pop %v1986
      %v1988 = vmul.f32 %v1882, 1.442695
      %v1989 = vpow.pop %v1988
      %v1990 = vmul.f32 %v1883, 1.442695
      %v1991 = vpow.pop %v1990
      %v1992 = vmul.f32 %v1884, 1.442695
      %v1993 = vpow.pop %v1992
      %v1994 = vmul.f32 %v1885, 1.442695
      %v1995 = vpow.pop %v1994
      %v1996 = vmul.f32 %v1886, 1.442695
      %v1997 = vpow.pop %v1996
      %v1998 = vmul.f32 %v1887, 1.442695
      %v1999 = vpow.pop %v1998
      %v2000 = vmul.f32 %v1888, 1.442695
      %v2001 = vpow.pop %v2000
      %v2002 = vmul.f32 %v1889, 1.442695
      %v2003 = vpow.pop %v2002
      %v2004 = vmul.f32 %v1890, 1.442695
      %v2005 = vpow.pop %v2004
      %v2006 = vmul.f32 %v1891, 1.442695
      %v2007 = vpow.pop %v2006
      %v2008 = vmul.f32 %v1892, 1.442695
      %v2009 = vpow.pop %v2008
      %v2010 = vmul.f32 %v1893, 1.442695
      %v2011 = vpow.pop %v2010
      %v2012 = vmul.f32 %v1894, 1.442695
      %v2013 = vpow.pop %v2012
      %v2014 = vmul.f32 %v1895, 1.442695
      %v2015 = vpow.pop %v2014
      %v2016 = vmul.f32 %v1896, 1.442695
      %v2017 = vpow.pop %v2016
      %v2018 = vmul.f32 %v1897, 1.442695
      %v2019 = vpow.pop %v2018
      %v2020 = vmul.f32 %v1898, 1.442695
      %v2021 = vpow.pop %v2020
      %v2022 = vmul.f32 %v1899, 1.442695
      %v2023 = vpow.pop %v2022
      %v2024 = vmul.f32 %v1900, 1.442695
      %v2025 = vpow.pop %v2024
      %v2026 = vmul.f32 %v1901, 1.442695
      %v2027 = vpow.pop %v2026
      %v2028 = vmul.f32 %v1902, 1.442695
      %v2029 = vpow.pop %v2028
      %v2030 = vmul.f32 %v1903, 1.442695
      %v2031 = vpow.pop %v2030
      %v2032 = vld [vmem:[#allocation4] sm:$0xff]
      %v2033 = vld [vmem:[#allocation4 + $0x8] sm:$0xff]
      %v2034 = vld [vmem:[#allocation4 + $0x10] sm:$0xff]
      %v2035 = vld [vmem:[#allocation4 + $0x18] sm:$0xff]
      %v2036 = vld [vmem:[#allocation4 + $0x20] sm:$0xff]
      %v2037 = vld [vmem:[#allocation4 + $0x28] sm:$0xff]
      %v2038 = vld [vmem:[#allocation4 + $0x30] sm:$0xff]
      %v2039 = vld [vmem:[#allocation4 + $0x38] sm:$0xff]
      %v2040 = vld [vmem:[#allocation4 + $0x40] sm:$0xff]
      %v2041 = vld [vmem:[#allocation4 + $0x48] sm:$0xff]
      %v2042 = vld [vmem:[#allocation4 + $0x50] sm:$0xff]
      %v2043 = vld [vmem:[#allocation4 + $0x58] sm:$0xff]
      %v2044 = vld [vmem:[#allocation4 + $0x60] sm:$0xff]
      %v2045 = vld [vmem:[#allocation4 + $0x68] sm:$0xff]
      %v2046 = vld [vmem:[#allocation4 + $0x70] sm:$0xff]
      %v2047 = vld [vmem:[#allocation4 + $0x78] sm:$0xff]
      %v2048 = vld [vmem:[#allocation4 + $0x80] sm:$0xff]
      %v2049 = vld [vmem:[#allocation4 + $0x88] sm:$0xff]
      %v2050 = vld [vmem:[#allocation4 + $0x90] sm:$0xff]
      %v2051 = vld [vmem:[#allocation4 + $0x98] sm:$0xff]
      %v2052 = vld [vmem:[#allocation4 + $0xa0] sm:$0xff]
      %v2053 = vld [vmem:[#allocation4 + $0xa8] sm:$0xff]
      %v2054 = vld [vmem:[#allocation4 + $0xb0] sm:$0xff]
      %v2055 = vld [vmem:[#allocation4 + $0xb8] sm:$0xff]
      %v2056 = vld [vmem:[#allocation4 + $0xc0] sm:$0xff]
      %v2057 = vld [vmem:[#allocation4 + $0xc8] sm:$0xff]
      %v2058 = vld [vmem:[#allocation4 + $0xd0] sm:$0xff]
      %v2059 = vld [vmem:[#allocation4 + $0xd8] sm:$0xff]
      %v2060 = vld [vmem:[#allocation4 + $0xe0] sm:$0xff]
      %v2061 = vld [vmem:[#allocation4 + $0xe8] sm:$0xff]
      %v2062 = vld [vmem:[#allocation4 + $0xf0] sm:$0xff]
      %v2063 = vld [vmem:[#allocation4 + $0xf8] sm:$0xff]
      %v2064 = vmul.f32 %v1617, %v2032
      %v2065 = vmul.f32 %v1619, %v2033
      %v2066 = vmul.f32 %v1621, %v2034
      %v2067 = vmul.f32 %v1623, %v2035
      %v2068 = vmul.f32 %v1625, %v2036
      %v2069 = vmul.f32 %v1627, %v2037
      %v2070 = vmul.f32 %v1629, %v2038
      %v2071 = vmul.f32 %v1631, %v2039
      %v2072 = vmul.f32 %v1633, %v2040
      %v2073 = vmul.f32 %v1635, %v2041
      %v2074 = vmul.f32 %v1637, %v2042
      %v2075 = vmul.f32 %v1639, %v2043
      %v2076 = vmul.f32 %v1641, %v2044
      %v2077 = vmul.f32 %v1643, %v2045
      %v2078 = vmul.f32 %v1645, %v2046
      %v2079 = vmul.f32 %v1647, %v2047
      %v2080 = vmul.f32 %v1649, %v2048
      %v2081 = vmul.f32 %v1651, %v2049
      %v2082 = vmul.f32 %v1653, %v2050
      %v2083 = vmul.f32 %v1655, %v2051
      %v2084 = vmul.f32 %v1657, %v2052
      %v2085 = vmul.f32 %v1659, %v2053
      %v2086 = vmul.f32 %v1661, %v2054
      %v2087 = vmul.f32 %v1663, %v2055
      %v2088 = vmul.f32 %v1665, %v2056
      %v2089 = vmul.f32 %v1667, %v2057
      %v2090 = vmul.f32 %v1669, %v2058
      %v2091 = vmul.f32 %v1671, %v2059
      %v2092 = vmul.f32 %v1673, %v2060
      %v2093 = vmul.f32 %v1675, %v2061
      %v2094 = vmul.f32 %v1677, %v2062
      %v2095 = vmul.f32 %v1679, %v2063
      %v2096 = vadd.f32 %v1905, %v1907
      %2097 = vadd.xlane.f32.xlu0 %v2096
      %v2098 = vpop.xlane.xlu0 %2097
      %v2099 = vadd.f32 %v1909, %v1911
      %2100 = vadd.xlane.f32.xlu0 %v2099
      %v2101 = vpop.xlane.xlu0 %2100
      %v2102 = vadd.f32 %v1913, %v1915
      %2103 = vadd.xlane.f32.xlu0 %v2102
      %v2104 = vpop.xlane.xlu0 %2103
      %v2105 = vadd.f32 %v1917, %v1919
      %2106 = vadd.xlane.f32.xlu0 %v2105
      %v2107 = vpop.xlane.xlu0 %2106
      %v2108 = vadd.f32 %v1921, %v1923
      %2109 = vadd.xlane.f32.xlu0 %v2108
      %v2110 = vpop.xlane.xlu0 %2109
      %v2111 = vadd.f32 %v1925, %v1927
      %2112 = vadd.xlane.f32.xlu0 %v2111
      %v2113 = vpop.xlane.xlu0 %2112
      %v2114 = vadd.f32 %v1929, %v1931
      %2115 = vadd.xlane.f32.xlu0 %v2114
      %v2116 = vpop.xlane.xlu0 %2115
      %v2117 = vadd.f32 %v1933, %v1935
      %2118 = vadd.xlane.f32.xlu0 %v2117
      %v2119 = vpop.xlane.xlu0 %2118
      %v2120 = vadd.f32 %v1937, %v1939
      %2121 = vadd.xlane.f32.xlu0 %v2120
      %v2122 = vpop.xlane.xlu0 %2121
      %v2123 = vadd.f32 %v1941, %v1943
      %2124 = vadd.xlane.f32.xlu0 %v2123
      %v2125 = vpop.xlane.xlu0 %2124
      %v2126 = vadd.f32 %v1945, %v1947
      %2127 = vadd.xlane.f32.xlu0 %v2126
      %v2128 = vpop.xlane.xlu0 %2127
      %v2129 = vadd.f32 %v1949, %v1951
      %2130 = vadd.xlane.f32.xlu0 %v2129
      %v2131 = vpop.xlane.xlu0 %2130
      %v2132 = vadd.f32 %v1953, %v1955
      %2133 = vadd.xlane.f32.xlu0 %v2132
      %v2134 = vpop.xlane.xlu0 %2133
      %v2135 = vadd.f32 %v1957, %v1959
      %2136 = vadd.xlane.f32.xlu0 %v2135
      %v2137 = vpop.xlane.xlu0 %2136
      %v2138 = vadd.f32 %v1961, %v1963
      %2139 = vadd.xlane.f32.xlu0 %v2138
      %v2140 = vpop.xlane.xlu0 %2139
      %v2141 = vadd.f32 %v1965, %v1967
      %2142 = vadd.xlane.f32.xlu0 %v2141
      %v2143 = vpop.xlane.xlu0 %2142
      %v2144 = vadd.f32 %v1969, %v1971
      %2145 = vadd.xlane.f32.xlu0 %v2144
      %v2146 = vpop.xlane.xlu0 %2145
      %v2147 = vadd.f32 %v1973, %v1975
      %2148 = vadd.xlane.f32.xlu0 %v2147
      %v2149 = vpop.xlane.xlu0 %2148
      %v2150 = vadd.f32 %v1977, %v1979
      %2151 = vadd.xlane.f32.xlu0 %v2150
      %v2152 = vpop.xlane.xlu0 %2151
      %v2153 = vadd.f32 %v1981, %v1983
      %2154 = vadd.xlane.f32.xlu0 %v2153
      %v2155 = vpop.xlane.xlu0 %2154
      %v2156 = vadd.f32 %v1985, %v1987
      %2157 = vadd.xlane.f32.xlu0 %v2156
      %v2158 = vpop.xlane.xlu0 %2157
      %v2159 = vadd.f32 %v1989, %v1991
      %2160 = vadd.xlane.f32.xlu0 %v2159
      %v2161 = vpop.xlane.xlu0 %2160
      %v2162 = vadd.f32 %v1993, %v1995
      %2163 = vadd.xlane.f32.xlu0 %v2162
      %v2164 = vpop.xlane.xlu0 %2163
      %v2165 = vadd.f32 %v1997, %v1999
      %2166 = vadd.xlane.f32.xlu0 %v2165
      %v2167 = vpop.xlane.xlu0 %2166
      %v2168 = vadd.f32 %v2001, %v2003
      %2169 = vadd.xlane.f32.xlu0 %v2168
      %v2170 = vpop.xlane.xlu0 %2169
      %v2171 = vadd.f32 %v2005, %v2007
      %2172 = vadd.xlane.f32.xlu0 %v2171
      %v2173 = vpop.xlane.xlu0 %2172
      %v2174 = vadd.f32 %v2009, %v2011
      %2175 = vadd.xlane.f32.xlu0 %v2174
      %v2176 = vpop.xlane.xlu0 %2175
      %v2177 = vadd.f32 %v2013, %v2015
      %2178 = vadd.xlane.f32.xlu0 %v2177
      %v2179 = vpop.xlane.xlu0 %2178
      %v2180 = vadd.f32 %v2017, %v2019
      %2181 = vadd.xlane.f32.xlu0 %v2180
      %v2182 = vpop.xlane.xlu0 %2181
      %v2183 = vadd.f32 %v2021, %v2023
      %2184 = vadd.xlane.f32.xlu0 %v2183
      %v2185 = vpop.xlane.xlu0 %2184
      %v2186 = vadd.f32 %v2025, %v2027
      %2187 = vadd.xlane.f32.xlu0 %v2186
      %v2188 = vpop.xlane.xlu0 %2187
      %v2189 = vadd.f32 %v2029, %v2031
      %2190 = vadd.xlane.f32.xlu0 %v2189
      %v2191 = vpop.xlane.xlu0 %2190
      %v2192 = vadd.f32 %v2064, %v2098
      %v2193 = vadd.f32 %v2065, %v2101
      %v2194 = vadd.f32 %v2066, %v2104
      %v2195 = vadd.f32 %v2067, %v2107
      %v2196 = vadd.f32 %v2068, %v2110
      %v2197 = vadd.f32 %v2069, %v2113
      %v2198 = vadd.f32 %v2070, %v2116
      %v2199 = vadd.f32 %v2071, %v2119
      %v2200 = vadd.f32 %v2072, %v2122
      %v2201 = vadd.f32 %v2073, %v2125
      %v2202 = vadd.f32 %v2074, %v2128
      %v2203 = vadd.f32 %v2075, %v2131
      %v2204 = vadd.f32 %v2076, %v2134
      %v2205 = vadd.f32 %v2077, %v2137
      %v2206 = vadd.f32 %v2078, %v2140
      %v2207 = vadd.f32 %v2079, %v2143
      %v2208 = vadd.f32 %v2080, %v2146
      %v2209 = vadd.f32 %v2081, %v2149
      %v2210 = vadd.f32 %v2082, %v2152
      %v2211 = vadd.f32 %v2083, %v2155
      %v2212 = vadd.f32 %v2084, %v2158
      %v2213 = vadd.f32 %v2085, %v2161
      %v2214 = vadd.f32 %v2086, %v2164
      %v2215 = vadd.f32 %v2087, %v2167
      %v2216 = vadd.f32 %v2088, %v2170
      %v2217 = vadd.f32 %v2089, %v2173
      %v2218 = vadd.f32 %v2090, %v2176
      %v2219 = vadd.f32 %v2091, %v2179
      %v2220 = vadd.f32 %v2092, %v2182
      %v2221 = vadd.f32 %v2093, %v2185
      %v2222 = vadd.f32 %v2094, %v2188
      %v2223 = vadd.f32 %v2095, %v2191
      %vm2224 = vcmask 7168
      %2225 = vst.msk [vmem:[#allocation4] sm:$0xff] %vm2224, %v2192
      %2226 = vst.msk [vmem:[#allocation4 + $0x8] sm:$0xff] %vm2224, %v2193
      %2227 = vst.msk [vmem:[#allocation4 + $0x10] sm:$0xff] %vm2224, %v2194
      %2228 = vst.msk [vmem:[#allocation4 + $0x18] sm:$0xff] %vm2224, %v2195
      %2229 = vst.msk [vmem:[#allocation4 + $0x20] sm:$0xff] %vm2224, %v2196
      %2230 = vst.msk [vmem:[#allocation4 + $0x28] sm:$0xff] %vm2224, %v2197
      %2231 = vst.msk [vmem:[#allocation4 + $0x30] sm:$0xff] %vm2224, %v2198
      %2232 = vst.msk [vmem:[#allocation4 + $0x38] sm:$0xff] %vm2224, %v2199
      %2233 = vst.msk [vmem:[#allocation4 + $0x40] sm:$0xff] %vm2224, %v2200
      %2234 = vst.msk [vmem:[#allocation4 + $0x48] sm:$0xff] %vm2224, %v2201
      %2235 = vst.msk [vmem:[#allocation4 + $0x50] sm:$0xff] %vm2224, %v2202
      %2236 = vst.msk [vmem:[#allocation4 + $0x58] sm:$0xff] %vm2224, %v2203
      %2237 = vst.msk [vmem:[#allocation4 + $0x60] sm:$0xff] %vm2224, %v2204
      %2238 = vst.msk [vmem:[#allocation4 + $0x68] sm:$0xff] %vm2224, %v2205
      %2239 = vst.msk [vmem:[#allocation4 + $0x70] sm:$0xff] %vm2224, %v2206
      %2240 = vst.msk [vmem:[#allocation4 + $0x78] sm:$0xff] %vm2224, %v2207
      %2241 = vst.msk [vmem:[#allocation4 + $0x80] sm:$0xff] %vm2224, %v2208
      %2242 = vst.msk [vmem:[#allocation4 + $0x88] sm:$0xff] %vm2224, %v2209
      %2243 = vst.msk [vmem:[#allocation4 + $0x90] sm:$0xff] %vm2224, %v2210
      %2244 = vst.msk [vmem:[#allocation4 + $0x98] sm:$0xff] %vm2224, %v2211
      %2245 = vst.msk [vmem:[#allocation4 + $0xa0] sm:$0xff] %vm2224, %v2212
      %2246 = vst.msk [vmem:[#allocation4 + $0xa8] sm:$0xff] %vm2224, %v2213
      %2247 = vst.msk [vmem:[#allocation4 + $0xb0] sm:$0xff] %vm2224, %v2214
      %2248 = vst.msk [vmem:[#allocation4 + $0xb8] sm:$0xff] %vm2224, %v2215
      %2249 = vst.msk [vmem:[#allocation4 + $0xc0] sm:$0xff] %vm2224, %v2216
      %2250 = vst.msk [vmem:[#allocation4 + $0xc8] sm:$0xff] %vm2224, %v2217
      %2251 = vst.msk [vmem:[#allocation4 + $0xd0] sm:$0xff] %vm2224, %v2218
      %2252 = vst.msk [vmem:[#allocation4 + $0xd8] sm:$0xff] %vm2224, %v2219
      %2253 = vst.msk [vmem:[#allocation4 + $0xe0] sm:$0xff] %vm2224, %v2220
      %2254 = vst.msk [vmem:[#allocation4 + $0xe8] sm:$0xff] %vm2224, %v2221
      %2255 = vst.msk [vmem:[#allocation4 + $0xf0] sm:$0xff] %vm2224, %v2222
      %2256 = vst.msk [vmem:[#allocation4 + $0xf8] sm:$0xff] %vm2224, %v2223
      %v2257 = vld [vmem:[#allocation5] sm:$0xff]
      %v2258 = vld [vmem:[#allocation5 + $0x8] sm:$0xff]
      %v2259 = vld [vmem:[#allocation5 + $0x10] sm:$0xff]
      %v2260 = vld [vmem:[#allocation5 + $0x18] sm:$0xff]
      %v2261 = vld [vmem:[#allocation5 + $0x20] sm:$0xff]
      %v2262 = vld [vmem:[#allocation5 + $0x28] sm:$0xff]
      %v2263 = vld [vmem:[#allocation5 + $0x30] sm:$0xff]
      %v2264 = vld [vmem:[#allocation5 + $0x38] sm:$0xff]
      %v2265 = vld [vmem:[#allocation5 + $0x40] sm:$0xff]
      %v2266 = vld [vmem:[#allocation5 + $0x48] sm:$0xff]
      %v2267 = vld [vmem:[#allocation5 + $0x50] sm:$0xff]
      %v2268 = vld [vmem:[#allocation5 + $0x58] sm:$0xff]
      %v2269 = vld [vmem:[#allocation5 + $0x60] sm:$0xff]
      %v2270 = vld [vmem:[#allocation5 + $0x68] sm:$0xff]
      %v2271 = vld [vmem:[#allocation5 + $0x70] sm:$0xff]
      %v2272 = vld [vmem:[#allocation5 + $0x78] sm:$0xff]
      %v2273 = vld [vmem:[#allocation5 + $0x80] sm:$0xff]
      %v2274 = vld [vmem:[#allocation5 + $0x88] sm:$0xff]
      %v2275 = vld [vmem:[#allocation5 + $0x90] sm:$0xff]
      %v2276 = vld [vmem:[#allocation5 + $0x98] sm:$0xff]
      %v2277 = vld [vmem:[#allocation5 + $0xa0] sm:$0xff]
      %v2278 = vld [vmem:[#allocation5 + $0xa8] sm:$0xff]
      %v2279 = vld [vmem:[#allocation5 + $0xb0] sm:$0xff]
      %v2280 = vld [vmem:[#allocation5 + $0xb8] sm:$0xff]
      %v2281 = vld [vmem:[#allocation5 + $0xc0] sm:$0xff]
      %v2282 = vld [vmem:[#allocation5 + $0xc8] sm:$0xff]
      %v2283 = vld [vmem:[#allocation5 + $0xd0] sm:$0xff]
      %v2284 = vld [vmem:[#allocation5 + $0xd8] sm:$0xff]
      %v2285 = vld [vmem:[#allocation5 + $0xe0] sm:$0xff]
      %v2286 = vld [vmem:[#allocation5 + $0xe8] sm:$0xff]
      %v2287 = vld [vmem:[#allocation5 + $0xf0] sm:$0xff]
      %v2288 = vld [vmem:[#allocation5 + $0xf8] sm:$0xff]
      %2290 = vset.pattern.permute.xlu0 0
      %2291 = vperm.xlu0 %2290, %v1617
      %v2292 = vpop.permute.xlu0 %2291
      %2295 = vset.pattern.permute.xlu0 0
      %2296 = vperm.xlu0 %2295, %v1619
      %v2297 = vpop.permute.xlu0 %2296
      %2300 = vset.pattern.permute.xlu0 0
      %2301 = vperm.xlu0 %2300, %v1621
      %v2302 = vpop.permute.xlu0 %2301
      %2305 = vset.pattern.permute.xlu0 0
      %2306 = vperm.xlu0 %2305, %v1623
      %v2307 = vpop.permute.xlu0 %2306
      %2310 = vset.pattern.permute.xlu0 0
      %2311 = vperm.xlu0 %2310, %v1625
      %v2312 = vpop.permute.xlu0 %2311
      %2315 = vset.pattern.permute.xlu0 0
      %2316 = vperm.xlu0 %2315, %v1627
      %v2317 = vpop.permute.xlu0 %2316
      %2320 = vset.pattern.permute.xlu0 0
      %2321 = vperm.xlu0 %2320, %v1629
      %v2322 = vpop.permute.xlu0 %2321
      %2325 = vset.pattern.permute.xlu0 0
      %2326 = vperm.xlu0 %2325, %v1631
      %v2327 = vpop.permute.xlu0 %2326
      %2330 = vset.pattern.permute.xlu0 0
      %2331 = vperm.xlu0 %2330, %v1633
      %v2332 = vpop.permute.xlu0 %2331
      %2335 = vset.pattern.permute.xlu0 0
      %2336 = vperm.xlu0 %2335, %v1635
      %v2337 = vpop.permute.xlu0 %2336
      %2340 = vset.pattern.permute.xlu0 0
      %2341 = vperm.xlu0 %2340, %v1637
      %v2342 = vpop.permute.xlu0 %2341
      %2345 = vset.pattern.permute.xlu0 0
      %2346 = vperm.xlu0 %2345, %v1639
      %v2347 = vpop.permute.xlu0 %2346
      %2350 = vset.pattern.permute.xlu0 0
      %2351 = vperm.xlu0 %2350, %v1641
      %v2352 = vpop.permute.xlu0 %2351
      %2355 = vset.pattern.permute.xlu0 0
      %2356 = vperm.xlu0 %2355, %v1643
      %v2357 = vpop.permute.xlu0 %2356
      %2360 = vset.pattern.permute.xlu0 0
      %2361 = vperm.xlu0 %2360, %v1645
      %v2362 = vpop.permute.xlu0 %2361
      %2365 = vset.pattern.permute.xlu0 0
      %2366 = vperm.xlu0 %2365, %v1647
      %v2367 = vpop.permute.xlu0 %2366
      %2370 = vset.pattern.permute.xlu0 0
      %2371 = vperm.xlu0 %2370, %v1649
      %v2372 = vpop.permute.xlu0 %2371
      %2375 = vset.pattern.permute.xlu0 0
      %2376 = vperm.xlu0 %2375, %v1651
      %v2377 = vpop.permute.xlu0 %2376
      %2380 = vset.pattern.permute.xlu0 0
      %2381 = vperm.xlu0 %2380, %v1653
      %v2382 = vpop.permute.xlu0 %2381
      %2385 = vset.pattern.permute.xlu0 0
      %2386 = vperm.xlu0 %2385, %v1655
      %v2387 = vpop.permute.xlu0 %2386
      %2390 = vset.pattern.permute.xlu0 0
      %2391 = vperm.xlu0 %2390, %v1657
      %v2392 = vpop.permute.xlu0 %2391
      %2395 = vset.pattern.permute.xlu0 0
      %2396 = vperm.xlu0 %2395, %v1659
      %v2397 = vpop.permute.xlu0 %2396
      %2400 = vset.pattern.permute.xlu0 0
      %2401 = vperm.xlu0 %2400, %v1661
      %v2402 = vpop.permute.xlu0 %2401
      %2405 = vset.pattern.permute.xlu0 0
      %2406 = vperm.xlu0 %2405, %v1663
      %v2407 = vpop.permute.xlu0 %2406
      %2410 = vset.pattern.permute.xlu0 0
      %2411 = vperm.xlu0 %2410, %v1665
      %v2412 = vpop.permute.xlu0 %2411
      %2415 = vset.pattern.permute.xlu0 0
      %2416 = vperm.xlu0 %2415, %v1667
      %v2417 = vpop.permute.xlu0 %2416
      %2420 = vset.pattern.permute.xlu0 0
      %2421 = vperm.xlu0 %2420, %v1669
      %v2422 = vpop.permute.xlu0 %2421
      %2425 = vset.pattern.permute.xlu0 0
      %2426 = vperm.xlu0 %2425, %v1671
      %v2427 = vpop.permute.xlu0 %2426
      %2430 = vset.pattern.permute.xlu0 0
      %2431 = vperm.xlu0 %2430, %v1673
      %v2432 = vpop.permute.xlu0 %2431
      %2435 = vset.pattern.permute.xlu0 0
      %2436 = vperm.xlu0 %2435, %v1675
      %v2437 = vpop.permute.xlu0 %2436
      %2440 = vset.pattern.permute.xlu0 0
      %2441 = vperm.xlu0 %2440, %v1677
      %v2442 = vpop.permute.xlu0 %2441
      %2445 = vset.pattern.permute.xlu0 0
      %2446 = vperm.xlu0 %2445, %v1679
      %v2447 = vpop.permute.xlu0 %2446
      %v2449 = vmul.f32 %v2292, %v2257
      %v2450 = vmul.f32 %v2297, %v2258
      %v2451 = vmul.f32 %v2302, %v2259
      %v2452 = vmul.f32 %v2307, %v2260
      %v2453 = vmul.f32 %v2312, %v2261
      %v2454 = vmul.f32 %v2317, %v2262
      %v2455 = vmul.f32 %v2322, %v2263
      %v2456 = vmul.f32 %v2327, %v2264
      %v2457 = vmul.f32 %v2332, %v2265
      %v2458 = vmul.f32 %v2337, %v2266
      %v2459 = vmul.f32 %v2342, %v2267
      %v2460 = vmul.f32 %v2347, %v2268
      %v2461 = vmul.f32 %v2352, %v2269
      %v2462 = vmul.f32 %v2357, %v2270
      %v2463 = vmul.f32 %v2362, %v2271
      %v2464 = vmul.f32 %v2367, %v2272
      %v2465 = vmul.f32 %v2372, %v2273
      %v2466 = vmul.f32 %v2377, %v2274
      %v2467 = vmul.f32 %v2382, %v2275
      %v2468 = vmul.f32 %v2387, %v2276
      %v2469 = vmul.f32 %v2392, %v2277
      %v2470 = vmul.f32 %v2397, %v2278
      %v2471 = vmul.f32 %v2402, %v2279
      %v2472 = vmul.f32 %v2407, %v2280
      %v2473 = vmul.f32 %v2412, %v2281
      %v2474 = vmul.f32 %v2417, %v2282
      %v2475 = vmul.f32 %v2422, %v2283
      %v2476 = vmul.f32 %v2427, %v2284
      %v2477 = vmul.f32 %v2432, %v2285
      %v2478 = vmul.f32 %v2437, %v2286
      %v2479 = vmul.f32 %v2442, %v2287
      %v2480 = vmul.f32 %v2447, %v2288
      %v2481 = vpack.c.bf16 %v1909, %v1905
      %v2482 = vpack.c.bf16 %v1911, %v1907
      %v2483 = vpack.c.bf16 %v1917, %v1913
      %v2484 = vpack.c.bf16 %v1919, %v1915
      %v2485 = vpack.c.bf16 %v1925, %v1921
      %v2486 = vpack.c.bf16 %v1927, %v1923
      %v2487 = vpack.c.bf16 %v1933, %v1929
      %v2488 = vpack.c.bf16 %v1935, %v1931
      %v2489 = vpack.c.bf16 %v1941, %v1937
      %v2490 = vpack.c.bf16 %v1943, %v1939
      %v2491 = vpack.c.bf16 %v1949, %v1945
      %v2492 = vpack.c.bf16 %v1951, %v1947
      %v2493 = vpack.c.bf16 %v1957, %v1953
      %v2494 = vpack.c.bf16 %v1959, %v1955
      %v2495 = vpack.c.bf16 %v1965, %v1961
      %v2496 = vpack.c.bf16 %v1967, %v1963
      %v2497 = vpack.c.bf16 %v1973, %v1969
      %v2498 = vpack.c.bf16 %v1975, %v1971
      %v2499 = vpack.c.bf16 %v1981, %v1977
      %v2500 = vpack.c.bf16 %v1983, %v1979
      %v2501 = vpack.c.bf16 %v1989, %v1985
      %v2502 = vpack.c.bf16 %v1991, %v1987
      %v2503 = vpack.c.bf16 %v1997, %v1993
      %v2504 = vpack.c.bf16 %v1999, %v1995
      %v2505 = vpack.c.bf16 %v2005, %v2001
      %v2506 = vpack.c.bf16 %v2007, %v2003
      %v2507 = vpack.c.bf16 %v2013, %v2009
      %v2508 = vpack.c.bf16 %v2015, %v2011
      %v2509 = vpack.c.bf16 %v2021, %v2017
      %v2510 = vpack.c.bf16 %v2023, %v2019
      %v2511 = vpack.c.bf16 %v2029, %v2025
      %v2512 = vpack.c.bf16 %v2031, %v2027
      %2513 = vmatpush.bf16.msra.mxu0 %v1109
      %2514 = vmatpush.bf16.msra.mxu0 %v1108
      %2515 = vmatpush.bf16.msra.mxu0 %v1107
      %2516 = vmatpush.bf16.msra.mxu0 %v1106
      %2517 = vmatpush.bf16.msra.mxu0 %v1105
      %2518 = vmatpush.bf16.msra.mxu0 %v1104
      %2519 = vmatpush.bf16.msra.mxu0 %v1103
      %2520 = vmatpush.bf16.msra.mxu0 %v1102
      %2521 = vmatmul.bf16.gmra.mxu0 %v2481
      %v2522 = vpop.f32.mrf.mxu0
      %v2523 = vadd.f32 0.0, %v2522
      %v2524 = vpop.f32.mrf.mxu0
      %v2525 = vadd.f32 0.0, %v2524
      %2526 = vmatmul.bf16.gmra.mxu0 %v2483
      %v2527 = vpop.f32.mrf.mxu0
      %v2528 = vadd.f32 0.0, %v2527
      %v2529 = vpop.f32.mrf.mxu0
      %v2530 = vadd.f32 0.0, %v2529
      %2531 = vmatmul.bf16.gmra.mxu0 %v2485
      %v2532 = vpop.f32.mrf.mxu0
      %v2533 = vadd.f32 0.0, %v2532
      %v2534 = vpop.f32.mrf.mxu0
      %v2535 = vadd.f32 0.0, %v2534
      %2536 = vmatmul.bf16.gmra.mxu0 %v2487
      %v2537 = vpop.f32.mrf.mxu0
      %v2538 = vadd.f32 0.0, %v2537
      %v2539 = vpop.f32.mrf.mxu0
      %v2540 = vadd.f32 0.0, %v2539
      %2541 = vmatmul.bf16.gmra.mxu0 %v2489
      %v2542 = vpop.f32.mrf.mxu0
      %v2543 = vadd.f32 0.0, %v2542
      %v2544 = vpop.f32.mrf.mxu0
      %v2545 = vadd.f32 0.0, %v2544
      %2546 = vmatmul.bf16.gmra.mxu0 %v2491
      %v2547 = vpop.f32.mrf.mxu0
      %v2548 = vadd.f32 0.0, %v2547
      %v2549 = vpop.f32.mrf.mxu0
      %v2550 = vadd.f32 0.0, %v2549
      %2551 = vmatmul.bf16.gmra.mxu0 %v2493
      %v2552 = vpop.f32.mrf.mxu0
      %v2553 = vadd.f32 0.0, %v2552
      %v2554 = vpop.f32.mrf.mxu0
      %v2555 = vadd.f32 0.0, %v2554
      %2556 = vmatmul.bf16.gmra.mxu0 %v2495
      %v2557 = vpop.f32.mrf.mxu0
      %v2558 = vadd.f32 0.0, %v2557
      %v2559 = vpop.f32.mrf.mxu0
      %v2560 = vadd.f32 0.0, %v2559
      %2561 = vmatmul.bf16.gmra.mxu0 %v2497
      %v2562 = vpop.f32.mrf.mxu0
      %v2563 = vadd.f32 0.0, %v2562
      %v2564 = vpop.f32.mrf.mxu0
      %v2565 = vadd.f32 0.0, %v2564
      %2566 = vmatmul.bf16.gmra.mxu0 %v2499
      %v2567 = vpop.f32.mrf.mxu0
      %v2568 = vadd.f32 0.0, %v2567
      %v2569 = vpop.f32.mrf.mxu0
      %v2570 = vadd.f32 0.0, %v2569
      %2571 = vmatmul.bf16.gmra.mxu0 %v2501
      %v2572 = vpop.f32.mrf.mxu0
      %v2573 = vadd.f32 0.0, %v2572
      %v2574 = vpop.f32.mrf.mxu0
      %v2575 = vadd.f32 0.0, %v2574
      %2576 = vmatmul.bf16.gmra.mxu0 %v2503
      %v2577 = vpop.f32.mrf.mxu0
      %v2578 = vadd.f32 0.0, %v2577
      %v2579 = vpop.f32.mrf.mxu0
      %v2580 = vadd.f32 0.0, %v2579
      %2581 = vmatmul.bf16.gmra.mxu0 %v2505
      %v2582 = vpop.f32.mrf.mxu0
      %v2583 = vadd.f32 0.0, %v2582
      %v2584 = vpop.f32.mrf.mxu0
      %v2585 = vadd.f32 0.0, %v2584
      %2586 = vmatmul.bf16.gmra.mxu0 %v2507
      %v2587 = vpop.f32.mrf.mxu0
      %v2588 = vadd.f32 0.0, %v2587
      %v2589 = vpop.f32.mrf.mxu0
      %v2590 = vadd.f32 0.0, %v2589
      %2591 = vmatmul.bf16.gmra.mxu0 %v2509
      %v2592 = vpop.f32.mrf.mxu0
      %v2593 = vadd.f32 0.0, %v2592
      %v2594 = vpop.f32.mrf.mxu0
      %v2595 = vadd.f32 0.0, %v2594
      %2596 = vmatmul.bf16.gmra.mxu0 %v2511
      %v2597 = vpop.f32.mrf.mxu0
      %v2598 = vadd.f32 0.0, %v2597
      %v2599 = vpop.f32.mrf.mxu0
      %v2600 = vadd.f32 0.0, %v2599
      %2601 = vdwg.mxu0
      %2602 = vmatpush.bf16.msra.mxu0 %v1117
      %2603 = vmatpush.bf16.msra.mxu0 %v1116
      %2604 = vmatpush.bf16.msra.mxu0 %v1115
      %2605 = vmatpush.bf16.msra.mxu0 %v1114
      %2606 = vmatpush.bf16.msra.mxu0 %v1113
      %2607 = vmatpush.bf16.msra.mxu0 %v1112
      %2608 = vmatpush.bf16.msra.mxu0 %v1111
      %2609 = vmatpush.bf16.msra.mxu0 %v1110
      %2610 = vmatmul.bf16.gmra.mxu0 %v2482
      %v2611 = vpop.f32.mrf.mxu0
      %v2612 = vadd.f32 %v2523, %v2611
      %v2613 = vpop.f32.mrf.mxu0
      %v2614 = vadd.f32 %v2525, %v2613
      %2615 = vmatmul.bf16.gmra.mxu0 %v2484
      %v2616 = vpop.f32.mrf.mxu0
      %v2617 = vadd.f32 %v2528, %v2616
      %v2618 = vpop.f32.mrf.mxu0
      %v2619 = vadd.f32 %v2530, %v2618
      %2620 = vmatmul.bf16.gmra.mxu0 %v2486
      %v2621 = vpop.f32.mrf.mxu0
      %v2622 = vadd.f32 %v2533, %v2621
      %v2623 = vpop.f32.mrf.mxu0
      %v2624 = vadd.f32 %v2535, %v2623
      %2625 = vmatmul.bf16.gmra.mxu0 %v2488
      %v2626 = vpop.f32.mrf.mxu0
      %v2627 = vadd.f32 %v2538, %v2626
      %v2628 = vpop.f32.mrf.mxu0
      %v2629 = vadd.f32 %v2540, %v2628
      %2630 = vmatmul.bf16.gmra.mxu0 %v2490
      %v2631 = vpop.f32.mrf.mxu0
      %v2632 = vadd.f32 %v2543, %v2631
      %v2633 = vpop.f32.mrf.mxu0
      %v2634 = vadd.f32 %v2545, %v2633
      %2635 = vmatmul.bf16.gmra.mxu0 %v2492
      %v2636 = vpop.f32.mrf.mxu0
      %v2637 = vadd.f32 %v2548, %v2636
      %v2638 = vpop.f32.mrf.mxu0
      %v2639 = vadd.f32 %v2550, %v2638
      %2640 = vmatmul.bf16.gmra.mxu0 %v2494
      %v2641 = vpop.f32.mrf.mxu0
      %v2642 = vadd.f32 %v2553, %v2641
      %v2643 = vpop.f32.mrf.mxu0
      %v2644 = vadd.f32 %v2555, %v2643
      %2645 = vmatmul.bf16.gmra.mxu0 %v2496
      %v2646 = vpop.f32.mrf.mxu0
      %v2647 = vadd.f32 %v2558, %v2646
      %v2648 = vpop.f32.mrf.mxu0
      %v2649 = vadd.f32 %v2560, %v2648
      %2650 = vmatmul.bf16.gmra.mxu0 %v2498
      %v2651 = vpop.f32.mrf.mxu0
      %v2652 = vadd.f32 %v2563, %v2651
      %v2653 = vpop.f32.mrf.mxu0
      %v2654 = vadd.f32 %v2565, %v2653
      %2655 = vmatmul.bf16.gmra.mxu0 %v2500
      %v2656 = vpop.f32.mrf.mxu0
      %v2657 = vadd.f32 %v2568, %v2656
      %v2658 = vpop.f32.mrf.mxu0
      %v2659 = vadd.f32 %v2570, %v2658
      %2660 = vmatmul.bf16.gmra.mxu0 %v2502
      %v2661 = vpop.f32.mrf.mxu0
      %v2662 = vadd.f32 %v2573, %v2661
      %v2663 = vpop.f32.mrf.mxu0
      %v2664 = vadd.f32 %v2575, %v2663
      %2665 = vmatmul.bf16.gmra.mxu0 %v2504
      %v2666 = vpop.f32.mrf.mxu0
      %v2667 = vadd.f32 %v2578, %v2666
      %v2668 = vpop.f32.mrf.mxu0
      %v2669 = vadd.f32 %v2580, %v2668
      %2670 = vmatmul.bf16.gmra.mxu0 %v2506
      %v2671 = vpop.f32.mrf.mxu0
      %v2672 = vadd.f32 %v2583, %v2671
      %v2673 = vpop.f32.mrf.mxu0
      %v2674 = vadd.f32 %v2585, %v2673
      %2675 = vmatmul.bf16.gmra.mxu0 %v2508
      %v2676 = vpop.f32.mrf.mxu0
      %v2677 = vadd.f32 %v2588, %v2676
      %v2678 = vpop.f32.mrf.mxu0
      %v2679 = vadd.f32 %v2590, %v2678
      %2680 = vmatmul.bf16.gmra.mxu0 %v2510
      %v2681 = vpop.f32.mrf.mxu0
      %v2682 = vadd.f32 %v2593, %v2681
      %v2683 = vpop.f32.mrf.mxu0
      %v2684 = vadd.f32 %v2595, %v2683
      %2685 = vmatmul.bf16.gmra.mxu0 %v2512
      %v2686 = vpop.f32.mrf.mxu0
      %v2687 = vadd.f32 %v2598, %v2686
      %v2688 = vpop.f32.mrf.mxu0
      %v2689 = vadd.f32 %v2600, %v2688
      %2690 = vdwg.mxu0
      %v2691 = vadd.f32 %v2449, %v2612
      %v2692 = vadd.f32 %v2450, %v2614
      %v2693 = vadd.f32 %v2451, %v2617
      %v2694 = vadd.f32 %v2452, %v2619
      %v2695 = vadd.f32 %v2453, %v2622
      %v2696 = vadd.f32 %v2454, %v2624
      %v2697 = vadd.f32 %v2455, %v2627
      %v2698 = vadd.f32 %v2456, %v2629
      %v2699 = vadd.f32 %v2457, %v2632
      %v2700 = vadd.f32 %v2458, %v2634
      %v2701 = vadd.f32 %v2459, %v2637
      %v2702 = vadd.f32 %v2460, %v2639
      %v2703 = vadd.f32 %v2461, %v2642
      %v2704 = vadd.f32 %v2462, %v2644
      %v2705 = vadd.f32 %v2463, %v2647
      %v2706 = vadd.f32 %v2464, %v2649
      %v2707 = vadd.f32 %v2465, %v2652
      %v2708 = vadd.f32 %v2466, %v2654
      %v2709 = vadd.f32 %v2467, %v2657
      %v2710 = vadd.f32 %v2468, %v2659
      %v2711 = vadd.f32 %v2469, %v2662
      %v2712 = vadd.f32 %v2470, %v2664
      %v2713 = vadd.f32 %v2471, %v2667
      %v2714 = vadd.f32 %v2472, %v2669
      %v2715 = vadd.f32 %v2473, %v2672
      %v2716 = vadd.f32 %v2474, %v2674
      %v2717 = vadd.f32 %v2475, %v2677
      %v2718 = vadd.f32 %v2476, %v2679
      %v2719 = vadd.f32 %v2477, %v2682
      %v2720 = vadd.f32 %v2478, %v2684
      %v2721 = vadd.f32 %v2479, %v2687
      %v2722 = vadd.f32 %v2480, %v2689
      %2723 = vst [vmem:[#allocation5] sm:$0xff] %v2691
      %2724 = vst [vmem:[#allocation5 + $0x8] sm:$0xff] %v2692
      %2725 = vst [vmem:[#allocation5 + $0x10] sm:$0xff] %v2693
      %2726 = vst [vmem:[#allocation5 + $0x18] sm:$0xff] %v2694
      %2727 = vst [vmem:[#allocation5 + $0x20] sm:$0xff] %v2695
      %2728 = vst [vmem:[#allocation5 + $0x28] sm:$0xff] %v2696
      %2729 = vst [vmem:[#allocation5 + $0x30] sm:$0xff] %v2697
      %2730 = vst [vmem:[#allocation5 + $0x38] sm:$0xff] %v2698
      %2731 = vst [vmem:[#allocation5 + $0x40] sm:$0xff] %v2699
      %2732 = vst [vmem:[#allocation5 + $0x48] sm:$0xff] %v2700
      %2733 = vst [vmem:[#allocation5 + $0x50] sm:$0xff] %v2701
      %2734 = vst [vmem:[#allocation5 + $0x58] sm:$0xff] %v2702
      %2735 = vst [vmem:[#allocation5 + $0x60] sm:$0xff] %v2703
      %2736 = vst [vmem:[#allocation5 + $0x68] sm:$0xff] %v2704
      %2737 = vst [vmem:[#allocation5 + $0x70] sm:$0xff] %v2705
      %2738 = vst [vmem:[#allocation5 + $0x78] sm:$0xff] %v2706
      %2739 = vst [vmem:[#allocation5 + $0x80] sm:$0xff] %v2707
      %2740 = vst [vmem:[#allocation5 + $0x88] sm:$0xff] %v2708
      %2741 = vst [vmem:[#allocation5 + $0x90] sm:$0xff] %v2709
      %2742 = vst [vmem:[#allocation5 + $0x98] sm:$0xff] %v2710
      %2743 = vst [vmem:[#allocation5 + $0xa0] sm:$0xff] %v2711
      %2744 = vst [vmem:[#allocation5 + $0xa8] sm:$0xff] %v2712
      %2745 = vst [vmem:[#allocation5 + $0xb0] sm:$0xff] %v2713
      %2746 = vst [vmem:[#allocation5 + $0xb8] sm:$0xff] %v2714
      %2747 = vst [vmem:[#allocation5 + $0xc0] sm:$0xff] %v2715
      %2748 = vst [vmem:[#allocation5 + $0xc8] sm:$0xff] %v2716
      %2749 = vst [vmem:[#allocation5 + $0xd0] sm:$0xff] %v2717
      %2750 = vst [vmem:[#allocation5 + $0xd8] sm:$0xff] %v2718
      %2751 = vst [vmem:[#allocation5 + $0xe0] sm:$0xff] %v2719
      %2752 = vst [vmem:[#allocation5 + $0xe8] sm:$0xff] %v2720
      %2753 = vst [vmem:[#allocation5 + $0xf0] sm:$0xff] %v2721
      %2754 = vst [vmem:[#allocation5 + $0xf8] sm:$0xff] %v2722
      %2755 = vst.msk [vmem:[#allocation3] sm:$0xff] %vm2224, %v1552
      %2756 = vst.msk [vmem:[#allocation3 + $0x8] sm:$0xff] %vm2224, %v1553
      %2757 = vst.msk [vmem:[#allocation3 + $0x10] sm:$0xff] %vm2224, %v1554
      %2758 = vst.msk [vmem:[#allocation3 + $0x18] sm:$0xff] %vm2224, %v1555
      %2759 = vst.msk [vmem:[#allocation3 + $0x20] sm:$0xff] %vm2224, %v1556
      %2760 = vst.msk [vmem:[#allocation3 + $0x28] sm:$0xff] %vm2224, %v1557
      %2761 = vst.msk [vmem:[#allocation3 + $0x30] sm:$0xff] %vm2224, %v1558
      %2762 = vst.msk [vmem:[#allocation3 + $0x38] sm:$0xff] %vm2224, %v1559
      %2763 = vst.msk [vmem:[#allocation3 + $0x40] sm:$0xff] %vm2224, %v1560
      %2764 = vst.msk [vmem:[#allocation3 + $0x48] sm:$0xff] %vm2224, %v1561
      %2765 = vst.msk [vmem:[#allocation3 + $0x50] sm:$0xff] %vm2224, %v1562
      %2766 = vst.msk [vmem:[#allocation3 + $0x58] sm:$0xff] %vm2224, %v1563
      %2767 = vst.msk [vmem:[#allocation3 + $0x60] sm:$0xff] %vm2224, %v1564
      %2768 = vst.msk [vmem:[#allocation3 + $0x68] sm:$0xff] %vm2224, %v1565
      %2769 = vst.msk [vmem:[#allocation3 + $0x70] sm:$0xff] %vm2224, %v1566
      %2770 = vst.msk [vmem:[#allocation3 + $0x78] sm:$0xff] %vm2224, %v1567
      %2771 = vst.msk [vmem:[#allocation3 + $0x80] sm:$0xff] %vm2224, %v1568
      %2772 = vst.msk [vmem:[#allocation3 + $0x88] sm:$0xff] %vm2224, %v1569
      %2773 = vst.msk [vmem:[#allocation3 + $0x90] sm:$0xff] %vm2224, %v1570
      %2774 = vst.msk [vmem:[#allocation3 + $0x98] sm:$0xff] %vm2224, %v1571
      %2775 = vst.msk [vmem:[#allocation3 + $0xa0] sm:$0xff] %vm2224, %v1572
      %2776 = vst.msk [vmem:[#allocation3 + $0xa8] sm:$0xff] %vm2224, %v1573
      %2777 = vst.msk [vmem:[#allocation3 + $0xb0] sm:$0xff] %vm2224, %v1574
      %2778 = vst.msk [vmem:[#allocation3 + $0xb8] sm:$0xff] %vm2224, %v1575
      %2779 = vst.msk [vmem:[#allocation3 + $0xc0] sm:$0xff] %vm2224, %v1576
      %2780 = vst.msk [vmem:[#allocation3 + $0xc8] sm:$0xff] %vm2224, %v1577
      %2781 = vst.msk [vmem:[#allocation3 + $0xd0] sm:$0xff] %vm2224, %v1578
      %2782 = vst.msk [vmem:[#allocation3 + $0xd8] sm:$0xff] %vm2224, %v1579
      %2783 = vst.msk [vmem:[#allocation3 + $0xe0] sm:$0xff] %vm2224, %v1580
      %2784 = vst.msk [vmem:[#allocation3 + $0xe8] sm:$0xff] %vm2224, %v1581
      %2785 = vst.msk [vmem:[#allocation3 + $0xf0] sm:$0xff] %vm2224, %v1582
      %2786 = vst.msk [vmem:[#allocation3 + $0xf8] sm:$0xff] %vm2224, %v1583
      // Predicated region
      $region57: #{nonlocal_block_forward.1} parent=51 // pred_check
        %p2787 = pneg %p388
      $region58: #{nonlocal_block_forward.1} parent=51 // pred_check_branch
        %2789 = sbr.rel (%p2787) target = $region60
      $region59: #{nonlocal_block_forward.1} parent=51 // pred_region
        %v2790 = vld [vmem:[#allocation5] sm:$0xff]
        %v2791 = vld [vmem:[#allocation5 + $0x8] sm:$0xff]
        %v2792 = vld [vmem:[#allocation5 + $0x10] sm:$0xff]
        %v2793 = vld [vmem:[#allocation5 + $0x18] sm:$0xff]
        %v2794 = vld [vmem:[#allocation5 + $0x20] sm:$0xff]
        %v2795 = vld [vmem:[#allocation5 + $0x28] sm:$0xff]
        %v2796 = vld [vmem:[#allocation5 + $0x30] sm:$0xff]
        %v2797 = vld [vmem:[#allocation5 + $0x38] sm:$0xff]
        %v2798 = vld [vmem:[#allocation5 + $0x40] sm:$0xff]
        %v2799 = vld [vmem:[#allocation5 + $0x48] sm:$0xff]
        %v2800 = vld [vmem:[#allocation5 + $0x50] sm:$0xff]
        %v2801 = vld [vmem:[#allocation5 + $0x58] sm:$0xff]
        %v2802 = vld [vmem:[#allocation5 + $0x60] sm:$0xff]
        %v2803 = vld [vmem:[#allocation5 + $0x68] sm:$0xff]
        %v2804 = vld [vmem:[#allocation5 + $0x70] sm:$0xff]
        %v2805 = vld [vmem:[#allocation5 + $0x78] sm:$0xff]
        %v2806 = vld [vmem:[#allocation5 + $0x80] sm:$0xff]
        %v2807 = vld [vmem:[#allocation5 + $0x88] sm:$0xff]
        %v2808 = vld [vmem:[#allocation5 + $0x90] sm:$0xff]
        %v2809 = vld [vmem:[#allocation5 + $0x98] sm:$0xff]
        %v2810 = vld [vmem:[#allocation5 + $0xa0] sm:$0xff]
        %v2811 = vld [vmem:[#allocation5 + $0xa8] sm:$0xff]
        %v2812 = vld [vmem:[#allocation5 + $0xb0] sm:$0xff]
        %v2813 = vld [vmem:[#allocation5 + $0xb8] sm:$0xff]
        %v2814 = vld [vmem:[#allocation5 + $0xc0] sm:$0xff]
        %v2815 = vld [vmem:[#allocation5 + $0xc8] sm:$0xff]
        %v2816 = vld [vmem:[#allocation5 + $0xd0] sm:$0xff]
        %v2817 = vld [vmem:[#allocation5 + $0xd8] sm:$0xff]
        %v2818 = vld [vmem:[#allocation5 + $0xe0] sm:$0xff]
        %v2819 = vld [vmem:[#allocation5 + $0xe8] sm:$0xff]
        %v2820 = vld [vmem:[#allocation5 + $0xf0] sm:$0xff]
        %v2821 = vld [vmem:[#allocation5 + $0xf8] sm:$0xff]
        %v2822 = vld [vmem:[#allocation4] sm:$0xff]
        %v2823 = vld [vmem:[#allocation4 + $0x8] sm:$0xff]
        %v2824 = vld [vmem:[#allocation4 + $0x10] sm:$0xff]
        %v2825 = vld [vmem:[#allocation4 + $0x18] sm:$0xff]
        %v2826 = vld [vmem:[#allocation4 + $0x20] sm:$0xff]
        %v2827 = vld [vmem:[#allocation4 + $0x28] sm:$0xff]
        %v2828 = vld [vmem:[#allocation4 + $0x30] sm:$0xff]
        %v2829 = vld [vmem:[#allocation4 + $0x38] sm:$0xff]
        %v2830 = vld [vmem:[#allocation4 + $0x40] sm:$0xff]
        %v2831 = vld [vmem:[#allocation4 + $0x48] sm:$0xff]
        %v2832 = vld [vmem:[#allocation4 + $0x50] sm:$0xff]
        %v2833 = vld [vmem:[#allocation4 + $0x58] sm:$0xff]
        %v2834 = vld [vmem:[#allocation4 + $0x60] sm:$0xff]
        %v2835 = vld [vmem:[#allocation4 + $0x68] sm:$0xff]
        %v2836 = vld [vmem:[#allocation4 + $0x70] sm:$0xff]
        %v2837 = vld [vmem:[#allocation4 + $0x78] sm:$0xff]
        %v2838 = vld [vmem:[#allocation4 + $0x80] sm:$0xff]
        %v2839 = vld [vmem:[#allocation4 + $0x88] sm:$0xff]
        %v2840 = vld [vmem:[#allocation4 + $0x90] sm:$0xff]
        %v2841 = vld [vmem:[#allocation4 + $0x98] sm:$0xff]
        %v2842 = vld [vmem:[#allocation4 + $0xa0] sm:$0xff]
        %v2843 = vld [vmem:[#allocation4 + $0xa8] sm:$0xff]
        %v2844 = vld [vmem:[#allocation4 + $0xb0] sm:$0xff]
        %v2845 = vld [vmem:[#allocation4 + $0xb8] sm:$0xff]
        %v2846 = vld [vmem:[#allocation4 + $0xc0] sm:$0xff]
        %v2847 = vld [vmem:[#allocation4 + $0xc8] sm:$0xff]
        %v2848 = vld [vmem:[#allocation4 + $0xd0] sm:$0xff]
        %v2849 = vld [vmem:[#allocation4 + $0xd8] sm:$0xff]
        %v2850 = vld [vmem:[#allocation4 + $0xe0] sm:$0xff]
        %v2851 = vld [vmem:[#allocation4 + $0xe8] sm:$0xff]
        %v2852 = vld [vmem:[#allocation4 + $0xf0] sm:$0xff]
        %v2853 = vld [vmem:[#allocation4 + $0xf8] sm:$0xff]
        %v2854 = vrcp.pop %v2822
        %v2855 = vrcp.pop %v2823
        %v2856 = vrcp.pop %v2824
        %v2857 = vrcp.pop %v2825
        %v2858 = vrcp.pop %v2826
        %v2859 = vrcp.pop %v2827
        %v2860 = vrcp.pop %v2828
        %v2861 = vrcp.pop %v2829
        %v2862 = vrcp.pop %v2830
        %v2863 = vrcp.pop %v2831
        %v2864 = vrcp.pop %v2832
        %v2865 = vrcp.pop %v2833
        %v2866 = vrcp.pop %v2834
        %v2867 = vrcp.pop %v2835
        %v2868 = vrcp.pop %v2836
        %v2869 = vrcp.pop %v2837
        %v2870 = vrcp.pop %v2838
        %v2871 = vrcp.pop %v2839
        %v2872 = vrcp.pop %v2840
        %v2873 = vrcp.pop %v2841
        %v2874 = vrcp.pop %v2842
        %v2875 = vrcp.pop %v2843
        %v2876 = vrcp.pop %v2844
        %v2877 = vrcp.pop %v2845
        %v2878 = vrcp.pop %v2846
        %v2879 = vrcp.pop %v2847
        %v2880 = vrcp.pop %v2848
        %v2881 = vrcp.pop %v2849
        %v2882 = vrcp.pop %v2850
        %v2883 = vrcp.pop %v2851
        %v2884 = vrcp.pop %v2852
        %v2885 = vrcp.pop %v2853
        %2887 = vset.pattern.permute.xlu0 0
        %2888 = vperm.xlu0 %2887, %v2854
        %v2889 = vpop.permute.xlu0 %2888
        %2892 = vset.pattern.permute.xlu0 0
        %2893 = vperm.xlu0 %2892, %v2855
        %v2894 = vpop.permute.xlu0 %2893
        %2897 = vset.pattern.permute.xlu0 0
        %2898 = vperm.xlu0 %2897, %v2856
        %v2899 = vpop.permute.xlu0 %2898
        %2902 = vset.pattern.permute.xlu0 0
        %2903 = vperm.xlu0 %2902, %v2857
        %v2904 = vpop.permute.xlu0 %2903
        %2907 = vset.pattern.permute.xlu0 0
        %2908 = vperm.xlu0 %2907, %v2858
        %v2909 = vpop.permute.xlu0 %2908
        %2912 = vset.pattern.permute.xlu0 0
        %2913 = vperm.xlu0 %2912, %v2859
        %v2914 = vpop.permute.xlu0 %2913
        %2917 = vset.pattern.permute.xlu0 0
        %2918 = vperm.xlu0 %2917, %v2860
        %v2919 = vpop.permute.xlu0 %2918
        %2922 = vset.pattern.permute.xlu0 0
        %2923 = vperm.xlu0 %2922, %v2861
        %v2924 = vpop.permute.xlu0 %2923
        %2927 = vset.pattern.permute.xlu0 0
        %2928 = vperm.xlu0 %2927, %v2862
        %v2929 = vpop.permute.xlu0 %2928
        %2932 = vset.pattern.permute.xlu0 0
        %2933 = vperm.xlu0 %2932, %v2863
        %v2934 = vpop.permute.xlu0 %2933
        %2937 = vset.pattern.permute.xlu0 0
        %2938 = vperm.xlu0 %2937, %v2864
        %v2939 = vpop.permute.xlu0 %2938
        %2942 = vset.pattern.permute.xlu0 0
        %2943 = vperm.xlu0 %2942, %v2865
        %v2944 = vpop.permute.xlu0 %2943
        %2947 = vset.pattern.permute.xlu0 0
        %2948 = vperm.xlu0 %2947, %v2866
        %v2949 = vpop.permute.xlu0 %2948
        %2952 = vset.pattern.permute.xlu0 0
        %2953 = vperm.xlu0 %2952, %v2867
        %v2954 = vpop.permute.xlu0 %2953
        %2957 = vset.pattern.permute.xlu0 0
        %2958 = vperm.xlu0 %2957, %v2868
        %v2959 = vpop.permute.xlu0 %2958
        %2962 = vset.pattern.permute.xlu0 0
        %2963 = vperm.xlu0 %2962, %v2869
        %v2964 = vpop.permute.xlu0 %2963
        %2967 = vset.pattern.permute.xlu0 0
        %2968 = vperm.xlu0 %2967, %v2870
        %v2969 = vpop.permute.xlu0 %2968
        %2972 = vset.pattern.permute.xlu0 0
        %2973 = vperm.xlu0 %2972, %v2871
        %v2974 = vpop.permute.xlu0 %2973
        %2977 = vset.pattern.permute.xlu0 0
        %2978 = vperm.xlu0 %2977, %v2872
        %v2979 = vpop.permute.xlu0 %2978
        %2982 = vset.pattern.permute.xlu0 0
        %2983 = vperm.xlu0 %2982, %v2873
        %v2984 = vpop.permute.xlu0 %2983
        %2987 = vset.pattern.permute.xlu0 0
        %2988 = vperm.xlu0 %2987, %v2874
        %v2989 = vpop.permute.xlu0 %2988
        %2992 = vset.pattern.permute.xlu0 0
        %2993 = vperm.xlu0 %2992, %v2875
        %v2994 = vpop.permute.xlu0 %2993
        %2997 = vset.pattern.permute.xlu0 0
        %2998 = vperm.xlu0 %2997, %v2876
        %v2999 = vpop.permute.xlu0 %2998
        %3002 = vset.pattern.permute.xlu0 0
        %3003 = vperm.xlu0 %3002, %v2877
        %v3004 = vpop.permute.xlu0 %3003
        %3007 = vset.pattern.permute.xlu0 0
        %3008 = vperm.xlu0 %3007, %v2878
        %v3009 = vpop.permute.xlu0 %3008
        %3012 = vset.pattern.permute.xlu0 0
        %3013 = vperm.xlu0 %3012, %v2879
        %v3014 = vpop.permute.xlu0 %3013
        %3017 = vset.pattern.permute.xlu0 0
        %3018 = vperm.xlu0 %3017, %v2880
        %v3019 = vpop.permute.xlu0 %3018
        %3022 = vset.pattern.permute.xlu0 0
        %3023 = vperm.xlu0 %3022, %v2881
        %v3024 = vpop.permute.xlu0 %3023
        %3027 = vset.pattern.permute.xlu0 0
        %3028 = vperm.xlu0 %3027, %v2882
        %v3029 = vpop.permute.xlu0 %3028
        %3032 = vset.pattern.permute.xlu0 0
        %3033 = vperm.xlu0 %3032, %v2883
        %v3034 = vpop.permute.xlu0 %3033
        %3037 = vset.pattern.permute.xlu0 0
        %3038 = vperm.xlu0 %3037, %v2884
        %v3039 = vpop.permute.xlu0 %3038
        %3042 = vset.pattern.permute.xlu0 0
        %3043 = vperm.xlu0 %3042, %v2885
        %v3044 = vpop.permute.xlu0 %3043
        %v3046 = vmul.f32 %v2790, %v2889
        %v3047 = vmul.f32 %v2791, %v2894
        %v3048 = vmul.f32 %v2792, %v2899
        %v3049 = vmul.f32 %v2793, %v2904
        %v3050 = vmul.f32 %v2794, %v2909
        %v3051 = vmul.f32 %v2795, %v2914
        %v3052 = vmul.f32 %v2796, %v2919
        %v3053 = vmul.f32 %v2797, %v2924
        %v3054 = vmul.f32 %v2798, %v2929
        %v3055 = vmul.f32 %v2799, %v2934
        %v3056 = vmul.f32 %v2800, %v2939
        %v3057 = vmul.f32 %v2801, %v2944
        %v3058 = vmul.f32 %v2802, %v2949
        %v3059 = vmul.f32 %v2803, %v2954
        %v3060 = vmul.f32 %v2804, %v2959
        %v3061 = vmul.f32 %v2805, %v2964
        %v3062 = vmul.f32 %v2806, %v2969
        %v3063 = vmul.f32 %v2807, %v2974
        %v3064 = vmul.f32 %v2808, %v2979
        %v3065 = vmul.f32 %v2809, %v2984
        %v3066 = vmul.f32 %v2810, %v2989
        %v3067 = vmul.f32 %v2811, %v2994
        %v3068 = vmul.f32 %v2812, %v2999
        %v3069 = vmul.f32 %v2813, %v3004
        %v3070 = vmul.f32 %v2814, %v3009
        %v3071 = vmul.f32 %v2815, %v3014
        %v3072 = vmul.f32 %v2816, %v3019
        %v3073 = vmul.f32 %v2817, %v3024
        %v3074 = vmul.f32 %v2818, %v3029
        %v3075 = vmul.f32 %v2819, %v3034
        %v3076 = vmul.f32 %v2820, %v3039
        %v3077 = vmul.f32 %v2821, %v3044
        %v3078 = vpack.c.bf16 %v3047, %v3046
        %v3079 = vpack.c.bf16 %v3049, %v3048
        %v3080 = vpack.c.bf16 %v3051, %v3050
        %v3081 = vpack.c.bf16 %v3053, %v3052
        %v3082 = vpack.c.bf16 %v3055, %v3054
        %v3083 = vpack.c.bf16 %v3057, %v3056
        %v3084 = vpack.c.bf16 %v3059, %v3058
        %v3085 = vpack.c.bf16 %v3061, %v3060
        %v3086 = vpack.c.bf16 %v3063, %v3062
        %v3087 = vpack.c.bf16 %v3065, %v3064
        %v3088 = vpack.c.bf16 %v3067, %v3066
        %v3089 = vpack.c.bf16 %v3069, %v3068
        %v3090 = vpack.c.bf16 %v3071, %v3070
        %v3091 = vpack.c.bf16 %v3073, %v3072
        %v3092 = vpack.c.bf16 %v3075, %v3074
        %v3093 = vpack.c.bf16 %v3077, %v3076
        %v3094 = vld [vmem:[%s6] sm:$0xf]
        %v3095 = vld [vmem:[%s6 + $0x4] sm:$0xf]
        %v3096 = vld [vmem:[%s6 + $0x8] sm:$0xf]
        %v3097 = vld [vmem:[%s6 + $0xc] sm:$0xf]
        %v3098 = vld [vmem:[%s6 + $0x10] sm:$0xf]
        %v3099 = vld [vmem:[%s6 + $0x14] sm:$0xf]
        %v3100 = vld [vmem:[%s6 + $0x18] sm:$0xf]
        %v3101 = vld [vmem:[%s6 + $0x1c] sm:$0xf]
        %v3102 = vld [vmem:[%s6 + $0x20] sm:$0xf]
        %v3103 = vld [vmem:[%s6 + $0x24] sm:$0xf]
        %v3104 = vld [vmem:[%s6 + $0x28] sm:$0xf]
        %v3105 = vld [vmem:[%s6 + $0x2c] sm:$0xf]
        %v3106 = vld [vmem:[%s6 + $0x30] sm:$0xf]
        %v3107 = vld [vmem:[%s6 + $0x34] sm:$0xf]
        %v3108 = vld [vmem:[%s6 + $0x38] sm:$0xf]
        %v3109 = vld [vmem:[%s6 + $0x3c] sm:$0xf]
        %v3110 = vld [vmem:[%s7] sm:$0x1]
        %v3112 = vperm.slane %v3110, 0
        %v3130 = vunpack.c.l.b16 %v3094
        %v3131 = vunpack.c.l.b16 %v3095
        %v3132 = vunpack.c.l.b16 %v3096
        %v3133 = vunpack.c.l.b16 %v3097
        %v3134 = vunpack.c.l.b16 %v3098
        %v3135 = vunpack.c.l.b16 %v3099
        %v3136 = vunpack.c.l.b16 %v3100
        %v3137 = vunpack.c.l.b16 %v3101
        %v3138 = vunpack.c.l.b16 %v3102
        %v3139 = vunpack.c.l.b16 %v3103
        %v3140 = vunpack.c.l.b16 %v3104
        %v3141 = vunpack.c.l.b16 %v3105
        %v3142 = vunpack.c.l.b16 %v3106
        %v3143 = vunpack.c.l.b16 %v3107
        %v3144 = vunpack.c.l.b16 %v3108
        %v3145 = vunpack.c.l.b16 %v3109
        %v3146 = vpack.c.b16 %v3131, %v3130
        %v3147 = vpack.c.b16 %v3133, %v3132
        %v3148 = vpack.c.b16 %v3135, %v3134
        %v3149 = vpack.c.b16 %v3137, %v3136
        %v3150 = vpack.c.b16 %v3139, %v3138
        %v3151 = vpack.c.b16 %v3141, %v3140
        %v3152 = vpack.c.b16 %v3143, %v3142
        %v3153 = vpack.c.b16 %v3145, %v3144
        %3162 = vmatpush.bf16.msra.mxu0 %v3153
        %3163 = vmatpush.bf16.msra.mxu0 %v3152
        %3164 = vmatpush.bf16.msra.mxu0 %v3151
        %3165 = vmatpush.bf16.msra.mxu0 %v3150
        %3166 = vmatpush.bf16.msra.mxu0 %v3149
        %3167 = vmatpush.bf16.msra.mxu0 %v3148
        %3168 = vmatpush.bf16.msra.mxu0 %v3147
        %3169 = vmatpush.bf16.msra.mxu0 %v3146
        %3170 = vmatmul.bf16.gmra.mxu0 %v3078
        %v3171 = vpop.f32.mrf.mxu0
        %v3172 = vadd.f32 %v3112, %v3171
        %v3173 = vpop.f32.mrf.mxu0
        %v3174 = vadd.f32 %v3112, %v3173
        %3175 = vmatmul.bf16.gmra.mxu0 %v3079
        %v3176 = vpop.f32.mrf.mxu0
        %v3177 = vadd.f32 %v3112, %v3176
        %v3178 = vpop.f32.mrf.mxu0
        %v3179 = vadd.f32 %v3112, %v3178
        %3180 = vmatmul.bf16.gmra.mxu0 %v3080
        %v3181 = vpop.f32.mrf.mxu0
        %v3182 = vadd.f32 %v3112, %v3181
        %v3183 = vpop.f32.mrf.mxu0
        %v3184 = vadd.f32 %v3112, %v3183
        %3185 = vmatmul.bf16.gmra.mxu0 %v3081
        %v3186 = vpop.f32.mrf.mxu0
        %v3187 = vadd.f32 %v3112, %v3186
        %v3188 = vpop.f32.mrf.mxu0
        %v3189 = vadd.f32 %v3112, %v3188
        %3190 = vmatmul.bf16.gmra.mxu0 %v3082
        %v3191 = vpop.f32.mrf.mxu0
        %v3192 = vadd.f32 %v3112, %v3191
        %v3193 = vpop.f32.mrf.mxu0
        %v3194 = vadd.f32 %v3112, %v3193
        %3195 = vmatmul.bf16.gmra.mxu0 %v3083
        %v3196 = vpop.f32.mrf.mxu0
        %v3197 = vadd.f32 %v3112, %v3196
        %v3198 = vpop.f32.mrf.mxu0
        %v3199 = vadd.f32 %v3112, %v3198
        %3200 = vmatmul.bf16.gmra.mxu0 %v3084
        %v3201 = vpop.f32.mrf.mxu0
        %v3202 = vadd.f32 %v3112, %v3201
        %v3203 = vpop.f32.mrf.mxu0
        %v3204 = vadd.f32 %v3112, %v3203
        %3205 = vmatmul.bf16.gmra.mxu0 %v3085
        %v3206 = vpop.f32.mrf.mxu0
        %v3207 = vadd.f32 %v3112, %v3206
        %v3208 = vpop.f32.mrf.mxu0
        %v3209 = vadd.f32 %v3112, %v3208
        %3210 = vmatmul.bf16.gmra.mxu0 %v3086
        %v3211 = vpop.f32.mrf.mxu0
        %v3212 = vadd.f32 %v3112, %v3211
        %v3213 = vpop.f32.mrf.mxu0
        %v3214 = vadd.f32 %v3112, %v3213
        %3215 = vmatmul.bf16.gmra.mxu0 %v3087
        %v3216 = vpop.f32.mrf.mxu0
        %v3217 = vadd.f32 %v3112, %v3216
        %v3218 = vpop.f32.mrf.mxu0
        %v3219 = vadd.f32 %v3112, %v3218
        %3220 = vmatmul.bf16.gmra.mxu0 %v3088
        %v3221 = vpop.f32.mrf.mxu0
        %v3222 = vadd.f32 %v3112, %v3221
        %v3223 = vpop.f32.mrf.mxu0
        %v3224 = vadd.f32 %v3112, %v3223
        %3225 = vmatmul.bf16.gmra.mxu0 %v3089
        %v3226 = vpop.f32.mrf.mxu0
        %v3227 = vadd.f32 %v3112, %v3226
        %v3228 = vpop.f32.mrf.mxu0
        %v3229 = vadd.f32 %v3112, %v3228
        %3230 = vmatmul.bf16.gmra.mxu0 %v3090
        %v3231 = vpop.f32.mrf.mxu0
        %v3232 = vadd.f32 %v3112, %v3231
        %v3233 = vpop.f32.mrf.mxu0
        %v3234 = vadd.f32 %v3112, %v3233
        %3235 = vmatmul.bf16.gmra.mxu0 %v3091
        %v3236 = vpop.f32.mrf.mxu0
        %v3237 = vadd.f32 %v3112, %v3236
        %v3238 = vpop.f32.mrf.mxu0
        %v3239 = vadd.f32 %v3112, %v3238
        %3240 = vmatmul.bf16.gmra.mxu0 %v3092
        %v3241 = vpop.f32.mrf.mxu0
        %v3242 = vadd.f32 %v3112, %v3241
        %v3243 = vpop.f32.mrf.mxu0
        %v3244 = vadd.f32 %v3112, %v3243
        %3245 = vmatmul.bf16.gmra.mxu0 %v3093
        %v3246 = vpop.f32.mrf.mxu0
        %v3247 = vadd.f32 %v3112, %v3246
        %v3248 = vpop.f32.mrf.mxu0
        %v3249 = vadd.f32 %v3112, %v3248
        %3250 = vdwg.mxu0
        %v3251 = vld [vmem:[%s366] sm:$0xff]
        %v3252 = vld [vmem:[%s366 + $0x8] sm:$0xff]
        %v3253 = vld [vmem:[%s366 + $0x10] sm:$0xff]
        %v3254 = vld [vmem:[%s366 + $0x18] sm:$0xff]
        %v3255 = vld [vmem:[%s366 + $0x20] sm:$0xff]
        %v3256 = vld [vmem:[%s366 + $0x28] sm:$0xff]
        %v3257 = vld [vmem:[%s366 + $0x30] sm:$0xff]
        %v3258 = vld [vmem:[%s366 + $0x38] sm:$0xff]
        %v3259 = vld [vmem:[%s366 + $0x40] sm:$0xff]
        %v3260 = vld [vmem:[%s366 + $0x48] sm:$0xff]
        %v3261 = vld [vmem:[%s366 + $0x50] sm:$0xff]
        %v3262 = vld [vmem:[%s366 + $0x58] sm:$0xff]
        %v3263 = vld [vmem:[%s366 + $0x60] sm:$0xff]
        %v3264 = vld [vmem:[%s366 + $0x68] sm:$0xff]
        %v3265 = vld [vmem:[%s366 + $0x70] sm:$0xff]
        %v3266 = vld [vmem:[%s366 + $0x78] sm:$0xff]
        %v3267 = vld [vmem:[%s366 + $0x80] sm:$0xff]
        %v3268 = vld [vmem:[%s366 + $0x88] sm:$0xff]
        %v3269 = vld [vmem:[%s366 + $0x90] sm:$0xff]
        %v3270 = vld [vmem:[%s366 + $0x98] sm:$0xff]
        %v3271 = vld [vmem:[%s366 + $0xa0] sm:$0xff]
        %v3272 = vld [vmem:[%s366 + $0xa8] sm:$0xff]
        %v3273 = vld [vmem:[%s366 + $0xb0] sm:$0xff]
        %v3274 = vld [vmem:[%s366 + $0xb8] sm:$0xff]
        %v3275 = vld [vmem:[%s366 + $0xc0] sm:$0xff]
        %v3276 = vld [vmem:[%s366 + $0xc8] sm:$0xff]
        %v3277 = vld [vmem:[%s366 + $0xd0] sm:$0xff]
        %v3278 = vld [vmem:[%s366 + $0xd8] sm:$0xff]
        %v3279 = vld [vmem:[%s366 + $0xe0] sm:$0xff]
        %v3280 = vld [vmem:[%s366 + $0xe8] sm:$0xff]
        %v3281 = vld [vmem:[%s366 + $0xf0] sm:$0xff]
        %v3282 = vld [vmem:[%s366 + $0xf8] sm:$0xff]
        %v3283 = vadd.f32 %v3172, %v3251
        %v3284 = vadd.f32 %v3174, %v3252
        %v3285 = vadd.f32 %v3177, %v3253
        %v3286 = vadd.f32 %v3179, %v3254
        %v3287 = vadd.f32 %v3182, %v3255
        %v3288 = vadd.f32 %v3184, %v3256
        %v3289 = vadd.f32 %v3187, %v3257
        %v3290 = vadd.f32 %v3189, %v3258
        %v3291 = vadd.f32 %v3192, %v3259
        %v3292 = vadd.f32 %v3194, %v3260
        %v3293 = vadd.f32 %v3197, %v3261
        %v3294 = vadd.f32 %v3199, %v3262
        %v3295 = vadd.f32 %v3202, %v3263
        %v3296 = vadd.f32 %v3204, %v3264
        %v3297 = vadd.f32 %v3207, %v3265
        %v3298 = vadd.f32 %v3209, %v3266
        %v3299 = vadd.f32 %v3212, %v3267
        %v3300 = vadd.f32 %v3214, %v3268
        %v3301 = vadd.f32 %v3217, %v3269
        %v3302 = vadd.f32 %v3219, %v3270
        %v3303 = vadd.f32 %v3222, %v3271
        %v3304 = vadd.f32 %v3224, %v3272
        %v3305 = vadd.f32 %v3227, %v3273
        %v3306 = vadd.f32 %v3229, %v3274
        %v3307 = vadd.f32 %v3232, %v3275
        %v3308 = vadd.f32 %v3234, %v3276
        %v3309 = vadd.f32 %v3237, %v3277
        %v3310 = vadd.f32 %v3239, %v3278
        %v3311 = vadd.f32 %v3242, %v3279
        %v3312 = vadd.f32 %v3244, %v3280
        %v3313 = vadd.f32 %v3247, %v3281
        %v3314 = vadd.f32 %v3249, %v3282
        %3315 = vst [vmem:[%s386] sm:$0xff] %v3283
        %3316 = vst [vmem:[%s386 + $0x8] sm:$0xff] %v3284
        %3317 = vst [vmem:[%s386 + $0x10] sm:$0xff] %v3285
        %3318 = vst [vmem:[%s386 + $0x18] sm:$0xff] %v3286
        %3319 = vst [vmem:[%s386 + $0x20] sm:$0xff] %v3287
        %3320 = vst [vmem:[%s386 + $0x28] sm:$0xff] %v3288
        %3321 = vst [vmem:[%s386 + $0x30] sm:$0xff] %v3289
        %3322 = vst [vmem:[%s386 + $0x38] sm:$0xff] %v3290
        %3323 = vst [vmem:[%s386 + $0x40] sm:$0xff] %v3291
        %3324 = vst [vmem:[%s386 + $0x48] sm:$0xff] %v3292
        %3325 = vst [vmem:[%s386 + $0x50] sm:$0xff] %v3293
        %3326 = vst [vmem:[%s386 + $0x58] sm:$0xff] %v3294
        %3327 = vst [vmem:[%s386 + $0x60] sm:$0xff] %v3295
        %3328 = vst [vmem:[%s386 + $0x68] sm:$0xff] %v3296
        %3329 = vst [vmem:[%s386 + $0x70] sm:$0xff] %v3297
        %3330 = vst [vmem:[%s386 + $0x78] sm:$0xff] %v3298
        %3331 = vst [vmem:[%s386 + $0x80] sm:$0xff] %v3299
        %3332 = vst [vmem:[%s386 + $0x88] sm:$0xff] %v3300
        %3333 = vst [vmem:[%s386 + $0x90] sm:$0xff] %v3301
        %3334 = vst [vmem:[%s386 + $0x98] sm:$0xff] %v3302
        %3335 = vst [vmem:[%s386 + $0xa0] sm:$0xff] %v3303
        %3336 = vst [vmem:[%s386 + $0xa8] sm:$0xff] %v3304
        %3337 = vst [vmem:[%s386 + $0xb0] sm:$0xff] %v3305
        %3338 = vst [vmem:[%s386 + $0xb8] sm:$0xff] %v3306
        %3339 = vst [vmem:[%s386 + $0xc0] sm:$0xff] %v3307
        %3340 = vst [vmem:[%s386 + $0xc8] sm:$0xff] %v3308
        %3341 = vst [vmem:[%s386 + $0xd0] sm:$0xff] %v3309
        %3342 = vst [vmem:[%s386 + $0xd8] sm:$0xff] %v3310
        %3343 = vst [vmem:[%s386 + $0xe0] sm:$0xff] %v3311
        %3344 = vst [vmem:[%s386 + $0xe8] sm:$0xff] %v3312
        %3345 = vst [vmem:[%s386 + $0xf0] sm:$0xff] %v3313
        %3346 = vst [vmem:[%s386 + $0xf8] sm:$0xff] %v3314
      $region60: #{nonlocal_block_forward.1} parent=51 // pred_fallthru
        _
      %s3347 = smul.u32 32, %s25
      %p3348 = scmp.lt.s32.totalorder %s24, 1
      %s3349 = scalar_select %p3348, %s24, 1
      %p3350 = scmp.lt.s32.totalorder %s3347, 31
      %s3351 = scalar_select %p3350, %s3347, 31
      %s3352 = smul.addr %s3349, 32
      %s3353 = sadd.s32 %s3351, %s3352
      %s3354 = smul.addr %s3353, 8
      %s3355 = scalar_lea.vmem %s8, %s3354
      // Predicated region
      $region61: #{nonlocal_block_forward.1} parent=51 // pred_check
        %p3356 = pneg %p240
      $region62: #{nonlocal_block_forward.1} parent=51 // pred_check_branch
        %3358 = sbr.rel (%p3356) target = $region64
      $region63: #{nonlocal_block_forward.1} parent=51 // pred_region
        %s3359 = smul.u32 32, %s25
      $region64: #{nonlocal_block_forward.1} parent=51 // pred_fallthru
        _
    $region52: #{nonlocal_block_forward.1} parent=5 // pred_fallthru
      _
    %p3360 = scmp.le.s32.totalorder 2, %s14
    // Predicated region
    $region65: #{nonlocal_block_forward.1} parent=5 // pred_check
      %p3361 = pneg %p3360
    $region66: #{nonlocal_block_forward.1} parent=5 // pred_check_branch
      %3363 = sbr.rel (%p3361) target = $region68
    $region67: #{nonlocal_block_forward.1} parent=5 // pred_region
      %s3364 = ssub.s32 %s14, 2
      // Predicated region
      $region69: #{nonlocal_block_forward.1} parent=67 // pred_check
        %p3365 = pneg %p246
      $region70: #{nonlocal_block_forward.1} parent=67 // pred_check_branch
        %3367 = sbr.rel (%p3365) target = $region72
      $region71: #{nonlocal_block_forward.1} parent=67 // pred_region
        %s3368 = smul.u32 32, %s28
        %p3369 = scmp.lt.s32.totalorder %s27, 1
        %s3370 = scalar_select %p3369, %s27, 1
        %p3371 = scmp.lt.s32.totalorder %s3368, 31
        %s3372 = scalar_select %p3371, %s3368, 31
        %s3373 = smul.addr %s3370, 32
        %s3374 = sadd.s32 %s3372, %s3373
        %s3375 = smul.addr %s3374, 8
        %s3376 = scalar_lea.vmem %s8, %s3375
      $region72: #{nonlocal_block_forward.1} parent=67 // pred_fallthru
        _
    $region68: #{nonlocal_block_forward.1} parent=5 // pred_fallthru
      _
  $region6: #{nonlocal_block_forward.1} parent=0 // loop_footer
    %s18 = sadd.s32 1, %s14
  $region7: #{nonlocal_block_forward.1} parent=0 // loop_footer_branch
    %13 = sbr.rel target = $region3
  $region8: #{nonlocal_block_forward.1} parent=0 // loop_exit
    _

</llo_original>
